<compile_context>
chip_gen: v7x
topology: tpu7x:2x2x1
jax: 0.10.0
libtpu: 0.0.40
codegen_flags: <defaults>
</compile_context>

<pallas_src>
import functools

import jax
import jax.numpy as jnp
from jax import lax
from jax.experimental import pallas as pl
from jax.experimental.pallas import tpu as pltpu


# a @ b.T without an explicit transpose: contract the last dim of both operands.
_CONTRACT_LAST = (((1,), (1,)), ((), ()))


def _add_layernorm(x, r, g, b, eps=1e-5):
    # y = LayerNorm(x + r) * g + b   (biased variance, per-row over last dim, f32 math)
    y = x + r
    mean = jnp.mean(y, axis=-1, keepdims=True)
    var = jnp.mean(jnp.square(y - mean), axis=-1, keepdims=True)
    return (y - mean) * lax.rsqrt(var + eps) * g + b


def _fused_layer_kernel(
    # inputs (constant across the grid)
    x_ref, pe_ref, w_in_ref, b_in_ref,
    # inputs (one encoder layer per grid step)
    w_qkv_ref, b_qkv_ref, w_out_ref, b_out_ref, g1_ref, be1_ref,
    w1_ref, b1_ref, w2t_ref, b2_ref, g2_ref, be2_ref,
    # inputs (constant across the grid)
    w_fc_ref, b_fc_ref,
    # output
    o_ref,
    # scratch: activation slab resident in VMEM across all layers
    h_ref,
    *, n_heads, batch):
    f32 = jnp.float32
    bf16 = jnp.bfloat16
    l = pl.program_id(0)
    M, D = h_ref.shape                      # M = S * B
    S = M // batch
    hd = D // n_heads
    scale = 1.0 / float(hd) ** 0.5

    # ---- first grid step: input projection + positional-encoding add -------------
    @pl.when(l == 0)
    def _():
        h_ref[...] = (
            jnp.dot(x_ref[...].astype(bf16), w_in_ref[...], preferred_element_type=f32)
            + b_in_ref[...] + pe_ref[...])
        # dropout: identity (eval semantics)

    h = h_ref[...]

    # ---- additive cross-batch mask, built in-kernel (no HBM input, no residency) --
    row_b = lax.broadcasted_iota(jnp.int32, (M, M), 0) % batch
    col_b = lax.broadcasted_iota(jnp.int32, (M, M), 1) % batch
    mask = jnp.where(row_b == col_b, 0.0, -1e30).astype(f32)

    # ---- self-attention on the (M, D) slab: lane-sliced heads, one fused out-proj -
    qkv = (jnp.dot(h.astype(bf16), w_qkv_ref[0], preferred_element_type=f32)
           + b_qkv_ref[0])                                                   # (M, 3D)
    heads = []
    for hh in range(n_heads):
        q = qkv[:, hh * hd:(hh + 1) * hd].astype(bf16)           # lane slices only
        k = qkv[:, D + hh * hd:D + (hh + 1) * hd].astype(bf16)
        v = qkv[:, 2 * D + hh * hd:2 * D + (hh + 1) * hd].astype(bf16)
        s = (lax.dot_general(q, k, _CONTRACT_LAST, preferred_element_type=f32)
             * scale + mask)
        s = s - jnp.max(s, axis=-1, keepdims=True)
        p = jnp.exp(s)
        p = p * pl.reciprocal(jnp.sum(p, axis=-1, keepdims=True), approx=True)
        heads.append(jnp.dot(p.astype(bf16), v, preferred_element_type=f32))  # (M, hd)
    attn_cat = jnp.concatenate(heads, axis=-1)                                # (M, D)
    attn = (jnp.dot(attn_cat.astype(bf16), w_out_ref[0], preferred_element_type=f32)
            + b_out_ref[0])

    h = _add_layernorm(h, attn, g1_ref[0], be1_ref[0])          # norm1(x + sa(x))

    # ---- feed-forward block (post-norm); w2 fed transposed (lane-dense) -----------
    h1 = jnp.maximum(
        jnp.dot(h.astype(bf16), w1_ref[0], preferred_element_type=f32) + b1_ref[0], 0.0)
    ff = (lax.dot_general(h1.astype(bf16), w2t_ref[0], _CONTRACT_LAST,
                          preferred_element_type=f32) + b2_ref[0])
    h = _add_layernorm(h, ff, g2_ref[0], be2_ref[0])            # norm2(x + ff(x))

    h_ref[...] = h

    # ---- last grid step: strided read of the last-batch rows, then fc -------------
    @pl.when(l == pl.num_programs(0) - 1)
    def _():
        # rows s*B + (B-1)  ==  x[:, -1, :] in the (S, B, D) view
        last = h_ref[pl.ds(batch - 1, S, stride=batch), :]                    # (S, D)
        o_ref[...] = (jnp.dot(last.astype(bf16), w_fc_ref[...],
                              preferred_element_type=f32) + b_fc_ref[...])


# ----------------------------------- wrapper ------------------------------------- #

def transformer_stock_forward(x, params, *, n_heads):
    # x: (B, S, F)  (PyTorch call convention)
    B, S, F = x.shape
    pe = params["pe"]
    d_model = params["w_in"].shape[1]
    num_actions = params["w_fc"].shape[1]
    L = params["w_qkv"].shape[0]
    dim_ff = params["w1"].shape[2]
    assert d_model % n_heads == 0, "d_model must be divisible by n_heads"
    assert B <= pe.shape[0], ("positional encoding max_len exceeded "
                              "(indexed by batch, as in the PyTorch code)")

    M = S * B
    bf16 = jnp.bfloat16
    # permute(1,0,2) -> (S, B, F), flattened seq-major / batch-minor
    x2 = jnp.transpose(x, (1, 0, 2)).reshape(M, F)
    # positional_encoding[:x.size(1)] == pe[:B], broadcast over the seq axis (faithful quirk)
    pe_add = jnp.broadcast_to(pe[:B][None], (S, B, d_model)).reshape(M, d_model)

    # Matmul weights go in as bf16 (halved weight DMA, native bf16 MXU path);
    # biases / LayerNorm params stay f32.  w2 is transposed to be lane-dense.
    w_in = params["w_in"].astype(bf16)
    w_qkv = params["w_qkv"].astype(bf16)
    w_out = params["w_out"].astype(bf16)
    w1 = params["w1"].astype(bf16)
    w2t = jnp.transpose(params["w2"], (0, 2, 1)).astype(bf16)   # (L, d_model, dim_ff)
    w_fc = params["w_fc"].astype(bf16)

    def const_spec(shape):
        nz = len(shape)
        return pl.BlockSpec(tuple(shape), lambda l, nz=nz: (0,) * nz)

    def layer_spec(shape):
        nz = len(shape) - 1
        return pl.BlockSpec((1,) + tuple(shape[1:]), lambda l, nz=nz: (l,) + (0,) * nz)

    # Advisory cost estimate (helps XLA schedule around the custom call).
    flops_layer = (2 * M * d_model * 3 * d_model          # qkv
                   + 2 * M * M * d_model                  # q.k^T (all heads)
                   + 2 * M * M * d_model                  # p.v   (all heads)
                   + 2 * M * d_model * d_model            # out proj
                   + 2 * 2 * M * d_model * dim_ff)        # ffn
    flops = L * flops_layer + 2 * M * F * d_model + 2 * S * d_model * num_actions
    transcendentals = L * n_heads * M * M
    bytes_accessed = (
        M * F * 4 + M * d_model * 4 + F * d_model * 2 + d_model * 4
        + L * (d_model * 3 * d_model * 2 + 3 * d_model * 4
               + d_model * d_model * 2 + d_model * 4 + 2 * d_model * 4
               + d_model * dim_ff * 2 + dim_ff * 4
               + d_model * dim_ff * 2 + d_model * 4 + 2 * d_model * 4)
        + d_model * num_actions * 2 + num_actions * 4
        + S * num_actions * 4)

    out = pl.pallas_call(
        functools.partial(_fused_layer_kernel, n_heads=n_heads, batch=B),
        out_shape=jax.ShapeDtypeStruct((S, num_actions), jnp.float32),
        grid=(L,),
        in_specs=[
            const_spec((M, F)), const_spec((M, d_model)),
            const_spec((F, d_model)), const_spec((1, d_model)),
            layer_spec((L, d_model, 3 * d_model)), layer_spec((L, 1, 3 * d_model)),
            layer_spec((L, d_model, d_model)), layer_spec((L, 1, d_model)),
            layer_spec((L, 1, d_model)), layer_spec((L, 1, d_model)),
            layer_spec((L, d_model, dim_ff)), layer_spec((L, 1, dim_ff)),
            layer_spec((L, d_model, dim_ff)), layer_spec((L, 1, d_model)),
            layer_spec((L, 1, d_model)), layer_spec((L, 1, d_model)),
            const_spec((d_model, num_actions)), const_spec((1, num_actions)),
        ],
        out_specs=const_spec((S, num_actions)),
        scratch_shapes=[pltpu.VMEM((M, d_model), jnp.float32)],
        compiler_params=pltpu.CompilerParams(dimension_semantics=("arbitrary",)),
        cost_estimate=pl.CostEstimate(flops=flops, transcendentals=transcendentals,
                                      bytes_accessed=bytes_accessed),
    )(
        x2, pe_add,
        w_in, params["b_in"].reshape(1, -1),
        w_qkv, params["b_qkv"][:, None, :],
        w_out, params["b_out"][:, None, :],
        params["g1"][:, None, :], params["be1"][:, None, :],
        w1, params["b1"][:, None, :],
        w2t, params["b2"][:, None, :],
        params["g2"][:, None, :], params["be2"][:, None, :],
        w_fc, params["b_fc"].reshape(1, -1),
    )
    return out


# --------------------------------- parameters ------------------------------------- #

def positional_encoding(d_model, max_len=120):
    position = jnp.arange(max_len, dtype=jnp.float32)[:, None]
    div_term = jnp.exp(jnp.arange(0, d_model, 2, dtype=jnp.float32)
                       * (-jnp.log(10000.0) / d_model))
    pe = jnp.zeros((max_len, d_model), jnp.float32)
    pe = pe.at[:, 0::2].set(jnp.sin(position * div_term))
    pe = pe.at[:, 1::2].set(jnp.cos(position * div_term))
    return pe


def init_params(key, input_dim, d_model, num_layers, dim_ff, num_actions):
    keys = jax.random.split(key, 12)
    w = lambda k, shape: 0.05 * jax.random.normal(k, shape, jnp.float32)
    L = num_layers
    return {
        "w_in": w(keys[0], (input_dim, d_model)), "b_in": w(keys[1], (d_model,)),
        "pe": positional_encoding(d_model, 120),
        # per-encoder-layer weights stacked along a leading layer axis
        "w_qkv": w(keys[2], (L, d_model, 3 * d_model)), "b_qkv": w(keys[3], (L, 3 * d_model)),
        "w_out": w(keys[4], (L, d_model, d_model)), "b_out": w(keys[5], (L, d_model)),
        "g1": jnp.ones((L, d_model), jnp.float32), "be1": jnp.zeros((L, d_model), jnp.float32),
        "w1": w(keys[6], (L, d_model, dim_ff)), "b1": w(keys[7], (L, dim_ff)),
        "w2": w(keys[8], (L, dim_ff, d_model)), "b2": w(keys[9], (L, d_model)),
        "g2": jnp.ones((L, d_model), jnp.float32), "be2": jnp.zeros((L, d_model), jnp.float32),
        "w_fc": w(keys[10], (d_model, num_actions)), "b_fc": w(keys[11], (num_actions,)),
    }


# ------------------------------------ main ----------------------------------------- #

if __name__ == "__main__":
    B, S, INPUT_DIM = 2, 8, 12
    D_MODEL, N_HEADS, N_LAYERS = 32, 4, 2
    DIM_FF, NUM_ACTIONS = 2048, 2            # PyTorch TransformerEncoderLayer default dim_feedforward
    # NUM_STOCKS is unused by forward(), so it has no effect here.

    key = jax.random.PRNGKey(0)
    kx, kp = jax.random.split(key)
    x = jax.random.normal(kx, (B, S, INPUT_DIM), jnp.float32)
    params = init_params(kp, INPUT_DIM, D_MODEL, N_LAYERS, DIM_FF, NUM_ACTIONS)

    fwd = jax.jit(functools.partial(transformer_stock_forward, n_heads=N_HEADS))
    out = jax.block_until_ready(fwd(x, params))
    assert out.shape == (S, NUM_ACTIONS), out.shape
    assert bool(jnp.all(jnp.isfinite(out)))
    print("KERNEL_OK")
</pallas_src>

<mosaic_0001>
module attributes {stable_mosaic.version = 11 : i64} {
  func.func @_fused_layer_kernel(%arg0: i32, %arg1: memref<16x12xf32, #tpu.memory_space<vmem>>, %arg2: memref<16x32xf32, #tpu.memory_space<vmem>>, %arg3: memref<12x32xbf16, #tpu.memory_space<vmem>>, %arg4: memref<1x32xf32, #tpu.memory_space<vmem>>, %arg5: memref<1x32x96xbf16, #tpu.memory_space<vmem>>, %arg6: memref<1x1x96xf32, #tpu.memory_space<vmem>>, %arg7: memref<1x32x32xbf16, #tpu.memory_space<vmem>>, %arg8: memref<1x1x32xf32, #tpu.memory_space<vmem>>, %arg9: memref<1x1x32xf32, #tpu.memory_space<vmem>>, %arg10: memref<1x1x32xf32, #tpu.memory_space<vmem>>, %arg11: memref<1x32x2048xbf16, #tpu.memory_space<vmem>>, %arg12: memref<1x1x2048xf32, #tpu.memory_space<vmem>>, %arg13: memref<1x32x2048xbf16, #tpu.memory_space<vmem>>, %arg14: memref<1x1x32xf32, #tpu.memory_space<vmem>>, %arg15: memref<1x1x32xf32, #tpu.memory_space<vmem>>, %arg16: memref<1x1x32xf32, #tpu.memory_space<vmem>>, %arg17: memref<32x2xbf16, #tpu.memory_space<vmem>>, %arg18: memref<1x2xf32, #tpu.memory_space<vmem>>, %arg19: memref<8x2xf32, #tpu.memory_space<vmem>>, %arg20: memref<16x32xf32, #tpu.memory_space<vmem>>) attributes {dimension_semantics = [#tpu.dimension_semantics<arbitrary>], iteration_bounds = array<i64: 2>, scalar_prefetch = 0 : i64, scratch_operands = 1 : i64, tpu.core_type = #tpu.core_type<tc>, window_params = [{pipeline_mode = #tpu.pipeline_mode<synchronous>, transform_indices = @transform_0, window_bounds = array<i64: 16, 12>}, {pipeline_mode = #tpu.pipeline_mode<synchronous>, transform_indices = @transform_1, window_bounds = array<i64: 16, 32>}, {pipeline_mode = #tpu.pipeline_mode<synchronous>, transform_indices = @transform_2, window_bounds = array<i64: 12, 32>}, {pipeline_mode = #tpu.pipeline_mode<synchronous>, transform_indices = @transform_3, window_bounds = array<i64: 1, 32>}, {transform_indices = @transform_4, window_bounds = array<i64: 1, 32, 96>}, {transform_indices = @transform_5, window_bounds = array<i64: 1, 1, 96>}, {transform_indices = @transform_6, window_bounds = array<i64: 1, 32, 32>}, {transform_indices = @transform_7, window_bounds = array<i64: 1, 1, 32>}, {transform_indices = @transform_8, window_bounds = array<i64: 1, 1, 32>}, {transform_indices = @transform_9, window_bounds = array<i64: 1, 1, 32>}, {transform_indices = @transform_10, window_bounds = array<i64: 1, 32, 2048>}, {transform_indices = @transform_11, window_bounds = array<i64: 1, 1, 2048>}, {transform_indices = @transform_12, window_bounds = array<i64: 1, 32, 2048>}, {transform_indices = @transform_13, window_bounds = array<i64: 1, 1, 32>}, {transform_indices = @transform_14, window_bounds = array<i64: 1, 1, 32>}, {transform_indices = @transform_15, window_bounds = array<i64: 1, 1, 32>}, {pipeline_mode = #tpu.pipeline_mode<synchronous>, transform_indices = @transform_16, window_bounds = array<i64: 32, 2>}, {pipeline_mode = #tpu.pipeline_mode<synchronous>, transform_indices = @transform_17, window_bounds = array<i64: 1, 2>}, {pipeline_mode = #tpu.pipeline_mode<synchronous>, transform_indices = @transform_18, window_bounds = array<i64: 8, 2>}]} {
    %c0_i32 = arith.constant 0 : i32
    %0 = arith.cmpi eq, %arg0, %c0_i32 : i32
    %1 = arith.extui %0 : i1 to i32
    %c0_i32_0 = arith.constant 0 : i32
    %2 = arith.cmpi ne, %1, %c0_i32_0 : i32
    scf.if %2 {
      %c0_88 = arith.constant 0 : index
      %c0_89 = arith.constant 0 : index
      %223 = vector.load %arg1[%c0_88, %c0_89] : memref<16x12xf32, #tpu.memory_space<vmem>>, vector<16x12xf32>
      %224 = arith.truncf %223 : vector<16x12xf32> to vector<16x12xbf16>
      %c0_90 = arith.constant 0 : index
      %c0_91 = arith.constant 0 : index
      %225 = vector.load %arg3[%c0_90, %c0_91] : memref<12x32xbf16, #tpu.memory_space<vmem>>, vector<12x32xbf16>
      %cst_92 = arith.constant dense<0.000000e+00> : vector<16x32xf32>
      %226 = tpu.matmul %224, %225, %cst_92 {dimension_numbers = #tpu.dot_dimension_numbers<[1], [0], [0], [1], [0, 0, 1, 1], [], []>} : vector<16x12xbf16>, vector<12x32xbf16>, vector<16x32xf32> -> vector<16x32xf32>
      %c0_93 = arith.constant 0 : index
      %c0_94 = arith.constant 0 : index
      %227 = vector.load %arg4[%c0_93, %c0_94] : memref<1x32xf32, #tpu.memory_space<vmem>>, vector<1x32xf32>
      %228 = vector.broadcast %227 : vector<1x32xf32> to vector<16x32xf32>
      %229 = arith.addf %226, %228 : vector<16x32xf32>
      %c0_95 = arith.constant 0 : index
      %c0_96 = arith.constant 0 : index
      %230 = vector.load %arg2[%c0_95, %c0_96] : memref<16x32xf32, #tpu.memory_space<vmem>>, vector<16x32xf32>
      %231 = arith.addf %229, %230 : vector<16x32xf32>
      %c0_97 = arith.constant 0 : index
      %c0_98 = arith.constant 0 : index
      %232 = vector.load %arg20[%c0_97, %c0_98] : memref<16x32xf32, #tpu.memory_space<vmem>>, vector<16x32xf32>
      tpu.vector_store %arg20[%c0_97, %c0_98], %231 {strides = array<i32>} : memref<16x32xf32, #tpu.memory_space<vmem>>, vector<16x32xf32>,
    } else {
    }
    %c0 = arith.constant 0 : index
    %c0_1 = arith.constant 0 : index
    %3 = vector.load %arg20[%c0, %c0_1] : memref<16x32xf32, #tpu.memory_space<vmem>>, vector<16x32xf32>
    %4 = tpu.iota {dimensions = array<i32: 0>} : vector<16x16xi32>
    %c2_i32 = arith.constant 2 : i32
    %c0_i32_2 = arith.constant 0 : i32
    %5 = arith.cmpi eq, %c2_i32, %c0_i32_2 : i32
    %c1_i32 = arith.constant 1 : i32
    %6 = arith.select %5, %c1_i32, %c2_i32 : i32
    %7 = vector.broadcast %6 : i32 to vector<16x16xi32>
    %8 = arith.remsi %4, %7 : vector<16x16xi32>
    %c0_i32_3 = arith.constant 0 : i32
    %9 = vector.broadcast %c0_i32_3 : i32 to vector<16x16xi32>
    %10 = arith.cmpi ne, %8, %9 : vector<16x16xi32>
    %c0_i32_4 = arith.constant 0 : i32
    %11 = vector.broadcast %c0_i32_4 : i32 to vector<16x16xi32>
    %12 = arith.cmpi slt, %8, %11 : vector<16x16xi32>
    %c0_i32_5 = arith.constant 0 : i32
    %13 = arith.cmpi slt, %6, %c0_i32_5 : i32
    %14 = vector.broadcast %13 : i1 to vector<16x16xi1>
    %15 = vector.broadcast %14 : vector<16x16xi1> to vector<16x16xi1>
    %16 = arith.xori %12, %15 : vector<16x16xi1>
    %17 = arith.andi %16, %10 : vector<16x16xi1>
    %18 = vector.broadcast %6 : i32 to vector<16x16xi32>
    %19 = arith.addi %8, %18 : vector<16x16xi32>
    %20 = arith.select %17, %19, %8 : vector<16x16xi1>, vector<16x16xi32>
    %21 = tpu.iota {dimensions = array<i32: 1>} : vector<16x16xi32>
    %c2_i32_6 = arith.constant 2 : i32
    %c0_i32_7 = arith.constant 0 : i32
    %22 = arith.cmpi eq, %c2_i32_6, %c0_i32_7 : i32
    %c1_i32_8 = arith.constant 1 : i32
    %23 = arith.select %22, %c1_i32_8, %c2_i32_6 : i32
    %24 = vector.broadcast %23 : i32 to vector<16x16xi32>
    %25 = arith.remsi %21, %24 : vector<16x16xi32>
    %c0_i32_9 = arith.constant 0 : i32
    %26 = vector.broadcast %c0_i32_9 : i32 to vector<16x16xi32>
    %27 = arith.cmpi ne, %25, %26 : vector<16x16xi32>
    %c0_i32_10 = arith.constant 0 : i32
    %28 = vector.broadcast %c0_i32_10 : i32 to vector<16x16xi32>
    %29 = arith.cmpi slt, %25, %28 : vector<16x16xi32>
    %c0_i32_11 = arith.constant 0 : i32
    %30 = arith.cmpi slt, %23, %c0_i32_11 : i32
    %31 = vector.broadcast %30 : i1 to vector<16x16xi1>
    %32 = vector.broadcast %31 : vector<16x16xi1> to vector<16x16xi1>
    %33 = arith.xori %29, %32 : vector<16x16xi1>
    %34 = arith.andi %33, %27 : vector<16x16xi1>
    %35 = vector.broadcast %23 : i32 to vector<16x16xi32>
    %36 = arith.addi %25, %35 : vector<16x16xi32>
    %37 = arith.select %34, %36, %25 : vector<16x16xi1>, vector<16x16xi32>
    %38 = arith.cmpi eq, %20, %37 : vector<16x16xi32>
    %cst = arith.constant 0.000000e+00 : f32
    %cst_12 = arith.constant -1.000000e+30 : f32
    %39 = vector.broadcast %cst : f32 to vector<16x16xf32>
    %40 = vector.broadcast %cst_12 : f32 to vector<16x16xf32>
    %41 = arith.select %38, %39, %40 : vector<16x16xi1>, vector<16x16xf32>
    %42 = arith.truncf %3 : vector<16x32xf32> to vector<16x32xbf16>
    %c0_13 = arith.constant 0 : index
    %c0_14 = arith.constant 0 : index
    %c0_15 = arith.constant 0 : index
    %43 = vector.load %arg5[%c0_13, %c0_14, %c0_15] : memref<1x32x96xbf16, #tpu.memory_space<vmem>>, vector<1x32x96xbf16>
    %44 = vector.shape_cast %43 : vector<1x32x96xbf16> to vector<32x96xbf16>
    %cst_16 = arith.constant dense<0.000000e+00> : vector<16x96xf32>
    %45 = tpu.matmul %42, %44, %cst_16 {dimension_numbers = #tpu.dot_dimension_numbers<[1], [0], [0], [1], [0, 0, 1, 1], [], []>} : vector<16x32xbf16>, vector<32x96xbf16>, vector<16x96xf32> -> vector<16x96xf32>
    %c0_17 = arith.constant 0 : index
    %c0_18 = arith.constant 0 : index
    %c0_19 = arith.constant 0 : index
    %46 = vector.load %arg6[%c0_17, %c0_18, %c0_19] : memref<1x1x96xf32, #tpu.memory_space<vmem>>, vector<1x1x96xf32>
    %47 = vector.shape_cast %46 : vector<1x1x96xf32> to vector<1x96xf32>
    %48 = vector.broadcast %47 : vector<1x96xf32> to vector<16x96xf32>
    %49 = arith.addf %45, %48 : vector<16x96xf32>
    %50 = vector.extract_strided_slice %49 {offsets = [0, 0], sizes = [16, 8], strides = [1, 1]} : vector<16x96xf32> to vector<16x8xf32>
    %51 = arith.truncf %50 : vector<16x8xf32> to vector<16x8xbf16>
    %52 = vector.extract_strided_slice %49 {offsets = [0, 32], sizes = [16, 8], strides = [1, 1]} : vector<16x96xf32> to vector<16x8xf32>
    %53 = arith.truncf %52 : vector<16x8xf32> to vector<16x8xbf16>
    %54 = vector.extract_strided_slice %49 {offsets = [0, 64], sizes = [16, 8], strides = [1, 1]} : vector<16x96xf32> to vector<16x8xf32>
    %55 = arith.truncf %54 : vector<16x8xf32> to vector<16x8xbf16>
    %cst_20 = arith.constant dense<0.000000e+00> : vector<16x16xf32>
    %56 = tpu.matmul %51, %53, %cst_20 {dimension_numbers = #tpu.dot_dimension_numbers<[1], [1], [0], [0], [0, 0, 1, 0], [], []>} : vector<16x8xbf16>, vector<16x8xbf16>, vector<16x16xf32> -> vector<16x16xf32>
    %cst_21 = arith.constant 0.353553385 : f32
    %57 = vector.broadcast %cst_21 : f32 to vector<16x16xf32>
    %58 = arith.mulf %56, %57 : vector<16x16xf32>
    %59 = arith.addf %58, %41 : vector<16x16xf32>
    %cst_22 = arith.constant dense<0xFF800000> : vector<16xf32>
    %60 = vector.multi_reduction <maximumf>, %59, %cst_22 [1] : vector<16x16xf32> to vector<16xf32>
    %61 = vector.shape_cast %60 : vector<16xf32> to vector<16x1xf32>
    %62 = vector.broadcast %61 : vector<16x1xf32> to vector<16x16xf32>
    %63 = arith.subf %59, %62 : vector<16x16xf32>
    %64 = math.exp %63 : vector<16x16xf32>
    %cst_23 = arith.constant dense<0.000000e+00> : vector<16xf32>
    %65 = vector.multi_reduction <add>, %64, %cst_23 [1] : vector<16x16xf32> to vector<16xf32>
    %66 = vector.shape_cast %65 : vector<16xf32> to vector<16x1xf32>
    %67 = tpu.reciprocal %66 {approx = true} : vector<16x1xf32> -> vector<16x1xf32>
    %68 = vector.broadcast %67 : vector<16x1xf32> to vector<16x16xf32>
    %69 = arith.mulf %64, %68 : vector<16x16xf32>
    %70 = arith.truncf %69 : vector<16x16xf32> to vector<16x16xbf16>
    %cst_24 = arith.constant dense<0.000000e+00> : vector<16x8xf32>
    %71 = tpu.matmul %70, %55, %cst_24 {dimension_numbers = #tpu.dot_dimension_numbers<[1], [0], [0], [1], [0, 0, 1, 1], [], []>} : vector<16x16xbf16>, vector<16x8xbf16>, vector<16x8xf32> -> vector<16x8xf32>
    %72 = vector.extract_strided_slice %49 {offsets = [0, 8], sizes = [16, 8], strides = [1, 1]} : vector<16x96xf32> to vector<16x8xf32>
    %73 = arith.truncf %72 : vector<16x8xf32> to vector<16x8xbf16>
    %74 = vector.extract_strided_slice %49 {offsets = [0, 40], sizes = [16, 8], strides = [1, 1]} : vector<16x96xf32> to vector<16x8xf32>
    %75 = arith.truncf %74 : vector<16x8xf32> to vector<16x8xbf16>
    %76 = vector.extract_strided_slice %49 {offsets = [0, 72], sizes = [16, 8], strides = [1, 1]} : vector<16x96xf32> to vector<16x8xf32>
    %77 = arith.truncf %76 : vector<16x8xf32> to vector<16x8xbf16>
    %cst_25 = arith.constant dense<0.000000e+00> : vector<16x16xf32>
    %78 = tpu.matmul %73, %75, %cst_25 {dimension_numbers = #tpu.dot_dimension_numbers<[1], [1], [0], [0], [0, 0, 1, 0], [], []>} : vector<16x8xbf16>, vector<16x8xbf16>, vector<16x16xf32> -> vector<16x16xf32>
    %cst_26 = arith.constant 0.353553385 : f32
    %79 = vector.broadcast %cst_26 : f32 to vector<16x16xf32>
    %80 = arith.mulf %78, %79 : vector<16x16xf32>
    %81 = arith.addf %80, %41 : vector<16x16xf32>
    %cst_27 = arith.constant dense<0xFF800000> : vector<16xf32>
    %82 = vector.multi_reduction <maximumf>, %81, %cst_27 [1] : vector<16x16xf32> to vector<16xf32>
    %83 = vector.shape_cast %82 : vector<16xf32> to vector<16x1xf32>
    %84 = vector.broadcast %83 : vector<16x1xf32> to vector<16x16xf32>
    %85 = arith.subf %81, %84 : vector<16x16xf32>
    %86 = math.exp %85 : vector<16x16xf32>
    %cst_28 = arith.constant dense<0.000000e+00> : vector<16xf32>
    %87 = vector.multi_reduction <add>, %86, %cst_28 [1] : vector<16x16xf32> to vector<16xf32>
    %88 = vector.shape_cast %87 : vector<16xf32> to vector<16x1xf32>
    %89 = tpu.reciprocal %88 {approx = true} : vector<16x1xf32> -> vector<16x1xf32>
    %90 = vector.broadcast %89 : vector<16x1xf32> to vector<16x16xf32>
    %91 = arith.mulf %86, %90 : vector<16x16xf32>
    %92 = arith.truncf %91 : vector<16x16xf32> to vector<16x16xbf16>
    %cst_29 = arith.constant dense<0.000000e+00> : vector<16x8xf32>
    %93 = tpu.matmul %92, %77, %cst_29 {dimension_numbers = #tpu.dot_dimension_numbers<[1], [0], [0], [1], [0, 0, 1, 1], [], []>} : vector<16x16xbf16>, vector<16x8xbf16>, vector<16x8xf32> -> vector<16x8xf32>
    %94 = vector.extract_strided_slice %49 {offsets = [0, 16], sizes = [16, 8], strides = [1, 1]} : vector<16x96xf32> to vector<16x8xf32>
    %95 = arith.truncf %94 : vector<16x8xf32> to vector<16x8xbf16>
    %96 = vector.extract_strided_slice %49 {offsets = [0, 48], sizes = [16, 8], strides = [1, 1]} : vector<16x96xf32> to vector<16x8xf32>
    %97 = arith.truncf %96 : vector<16x8xf32> to vector<16x8xbf16>
    %98 = vector.extract_strided_slice %49 {offsets = [0, 80], sizes = [16, 8], strides = [1, 1]} : vector<16x96xf32> to vector<16x8xf32>
    %99 = arith.truncf %98 : vector<16x8xf32> to vector<16x8xbf16>
    %cst_30 = arith.constant dense<0.000000e+00> : vector<16x16xf32>
    %100 = tpu.matmul %95, %97, %cst_30 {dimension_numbers = #tpu.dot_dimension_numbers<[1], [1], [0], [0], [0, 0, 1, 0], [], []>} : vector<16x8xbf16>, vector<16x8xbf16>, vector<16x16xf32> -> vector<16x16xf32>
    %cst_31 = arith.constant 0.353553385 : f32
    %101 = vector.broadcast %cst_31 : f32 to vector<16x16xf32>
    %102 = arith.mulf %100, %101 : vector<16x16xf32>
    %103 = arith.addf %102, %41 : vector<16x16xf32>
    %cst_32 = arith.constant dense<0xFF800000> : vector<16xf32>
    %104 = vector.multi_reduction <maximumf>, %103, %cst_32 [1] : vector<16x16xf32> to vector<16xf32>
    %105 = vector.shape_cast %104 : vector<16xf32> to vector<16x1xf32>
    %106 = vector.broadcast %105 : vector<16x1xf32> to vector<16x16xf32>
    %107 = arith.subf %103, %106 : vector<16x16xf32>
    %108 = math.exp %107 : vector<16x16xf32>
    %cst_33 = arith.constant dense<0.000000e+00> : vector<16xf32>
    %109 = vector.multi_reduction <add>, %108, %cst_33 [1] : vector<16x16xf32> to vector<16xf32>
    %110 = vector.shape_cast %109 : vector<16xf32> to vector<16x1xf32>
    %111 = tpu.reciprocal %110 {approx = true} : vector<16x1xf32> -> vector<16x1xf32>
    %112 = vector.broadcast %111 : vector<16x1xf32> to vector<16x16xf32>
    %113 = arith.mulf %108, %112 : vector<16x16xf32>
    %114 = arith.truncf %113 : vector<16x16xf32> to vector<16x16xbf16>
    %cst_34 = arith.constant dense<0.000000e+00> : vector<16x8xf32>
    %115 = tpu.matmul %114, %99, %cst_34 {dimension_numbers = #tpu.dot_dimension_numbers<[1], [0], [0], [1], [0, 0, 1, 1], [], []>} : vector<16x16xbf16>, vector<16x8xbf16>, vector<16x8xf32> -> vector<16x8xf32>
    %116 = vector.extract_strided_slice %49 {offsets = [0, 24], sizes = [16, 8], strides = [1, 1]} : vector<16x96xf32> to vector<16x8xf32>
    %117 = arith.truncf %116 : vector<16x8xf32> to vector<16x8xbf16>
    %118 = vector.extract_strided_slice %49 {offsets = [0, 56], sizes = [16, 8], strides = [1, 1]} : vector<16x96xf32> to vector<16x8xf32>
    %119 = arith.truncf %118 : vector<16x8xf32> to vector<16x8xbf16>
    %120 = vector.extract_strided_slice %49 {offsets = [0, 88], sizes = [16, 8], strides = [1, 1]} : vector<16x96xf32> to vector<16x8xf32>
    %121 = arith.truncf %120 : vector<16x8xf32> to vector<16x8xbf16>
    %cst_35 = arith.constant dense<0.000000e+00> : vector<16x16xf32>
    %122 = tpu.matmul %117, %119, %cst_35 {dimension_numbers = #tpu.dot_dimension_numbers<[1], [1], [0], [0], [0, 0, 1, 0], [], []>} : vector<16x8xbf16>, vector<16x8xbf16>, vector<16x16xf32> -> vector<16x16xf32>
    %cst_36 = arith.constant 0.353553385 : f32
    %123 = vector.broadcast %cst_36 : f32 to vector<16x16xf32>
    %124 = arith.mulf %122, %123 : vector<16x16xf32>
    %125 = arith.addf %124, %41 : vector<16x16xf32>
    %cst_37 = arith.constant dense<0xFF800000> : vector<16xf32>
    %126 = vector.multi_reduction <maximumf>, %125, %cst_37 [1] : vector<16x16xf32> to vector<16xf32>
    %127 = vector.shape_cast %126 : vector<16xf32> to vector<16x1xf32>
    %128 = vector.broadcast %127 : vector<16x1xf32> to vector<16x16xf32>
    %129 = arith.subf %125, %128 : vector<16x16xf32>
    %130 = math.exp %129 : vector<16x16xf32>
    %cst_38 = arith.constant dense<0.000000e+00> : vector<16xf32>
    %131 = vector.multi_reduction <add>, %130, %cst_38 [1] : vector<16x16xf32> to vector<16xf32>
    %132 = vector.shape_cast %131 : vector<16xf32> to vector<16x1xf32>
    %133 = tpu.reciprocal %132 {approx = true} : vector<16x1xf32> -> vector<16x1xf32>
    %134 = vector.broadcast %133 : vector<16x1xf32> to vector<16x16xf32>
    %135 = arith.mulf %130, %134 : vector<16x16xf32>
    %136 = arith.truncf %135 : vector<16x16xf32> to vector<16x16xbf16>
    %cst_39 = arith.constant dense<0.000000e+00> : vector<16x8xf32>
    %137 = tpu.matmul %136, %121, %cst_39 {dimension_numbers = #tpu.dot_dimension_numbers<[1], [0], [0], [1], [0, 0, 1, 1], [], []>} : vector<16x16xbf16>, vector<16x8xbf16>, vector<16x8xf32> -> vector<16x8xf32>
    %138 = tpu.concatenate %71, %93, %115, %137 in 1 : vector<16x8xf32>, vector<16x8xf32>, vector<16x8xf32>, vector<16x8xf32> -> vector<16x32xf32>
    %139 = arith.truncf %138 : vector<16x32xf32> to vector<16x32xbf16>
    %c0_40 = arith.constant 0 : index
    %c0_41 = arith.constant 0 : index
    %c0_42 = arith.constant 0 : index
    %140 = vector.load %arg7[%c0_40, %c0_41, %c0_42] : memref<1x32x32xbf16, #tpu.memory_space<vmem>>, vector<1x32x32xbf16>
    %141 = vector.shape_cast %140 : vector<1x32x32xbf16> to vector<32x32xbf16>
    %cst_43 = arith.constant dense<0.000000e+00> : vector<16x32xf32>
    %142 = tpu.matmul %139, %141, %cst_43 {dimension_numbers = #tpu.dot_dimension_numbers<[1], [0], [0], [1], [0, 0, 1, 1], [], []>} : vector<16x32xbf16>, vector<32x32xbf16>, vector<16x32xf32> -> vector<16x32xf32>
    %c0_44 = arith.constant 0 : index
    %c0_45 = arith.constant 0 : index
    %c0_46 = arith.constant 0 : index
    %143 = vector.load %arg8[%c0_44, %c0_45, %c0_46] : memref<1x1x32xf32, #tpu.memory_space<vmem>>, vector<1x1x32xf32>
    %144 = vector.shape_cast %143 : vector<1x1x32xf32> to vector<1x32xf32>
    %145 = vector.broadcast %144 : vector<1x32xf32> to vector<16x32xf32>
    %146 = arith.addf %142, %145 : vector<16x32xf32>
    %c0_47 = arith.constant 0 : index
    %c0_48 = arith.constant 0 : index
    %c0_49 = arith.constant 0 : index
    %147 = vector.load %arg9[%c0_47, %c0_48, %c0_49] : memref<1x1x32xf32, #tpu.memory_space<vmem>>, vector<1x1x32xf32>
    %148 = vector.shape_cast %147 : vector<1x1x32xf32> to vector<1x32xf32>
    %c0_50 = arith.constant 0 : index
    %c0_51 = arith.constant 0 : index
    %c0_52 = arith.constant 0 : index
    %149 = vector.load %arg10[%c0_50, %c0_51, %c0_52] : memref<1x1x32xf32, #tpu.memory_space<vmem>>, vector<1x1x32xf32>
    %150 = vector.shape_cast %149 : vector<1x1x32xf32> to vector<1x32xf32>
    %151 = arith.addf %3, %146 : vector<16x32xf32>
    %cst_53 = arith.constant dense<0.000000e+00> : vector<16xf32>
    %152 = vector.multi_reduction <add>, %151, %cst_53 [1] : vector<16x32xf32> to vector<16xf32>
    %153 = vector.shape_cast %152 : vector<16xf32> to vector<16x1xf32>
    %cst_54 = arith.constant 3.200000e+01 : f32
    %154 = vector.broadcast %cst_54 : f32 to vector<16x1xf32>
    %155 = arith.divf %153, %154 : vector<16x1xf32>
    %156 = vector.broadcast %155 : vector<16x1xf32> to vector<16x32xf32>
    %157 = arith.subf %151, %156 : vector<16x32xf32>
    %158 = arith.mulf %157, %157 : vector<16x32xf32>
    %cst_55 = arith.constant dense<0.000000e+00> : vector<16xf32>
    %159 = vector.multi_reduction <add>, %158, %cst_55 [1] : vector<16x32xf32> to vector<16xf32>
    %160 = vector.shape_cast %159 : vector<16xf32> to vector<16x1xf32>
    %cst_56 = arith.constant 3.200000e+01 : f32
    %161 = vector.broadcast %cst_56 : f32 to vector<16x1xf32>
    %162 = arith.divf %160, %161 : vector<16x1xf32>
    %163 = vector.broadcast %155 : vector<16x1xf32> to vector<16x32xf32>
    %164 = arith.subf %151, %163 : vector<16x32xf32>
    %cst_57 = arith.constant 9.99999974E-6 : f32
    %165 = vector.broadcast %cst_57 : f32 to vector<16x1xf32>
    %166 = arith.addf %162, %165 : vector<16x1xf32>
    %167 = math.rsqrt %166 : vector<16x1xf32>
    %168 = vector.broadcast %167 : vector<16x1xf32> to vector<16x32xf32>
    %169 = arith.mulf %164, %168 : vector<16x32xf32>
    %170 = vector.broadcast %148 : vector<1x32xf32> to vector<16x32xf32>
    %171 = arith.mulf %169, %170 : vector<16x32xf32>
    %172 = vector.broadcast %150 : vector<1x32xf32> to vector<16x32xf32>
    %173 = arith.addf %171, %172 : vector<16x32xf32>
    %174 = arith.truncf %173 : vector<16x32xf32> to vector<16x32xbf16>
    %c0_58 = arith.constant 0 : index
    %c0_59 = arith.constant 0 : index
    %c0_60 = arith.constant 0 : index
    %175 = vector.load %arg11[%c0_58, %c0_59, %c0_60] : memref<1x32x2048xbf16, #tpu.memory_space<vmem>>, vector<1x32x2048xbf16>
    %176 = vector.shape_cast %175 : vector<1x32x2048xbf16> to vector<32x2048xbf16>
    %cst_61 = arith.constant dense<0.000000e+00> : vector<16x2048xf32>
    %177 = tpu.matmul %174, %176, %cst_61 {dimension_numbers = #tpu.dot_dimension_numbers<[1], [0], [0], [1], [0, 0, 1, 1], [], []>} : vector<16x32xbf16>, vector<32x2048xbf16>, vector<16x2048xf32> -> vector<16x2048xf32>
    %c0_62 = arith.constant 0 : index
    %c0_63 = arith.constant 0 : index
    %c0_64 = arith.constant 0 : index
    %178 = vector.load %arg12[%c0_62, %c0_63, %c0_64] : memref<1x1x2048xf32, #tpu.memory_space<vmem>>, vector<1x1x2048xf32>
    %179 = vector.shape_cast %178 : vector<1x1x2048xf32> to vector<1x2048xf32>
    %180 = vector.broadcast %179 : vector<1x2048xf32> to vector<16x2048xf32>
    %181 = arith.addf %177, %180 : vector<16x2048xf32>
    %cst_65 = arith.constant 0.000000e+00 : f32
    %182 = vector.broadcast %cst_65 : f32 to vector<16x2048xf32>
    %183 = arith.maximumf %181, %182 : vector<16x2048xf32>
    %184 = arith.truncf %183 : vector<16x2048xf32> to vector<16x2048xbf16>
    %c0_66 = arith.constant 0 : index
    %c0_67 = arith.constant 0 : index
    %c0_68 = arith.constant 0 : index
    %185 = vector.load %arg13[%c0_66, %c0_67, %c0_68] : memref<1x32x2048xbf16, #tpu.memory_space<vmem>>, vector<1x32x2048xbf16>
    %186 = vector.shape_cast %185 : vector<1x32x2048xbf16> to vector<32x2048xbf16>
    %cst_69 = arith.constant dense<0.000000e+00> : vector<16x32xf32>
    %187 = tpu.matmul %184, %186, %cst_69 {dimension_numbers = #tpu.dot_dimension_numbers<[1], [1], [0], [0], [0, 0, 1, 0], [], []>} : vector<16x2048xbf16>, vector<32x2048xbf16>, vector<16x32xf32> -> vector<16x32xf32>
    %c0_70 = arith.constant 0 : index
    %c0_71 = arith.constant 0 : index
    %c0_72 = arith.constant 0 : index
    %188 = vector.load %arg14[%c0_70, %c0_71, %c0_72] : memref<1x1x32xf32, #tpu.memory_space<vmem>>, vector<1x1x32xf32>
    %189 = vector.shape_cast %188 : vector<1x1x32xf32> to vector<1x32xf32>
    %190 = vector.broadcast %189 : vector<1x32xf32> to vector<16x32xf32>
    %191 = arith.addf %187, %190 : vector<16x32xf32>
    %c0_73 = arith.constant 0 : index
    %c0_74 = arith.constant 0 : index
    %c0_75 = arith.constant 0 : index
    %192 = vector.load %arg15[%c0_73, %c0_74, %c0_75] : memref<1x1x32xf32, #tpu.memory_space<vmem>>, vector<1x1x32xf32>
    %193 = vector.shape_cast %192 : vector<1x1x32xf32> to vector<1x32xf32>
    %c0_76 = arith.constant 0 : index
    %c0_77 = arith.constant 0 : index
    %c0_78 = arith.constant 0 : index
    %194 = vector.load %arg16[%c0_76, %c0_77, %c0_78] : memref<1x1x32xf32, #tpu.memory_space<vmem>>, vector<1x1x32xf32>
    %195 = vector.shape_cast %194 : vector<1x1x32xf32> to vector<1x32xf32>
    %196 = arith.addf %173, %191 : vector<16x32xf32>
    %cst_79 = arith.constant dense<0.000000e+00> : vector<16xf32>
    %197 = vector.multi_reduction <add>, %196, %cst_79 [1] : vector<16x32xf32> to vector<16xf32>
    %198 = vector.shape_cast %197 : vector<16xf32> to vector<16x1xf32>
    %cst_80 = arith.constant 3.200000e+01 : f32
    %199 = vector.broadcast %cst_80 : f32 to vector<16x1xf32>
    %200 = arith.divf %198, %199 : vector<16x1xf32>
    %201 = vector.broadcast %200 : vector<16x1xf32> to vector<16x32xf32>
    %202 = arith.subf %196, %201 : vector<16x32xf32>
    %203 = arith.mulf %202, %202 : vector<16x32xf32>
    %cst_81 = arith.constant dense<0.000000e+00> : vector<16xf32>
    %204 = vector.multi_reduction <add>, %203, %cst_81 [1] : vector<16x32xf32> to vector<16xf32>
    %205 = vector.shape_cast %204 : vector<16xf32> to vector<16x1xf32>
    %cst_82 = arith.constant 3.200000e+01 : f32
    %206 = vector.broadcast %cst_82 : f32 to vector<16x1xf32>
    %207 = arith.divf %205, %206 : vector<16x1xf32>
    %208 = vector.broadcast %200 : vector<16x1xf32> to vector<16x32xf32>
    %209 = arith.subf %196, %208 : vector<16x32xf32>
    %cst_83 = arith.constant 9.99999974E-6 : f32
    %210 = vector.broadcast %cst_83 : f32 to vector<16x1xf32>
    %211 = arith.addf %207, %210 : vector<16x1xf32>
    %212 = math.rsqrt %211 : vector<16x1xf32>
    %213 = vector.broadcast %212 : vector<16x1xf32> to vector<16x32xf32>
    %214 = arith.mulf %209, %213 : vector<16x32xf32>
    %215 = vector.broadcast %193 : vector<1x32xf32> to vector<16x32xf32>
    %216 = arith.mulf %214, %215 : vector<16x32xf32>
    %217 = vector.broadcast %195 : vector<1x32xf32> to vector<16x32xf32>
    %218 = arith.addf %216, %217 : vector<16x32xf32>
    %c0_84 = arith.constant 0 : index
    %c0_85 = arith.constant 0 : index
    %219 = vector.load %arg20[%c0_84, %c0_85] : memref<16x32xf32, #tpu.memory_space<vmem>>, vector<16x32xf32>
    tpu.vector_store %arg20[%c0_84, %c0_85], %218 {strides = array<i32>} : memref<16x32xf32, #tpu.memory_space<vmem>>, vector<16x32xf32>,
    %c1_i32_86 = arith.constant 1 : i32
    %220 = arith.cmpi eq, %arg0, %c1_i32_86 : i32
    %221 = arith.extui %220 : i1 to i32
    %c0_i32_87 = arith.constant 0 : i32
    %222 = arith.cmpi ne, %221, %c0_i32_87 : i32
    scf.if %222 {
      %c1 = arith.constant 1 : index
      %c0_88 = arith.constant 0 : index
      %223 = tpu.strided_load %arg20[%c1, %c0_88] {strides = array<i32: 2, 1>} : memref<16x32xf32, #tpu.memory_space<vmem>>, vector<8x32xf32>
      %224 = arith.truncf %223 : vector<8x32xf32> to vector<8x32xbf16>
      %c0_89 = arith.constant 0 : index
      %c0_90 = arith.constant 0 : index
      %225 = vector.load %arg17[%c0_89, %c0_90] : memref<32x2xbf16, #tpu.memory_space<vmem>>, vector<32x2xbf16>
      %cst_91 = arith.constant dense<0.000000e+00> : vector<8x2xf32>
      %226 = tpu.matmul %224, %225, %cst_91 {dimension_numbers = #tpu.dot_dimension_numbers<[1], [0], [0], [1], [0, 0, 1, 1], [], []>} : vector<8x32xbf16>, vector<32x2xbf16>, vector<8x2xf32> -> vector<8x2xf32>
      %c0_92 = arith.constant 0 : index
      %c0_93 = arith.constant 0 : index
      %227 = vector.load %arg18[%c0_92, %c0_93] : memref<1x2xf32, #tpu.memory_space<vmem>>, vector<1x2xf32>
      %228 = vector.broadcast %227 : vector<1x2xf32> to vector<8x2xf32>
      %229 = arith.addf %226, %228 : vector<8x2xf32>
      %c0_94 = arith.constant 0 : index
      %c0_95 = arith.constant 0 : index
      %230 = vector.load %arg19[%c0_94, %c0_95] : memref<8x2xf32, #tpu.memory_space<vmem>>, vector<8x2xf32>
      tpu.vector_store %arg19[%c0_94, %c0_95], %229 {strides = array<i32>} : memref<8x2xf32, #tpu.memory_space<vmem>>, vector<8x2xf32>,
    } else {
    }
    return
  }
  func.func @transform_0(%arg0: i32) -> (i32, i32) {
    %c0_i32 = arith.constant 0 : i32
    %c0_i32_0 = arith.constant 0 : i32
    %c0_i32_1 = arith.constant 0 : i32
    return %c0_i32, %c0_i32_0 : i32, i32
  }
  func.func @transform_1(%arg0: i32) -> (i32, i32) {
    %c0_i32 = arith.constant 0 : i32
    %c0_i32_0 = arith.constant 0 : i32
    %c0_i32_1 = arith.constant 0 : i32
    return %c0_i32, %c0_i32_0 : i32, i32
  }
  func.func @transform_2(%arg0: i32) -> (i32, i32) {
    %c0_i32 = arith.constant 0 : i32
    %c0_i32_0 = arith.constant 0 : i32
    %c0_i32_1 = arith.constant 0 : i32
    return %c0_i32, %c0_i32_0 : i32, i32
  }
  func.func @transform_3(%arg0: i32) -> (i32, i32) {
    %c0_i32 = arith.constant 0 : i32
    %c0_i32_0 = arith.constant 0 : i32
    %c0_i32_1 = arith.constant 0 : i32
    return %c0_i32, %c0_i32_0 : i32, i32
  }
  func.func @transform_4(%arg0: i32) -> (i32, i32, i32) {
    %c0_i32 = arith.constant 0 : i32
    %c0_i32_0 = arith.constant 0 : i32
    %c0_i32_1 = arith.constant 0 : i32
    return %arg0, %c0_i32, %c0_i32_0 : i32, i32, i32
  }
  func.func @transform_5(%arg0: i32) -> (i32, i32, i32) {
    %c0_i32 = arith.constant 0 : i32
    %c0_i32_0 = arith.constant 0 : i32
    %c0_i32_1 = arith.constant 0 : i32
    return %arg0, %c0_i32, %c0_i32_0 : i32, i32, i32
  }
  func.func @transform_6(%arg0: i32) -> (i32, i32, i32) {
    %c0_i32 = arith.constant 0 : i32
    %c0_i32_0 = arith.constant 0 : i32
    %c0_i32_1 = arith.constant 0 : i32
    return %arg0, %c0_i32, %c0_i32_0 : i32, i32, i32
  }
  func.func @transform_7(%arg0: i32) -> (i32, i32, i32) {
    %c0_i32 = arith.constant 0 : i32
    %c0_i32_0 = arith.constant 0 : i32
    %c0_i32_1 = arith.constant 0 : i32
    return %arg0, %c0_i32, %c0_i32_0 : i32, i32, i32
  }
  func.func @transform_8(%arg0: i32) -> (i32, i32, i32) {
    %c0_i32 = arith.constant 0 : i32
    %c0_i32_0 = arith.constant 0 : i32
    %c0_i32_1 = arith.constant 0 : i32
    return %arg0, %c0_i32, %c0_i32_0 : i32, i32, i32
  }
  func.func @transform_9(%arg0: i32) -> (i32, i32, i32) {
    %c0_i32 = arith.constant 0 : i32
    %c0_i32_0 = arith.constant 0 : i32
    %c0_i32_1 = arith.constant 0 : i32
    return %arg0, %c0_i32, %c0_i32_0 : i32, i32, i32
  }
  func.func @transform_10(%arg0: i32) -> (i32, i32, i32) {
    %c0_i32 = arith.constant 0 : i32
    %c0_i32_0 = arith.constant 0 : i32
    %c0_i32_1 = arith.constant 0 : i32
    return %arg0, %c0_i32, %c0_i32_0 : i32, i32, i32
  }
  func.func @transform_11(%arg0: i32) -> (i32, i32, i32) {
    %c0_i32 = arith.constant 0 : i32
    %c0_i32_0 = arith.constant 0 : i32
    %c0_i32_1 = arith.constant 0 : i32
    return %arg0, %c0_i32, %c0_i32_0 : i32, i32, i32
  }
  func.func @transform_12(%arg0: i32) -> (i32, i32, i32) {
    %c0_i32 = arith.constant 0 : i32
    %c0_i32_0 = arith.constant 0 : i32
    %c0_i32_1 = arith.constant 0 : i32
    return %arg0, %c0_i32, %c0_i32_0 : i32, i32, i32
  }
  func.func @transform_13(%arg0: i32) -> (i32, i32, i32) {
    %c0_i32 = arith.constant 0 : i32
    %c0_i32_0 = arith.constant 0 : i32
    %c0_i32_1 = arith.constant 0 : i32
    return %arg0, %c0_i32, %c0_i32_0 : i32, i32, i32
  }
  func.func @transform_14(%arg0: i32) -> (i32, i32, i32) {
    %c0_i32 = arith.constant 0 : i32
    %c0_i32_0 = arith.constant 0 : i32
    %c0_i32_1 = arith.constant 0 : i32
    return %arg0, %c0_i32, %c0_i32_0 : i32, i32, i32
  }
  func.func @transform_15(%arg0: i32) -> (i32, i32, i32) {
    %c0_i32 = arith.constant 0 : i32
    %c0_i32_0 = arith.constant 0 : i32
    %c0_i32_1 = arith.constant 0 : i32
    return %arg0, %c0_i32, %c0_i32_0 : i32, i32, i32
  }
  func.func @transform_16(%arg0: i32) -> (i32, i32) {
    %c0_i32 = arith.constant 0 : i32
    %c0_i32_0 = arith.constant 0 : i32
    %c0_i32_1 = arith.constant 0 : i32
    return %c0_i32, %c0_i32_0 : i32, i32
  }
  func.func @transform_17(%arg0: i32) -> (i32, i32) {
    %c0_i32 = arith.constant 0 : i32
    %c0_i32_0 = arith.constant 0 : i32
    %c0_i32_1 = arith.constant 0 : i32
    return %c0_i32, %c0_i32_0 : i32, i32
  }
  func.func @transform_18(%arg0: i32) -> (i32, i32) {
    %c0_i32 = arith.constant 0 : i32
    %c0_i32_0 = arith.constant 0 : i32
    %c0_i32_1 = arith.constant 0 : i32
    return %c0_i32, %c0_i32_0 : i32, i32
  }
}

</mosaic_0001>

<llo_original>
// kernel: transformer_stock_forward.1
$region0: #{transformer_stock_forward.1}
  #allocation0 [shape = 'u32[]', space=smem, size = 0x4, offset = 0x4, fixed_abs, tag = 'smem constant byte address 0x4 - core index']
  #allocation1 [shape = 'u32[144,128]{1,0:T(1,128)}', space=vmem, size = 0x12000, scoped, tag = 'internal scratch']
  #allocation2 [shape = 'f32[16,32]{1,0:T(8,128)}', space=vmem, size = 0x2000, scoped, tag = 'scratch operand']
  %s0 = inlined_call_operand.vmem [shape: f32[16,12], index: 0, kind: input, shape index: {}]
  %s1 = inlined_call_operand.vmem [shape: f32[16,32], index: 1, kind: input, shape index: {}]
  %s2 = inlined_call_operand.vmem [shape: bf16[12,32], index: 2, kind: input, shape index: {}]
  %s3 = inlined_call_operand.vmem [shape: f32[1,32], index: 3, kind: input, shape index: {}]
  %s4 = inlined_call_operand.vmem [shape: bf16[2,32,96], index: 4, kind: input, shape index: {}]
  %s5 = inlined_call_operand.vmem [shape: f32[2,1,96], index: 5, kind: input, shape index: {}]
  %s6 = inlined_call_operand.vmem [shape: bf16[2,32,32], index: 6, kind: input, shape index: {}]
  %s7 = inlined_call_operand.vmem [shape: f32[2,1,32], index: 7, kind: input, shape index: {}]
  %s8 = inlined_call_operand.vmem [shape: f32[2,1,32], index: 8, kind: input, shape index: {}]
  %s9 = inlined_call_operand.vmem [shape: f32[2,1,32], index: 9, kind: input, shape index: {}]
  %s10 = inlined_call_operand.vmem [shape: bf16[2,32,2048], index: 10, kind: input, shape index: {}]
  %s11 = inlined_call_operand.vmem [shape: f32[2,1,2048], index: 11, kind: input, shape index: {}]
  %s12 = inlined_call_operand.vmem [shape: bf16[2,32,2048], index: 12, kind: input, shape index: {}]
  %s13 = inlined_call_operand.vmem [shape: f32[2,1,32], index: 13, kind: input, shape index: {}]
  %s14 = inlined_call_operand.vmem [shape: f32[2,1,32], index: 14, kind: input, shape index: {}]
  %s15 = inlined_call_operand.vmem [shape: f32[2,1,32], index: 15, kind: input, shape index: {}]
  %s16 = inlined_call_operand.vmem [shape: bf16[32,2], index: 16, kind: input, shape index: {}]
  %s17 = inlined_call_operand.vmem [shape: f32[1,2], index: 17, kind: input, shape index: {}]
  %s18 = inlined_call_operand.vmem [shape: f32[8,2], index: 18, kind: output, shape index: {}]
  %s19 = sld [smem:[#allocation0]]
  $region113: #{transformer_stock_forward.1} parent=0
    _
  %s21 = ssub.s32 1, %s19
  %s22 = scalar_select 0, %s21, %s19
  loop: start=0, step=1, limit=4
  $region2: #{transformer_stock_forward.1} parent=0 // loop_pre_header
    _
  $region3: #{transformer_stock_forward.1} parent=0 // loop_header
    %s24 = sphi 0, %s28
    %p25 = scmp.ge.s32.totalorder %s24, 4
    %s32 = sphi 0, %s32
    %s34 = sphi 0, %s32
    %s35 = sphi 0, %s34
    %s49 = sphi 0, %s35
    %s53 = sphi 0, %s53
    %s55 = sphi 0, %s53
    %s56 = sphi 0, %s55
    %s70 = sphi 0, %s56
    %s74 = sphi 0, %s74
    %s76 = sphi 0, %s74
    %s77 = sphi 0, %s76
    %s91 = sphi 0, %s77
    %s95 = sphi 0, %s95
    %s97 = sphi 0, %s95
    %s98 = sphi 0, %s97
    %s112 = sphi 0, %s98
    %s118 = sphi 0, %s120
    %s121 = sphi 0, %s118
    %s122 = sphi 0, %s121
    %s138 = sphi 0, %s122
    %s144 = sphi 0, %s146
    %s147 = sphi 0, %s144
    %s148 = sphi 0, %s147
    %s164 = sphi 0, %s148
    %s170 = sphi 0, %s172
    %s173 = sphi 0, %s170
    %s174 = sphi 0, %s173
    %s190 = sphi 0, %s174
    %s196 = sphi 0, %s198
    %s199 = sphi 0, %s196
    %s200 = sphi 0, %s199
    %s216 = sphi 0, %s200
    %s222 = sphi 0, %s224
    %s225 = sphi 0, %s222
    %s226 = sphi 0, %s225
    %s242 = sphi 0, %s226
    %s248 = sphi 0, %s250
    %s251 = sphi 0, %s248
    %s252 = sphi 0, %s251
    %s268 = sphi 0, %s252
    %s274 = sphi 0, %s276
    %s277 = sphi 0, %s274
    %s278 = sphi 0, %s277
    %s294 = sphi 0, %s278
    %s300 = sphi 0, %s302
    %s303 = sphi 0, %s300
    %s304 = sphi 0, %s303
    %s320 = sphi 0, %s304
    %s326 = sphi 0, %s328
    %s329 = sphi 0, %s326
    %s330 = sphi 0, %s329
    %s346 = sphi 0, %s330
    %s352 = sphi 0, %s354
    %s355 = sphi 0, %s352
    %s356 = sphi 0, %s355
    %s372 = sphi 0, %s356
    %s378 = sphi 0, %s380
    %s381 = sphi 0, %s378
    %s382 = sphi 0, %s381
    %s398 = sphi 0, %s382
    %s404 = sphi 0, %s406
    %s407 = sphi 0, %s404
    %s408 = sphi 0, %s407
    %s424 = sphi 0, %s408
    %s428 = sphi 0, %s428
    %s430 = sphi 0, %s428
    %s431 = sphi 0, %s430
    %s445 = sphi 0, %s431
    %s449 = sphi 0, %s449
    %s451 = sphi 0, %s449
    %s452 = sphi 0, %s451
    %s466 = sphi 0, %s452
    %s470 = sphi 0, %s470
    %s472 = sphi 0, %s470
    %s473 = sphi 0, %s472
    %s487 = sphi 0, %s473
  $region4: #{transformer_stock_forward.1} parent=0 // loop_header_branch
    %27 = sbr.rel (%p25) target = $region8
  $region5: #{transformer_stock_forward.1} parent=0 // loop_body
    %s29 = ssub.s32 %s24, 1
    %s30 = ssub.s32 %s24, 2
    %s31 = sadd.s32 %s24, 1
    %s33 = sadd.s32 %s32, 1
    %p36 = scmp.eq.s32.totalorder %s24, 1
    %p37 = scmp.ne.s32.totalorder %s32, %s34
    %p38 = scmp.eq.s32.totalorder %s24, 0
    %p39 = por %p37, %p38
    %p40 = scmp.ne.s32.totalorder %s32, %s34
    %p41 = scmp.eq.s32.totalorder %s29, 1
    %p42 = por %p40, %p41
    %p43 = scmp.ne.s32.totalorder %s34, %s35
    %p44 = scmp.eq.s32.totalorder %s29, 0
    %p45 = por %p43, %p44
    %p46 = scmp.ne.s32.totalorder %s34, %s35
    %p47 = scmp.eq.s32.totalorder %s30, 1
    %p48 = por %p46, %p47
    %p50 = scmp.ne.s32.totalorder %s35, %s49
    %p51 = scmp.eq.s32.totalorder %s30, 0
    %p52 = por %p50, %p51
    %s54 = sadd.s32 %s53, 1
    %p57 = scmp.eq.s32.totalorder %s24, 1
    %p58 = scmp.ne.s32.totalorder %s53, %s55
    %p59 = scmp.eq.s32.totalorder %s24, 0
    %p60 = por %p58, %p59
    %p61 = scmp.ne.s32.totalorder %s53, %s55
    %p62 = scmp.eq.s32.totalorder %s29, 1
    %p63 = por %p61, %p62
    %p64 = scmp.ne.s32.totalorder %s55, %s56
    %p65 = scmp.eq.s32.totalorder %s29, 0
    %p66 = por %p64, %p65
    %p67 = scmp.ne.s32.totalorder %s55, %s56
    %p68 = scmp.eq.s32.totalorder %s30, 1
    %p69 = por %p67, %p68
    %p71 = scmp.ne.s32.totalorder %s56, %s70
    %p72 = scmp.eq.s32.totalorder %s30, 0
    %p73 = por %p71, %p72
    %s75 = sadd.s32 %s74, 1
    %p78 = scmp.eq.s32.totalorder %s24, 1
    %p79 = scmp.ne.s32.totalorder %s74, %s76
    %p80 = scmp.eq.s32.totalorder %s24, 0
    %p81 = por %p79, %p80
    %p82 = scmp.ne.s32.totalorder %s74, %s76
    %p83 = scmp.eq.s32.totalorder %s29, 1
    %p84 = por %p82, %p83
    %p85 = scmp.ne.s32.totalorder %s76, %s77
    %p86 = scmp.eq.s32.totalorder %s29, 0
    %p87 = por %p85, %p86
    %p88 = scmp.ne.s32.totalorder %s76, %s77
    %p89 = scmp.eq.s32.totalorder %s30, 1
    %p90 = por %p88, %p89
    %p92 = scmp.ne.s32.totalorder %s77, %s91
    %p93 = scmp.eq.s32.totalorder %s30, 0
    %p94 = por %p92, %p93
    %s96 = sadd.s32 %s95, 1
    %p99 = scmp.eq.s32.totalorder %s24, 1
    %p100 = scmp.ne.s32.totalorder %s95, %s97
    %p101 = scmp.eq.s32.totalorder %s24, 0
    %p102 = por %p100, %p101
    %p103 = scmp.ne.s32.totalorder %s95, %s97
    %p104 = scmp.eq.s32.totalorder %s29, 1
    %p105 = por %p103, %p104
    %p106 = scmp.ne.s32.totalorder %s97, %s98
    %p107 = scmp.eq.s32.totalorder %s29, 0
    %p108 = por %p106, %p107
    %p109 = scmp.ne.s32.totalorder %s97, %s98
    %p110 = scmp.eq.s32.totalorder %s30, 1
    %p111 = por %p109, %p110
    %p113 = scmp.ne.s32.totalorder %s98, %s112
    %p114 = scmp.eq.s32.totalorder %s30, 0
    %p115 = por %p113, %p114
    %s116 = ssub.s32 %s24, %s31
    %p117 = scmp.eq.s32.totalorder %s116, 0
    %s119 = sadd.s32 %s118, 1
    %s120 = scalar_select %p117, %s118, %s119
    %p123 = pneg %p117
    %p124 = scmp.eq.s32.totalorder %s24, 1
    %p125 = por %p123, %p124
    %p126 = scmp.ne.s32.totalorder %s118, %s121
    %p127 = scmp.eq.s32.totalorder %s24, 0
    %p128 = por %p126, %p127
    %p129 = scmp.ne.s32.totalorder %s118, %s121
    %p130 = scmp.eq.s32.totalorder %s29, 1
    %p131 = por %p129, %p130
    %p132 = scmp.ne.s32.totalorder %s121, %s122
    %p133 = scmp.eq.s32.totalorder %s29, 0
    %p134 = por %p132, %p133
    %p135 = scmp.ne.s32.totalorder %s121, %s122
    %p136 = scmp.eq.s32.totalorder %s30, 1
    %p137 = por %p135, %p136
    %p139 = scmp.ne.s32.totalorder %s122, %s138
    %p140 = scmp.eq.s32.totalorder %s30, 0
    %p141 = por %p139, %p140
    %s142 = ssub.s32 %s24, %s31
    %p143 = scmp.eq.s32.totalorder %s142, 0
    %s145 = sadd.s32 %s144, 1
    %s146 = scalar_select %p143, %s144, %s145
    %p149 = pneg %p143
    %p150 = scmp.eq.s32.totalorder %s24, 1
    %p151 = por %p149, %p150
    %p152 = scmp.ne.s32.totalorder %s144, %s147
    %p153 = scmp.eq.s32.totalorder %s24, 0
    %p154 = por %p152, %p153
    %p155 = scmp.ne.s32.totalorder %s144, %s147
    %p156 = scmp.eq.s32.totalorder %s29, 1
    %p157 = por %p155, %p156
    %p158 = scmp.ne.s32.totalorder %s147, %s148
    %p159 = scmp.eq.s32.totalorder %s29, 0
    %p160 = por %p158, %p159
    %p161 = scmp.ne.s32.totalorder %s147, %s148
    %p162 = scmp.eq.s32.totalorder %s30, 1
    %p163 = por %p161, %p162
    %p165 = scmp.ne.s32.totalorder %s148, %s164
    %p166 = scmp.eq.s32.totalorder %s30, 0
    %p167 = por %p165, %p166
    %s168 = ssub.s32 %s24, %s31
    %p169 = scmp.eq.s32.totalorder %s168, 0
    %s171 = sadd.s32 %s170, 1
    %s172 = scalar_select %p169, %s170, %s171
    %p175 = pneg %p169
    %p176 = scmp.eq.s32.totalorder %s24, 1
    %p177 = por %p175, %p176
    %p178 = scmp.ne.s32.totalorder %s170, %s173
    %p179 = scmp.eq.s32.totalorder %s24, 0
    %p180 = por %p178, %p179
    %p181 = scmp.ne.s32.totalorder %s170, %s173
    %p182 = scmp.eq.s32.totalorder %s29, 1
    %p183 = por %p181, %p182
    %p184 = scmp.ne.s32.totalorder %s173, %s174
    %p185 = scmp.eq.s32.totalorder %s29, 0
    %p186 = por %p184, %p185
    %p187 = scmp.ne.s32.totalorder %s173, %s174
    %p188 = scmp.eq.s32.totalorder %s30, 1
    %p189 = por %p187, %p188
    %p191 = scmp.ne.s32.totalorder %s174, %s190
    %p192 = scmp.eq.s32.totalorder %s30, 0
    %p193 = por %p191, %p192
    %s194 = ssub.s32 %s24, %s31
    %p195 = scmp.eq.s32.totalorder %s194, 0
    %s197 = sadd.s32 %s196, 1
    %s198 = scalar_select %p195, %s196, %s197
    %p201 = pneg %p195
    %p202 = scmp.eq.s32.totalorder %s24, 1
    %p203 = por %p201, %p202
    %p204 = scmp.ne.s32.totalorder %s196, %s199
    %p205 = scmp.eq.s32.totalorder %s24, 0
    %p206 = por %p204, %p205
    %p207 = scmp.ne.s32.totalorder %s196, %s199
    %p208 = scmp.eq.s32.totalorder %s29, 1
    %p209 = por %p207, %p208
    %p210 = scmp.ne.s32.totalorder %s199, %s200
    %p211 = scmp.eq.s32.totalorder %s29, 0
    %p212 = por %p210, %p211
    %p213 = scmp.ne.s32.totalorder %s199, %s200
    %p214 = scmp.eq.s32.totalorder %s30, 1
    %p215 = por %p213, %p214
    %p217 = scmp.ne.s32.totalorder %s200, %s216
    %p218 = scmp.eq.s32.totalorder %s30, 0
    %p219 = por %p217, %p218
    %s220 = ssub.s32 %s24, %s31
    %p221 = scmp.eq.s32.totalorder %s220, 0
    %s223 = sadd.s32 %s222, 1
    %s224 = scalar_select %p221, %s222, %s223
    %p227 = pneg %p221
    %p228 = scmp.eq.s32.totalorder %s24, 1
    %p229 = por %p227, %p228
    %p230 = scmp.ne.s32.totalorder %s222, %s225
    %p231 = scmp.eq.s32.totalorder %s24, 0
    %p232 = por %p230, %p231
    %p233 = scmp.ne.s32.totalorder %s222, %s225
    %p234 = scmp.eq.s32.totalorder %s29, 1
    %p235 = por %p233, %p234
    %p236 = scmp.ne.s32.totalorder %s225, %s226
    %p237 = scmp.eq.s32.totalorder %s29, 0
    %p238 = por %p236, %p237
    %p239 = scmp.ne.s32.totalorder %s225, %s226
    %p240 = scmp.eq.s32.totalorder %s30, 1
    %p241 = por %p239, %p240
    %p243 = scmp.ne.s32.totalorder %s226, %s242
    %p244 = scmp.eq.s32.totalorder %s30, 0
    %p245 = por %p243, %p244
    %s246 = ssub.s32 %s24, %s31
    %p247 = scmp.eq.s32.totalorder %s246, 0
    %s249 = sadd.s32 %s248, 1
    %s250 = scalar_select %p247, %s248, %s249
    %p253 = pneg %p247
    %p254 = scmp.eq.s32.totalorder %s24, 1
    %p255 = por %p253, %p254
    %p256 = scmp.ne.s32.totalorder %s248, %s251
    %p257 = scmp.eq.s32.totalorder %s24, 0
    %p258 = por %p256, %p257
    %p259 = scmp.ne.s32.totalorder %s248, %s251
    %p260 = scmp.eq.s32.totalorder %s29, 1
    %p261 = por %p259, %p260
    %p262 = scmp.ne.s32.totalorder %s251, %s252
    %p263 = scmp.eq.s32.totalorder %s29, 0
    %p264 = por %p262, %p263
    %p265 = scmp.ne.s32.totalorder %s251, %s252
    %p266 = scmp.eq.s32.totalorder %s30, 1
    %p267 = por %p265, %p266
    %p269 = scmp.ne.s32.totalorder %s252, %s268
    %p270 = scmp.eq.s32.totalorder %s30, 0
    %p271 = por %p269, %p270
    %s272 = ssub.s32 %s24, %s31
    %p273 = scmp.eq.s32.totalorder %s272, 0
    %s275 = sadd.s32 %s274, 1
    %s276 = scalar_select %p273, %s274, %s275
    %p279 = pneg %p273
    %p280 = scmp.eq.s32.totalorder %s24, 1
    %p281 = por %p279, %p280
    %p282 = scmp.ne.s32.totalorder %s274, %s277
    %p283 = scmp.eq.s32.totalorder %s24, 0
    %p284 = por %p282, %p283
    %p285 = scmp.ne.s32.totalorder %s274, %s277
    %p286 = scmp.eq.s32.totalorder %s29, 1
    %p287 = por %p285, %p286
    %p288 = scmp.ne.s32.totalorder %s277, %s278
    %p289 = scmp.eq.s32.totalorder %s29, 0
    %p290 = por %p288, %p289
    %p291 = scmp.ne.s32.totalorder %s277, %s278
    %p292 = scmp.eq.s32.totalorder %s30, 1
    %p293 = por %p291, %p292
    %p295 = scmp.ne.s32.totalorder %s278, %s294
    %p296 = scmp.eq.s32.totalorder %s30, 0
    %p297 = por %p295, %p296
    %s298 = ssub.s32 %s24, %s31
    %p299 = scmp.eq.s32.totalorder %s298, 0
    %s301 = sadd.s32 %s300, 1
    %s302 = scalar_select %p299, %s300, %s301
    %p305 = pneg %p299
    %p306 = scmp.eq.s32.totalorder %s24, 1
    %p307 = por %p305, %p306
    %p308 = scmp.ne.s32.totalorder %s300, %s303
    %p309 = scmp.eq.s32.totalorder %s24, 0
    %p310 = por %p308, %p309
    %p311 = scmp.ne.s32.totalorder %s300, %s303
    %p312 = scmp.eq.s32.totalorder %s29, 1
    %p313 = por %p311, %p312
    %p314 = scmp.ne.s32.totalorder %s303, %s304
    %p315 = scmp.eq.s32.totalorder %s29, 0
    %p316 = por %p314, %p315
    %p317 = scmp.ne.s32.totalorder %s303, %s304
    %p318 = scmp.eq.s32.totalorder %s30, 1
    %p319 = por %p317, %p318
    %p321 = scmp.ne.s32.totalorder %s304, %s320
    %p322 = scmp.eq.s32.totalorder %s30, 0
    %p323 = por %p321, %p322
    %s324 = ssub.s32 %s24, %s31
    %p325 = scmp.eq.s32.totalorder %s324, 0
    %s327 = sadd.s32 %s326, 1
    %s328 = scalar_select %p325, %s326, %s327
    %p331 = pneg %p325
    %p332 = scmp.eq.s32.totalorder %s24, 1
    %p333 = por %p331, %p332
    %p334 = scmp.ne.s32.totalorder %s326, %s329
    %p335 = scmp.eq.s32.totalorder %s24, 0
    %p336 = por %p334, %p335
    %p337 = scmp.ne.s32.totalorder %s326, %s329
    %p338 = scmp.eq.s32.totalorder %s29, 1
    %p339 = por %p337, %p338
    %p340 = scmp.ne.s32.totalorder %s329, %s330
    %p341 = scmp.eq.s32.totalorder %s29, 0
    %p342 = por %p340, %p341
    %p343 = scmp.ne.s32.totalorder %s329, %s330
    %p344 = scmp.eq.s32.totalorder %s30, 1
    %p345 = por %p343, %p344
    %p347 = scmp.ne.s32.totalorder %s330, %s346
    %p348 = scmp.eq.s32.totalorder %s30, 0
    %p349 = por %p347, %p348
    %s350 = ssub.s32 %s24, %s31
    %p351 = scmp.eq.s32.totalorder %s350, 0
    %s353 = sadd.s32 %s352, 1
    %s354 = scalar_select %p351, %s352, %s353
    %p357 = pneg %p351
    %p358 = scmp.eq.s32.totalorder %s24, 1
    %p359 = por %p357, %p358
    %p360 = scmp.ne.s32.totalorder %s352, %s355
    %p361 = scmp.eq.s32.totalorder %s24, 0
    %p362 = por %p360, %p361
    %p363 = scmp.ne.s32.totalorder %s352, %s355
    %p364 = scmp.eq.s32.totalorder %s29, 1
    %p365 = por %p363, %p364
    %p366 = scmp.ne.s32.totalorder %s355, %s356
    %p367 = scmp.eq.s32.totalorder %s29, 0
    %p368 = por %p366, %p367
    %p369 = scmp.ne.s32.totalorder %s355, %s356
    %p370 = scmp.eq.s32.totalorder %s30, 1
    %p371 = por %p369, %p370
    %p373 = scmp.ne.s32.totalorder %s356, %s372
    %p374 = scmp.eq.s32.totalorder %s30, 0
    %p375 = por %p373, %p374
    %s376 = ssub.s32 %s24, %s31
    %p377 = scmp.eq.s32.totalorder %s376, 0
    %s379 = sadd.s32 %s378, 1
    %s380 = scalar_select %p377, %s378, %s379
    %p383 = pneg %p377
    %p384 = scmp.eq.s32.totalorder %s24, 1
    %p385 = por %p383, %p384
    %p386 = scmp.ne.s32.totalorder %s378, %s381
    %p387 = scmp.eq.s32.totalorder %s24, 0
    %p388 = por %p386, %p387
    %p389 = scmp.ne.s32.totalorder %s378, %s381
    %p390 = scmp.eq.s32.totalorder %s29, 1
    %p391 = por %p389, %p390
    %p392 = scmp.ne.s32.totalorder %s381, %s382
    %p393 = scmp.eq.s32.totalorder %s29, 0
    %p394 = por %p392, %p393
    %p395 = scmp.ne.s32.totalorder %s381, %s382
    %p396 = scmp.eq.s32.totalorder %s30, 1
    %p397 = por %p395, %p396
    %p399 = scmp.ne.s32.totalorder %s382, %s398
    %p400 = scmp.eq.s32.totalorder %s30, 0
    %p401 = por %p399, %p400
    %s402 = ssub.s32 %s24, %s31
    %p403 = scmp.eq.s32.totalorder %s402, 0
    %s405 = sadd.s32 %s404, 1
    %s406 = scalar_select %p403, %s404, %s405
    %p409 = pneg %p403
    %p410 = scmp.eq.s32.totalorder %s24, 1
    %p411 = por %p409, %p410
    %p412 = scmp.ne.s32.totalorder %s404, %s407
    %p413 = scmp.eq.s32.totalorder %s24, 0
    %p414 = por %p412, %p413
    %p415 = scmp.ne.s32.totalorder %s404, %s407
    %p416 = scmp.eq.s32.totalorder %s29, 1
    %p417 = por %p415, %p416
    %p418 = scmp.ne.s32.totalorder %s407, %s408
    %p419 = scmp.eq.s32.totalorder %s29, 0
    %p420 = por %p418, %p419
    %p421 = scmp.ne.s32.totalorder %s407, %s408
    %p422 = scmp.eq.s32.totalorder %s30, 1
    %p423 = por %p421, %p422
    %p425 = scmp.ne.s32.totalorder %s408, %s424
    %p426 = scmp.eq.s32.totalorder %s30, 0
    %p427 = por %p425, %p426
    %s429 = sadd.s32 %s428, 1
    %p432 = scmp.eq.s32.totalorder %s24, 1
    %p433 = scmp.ne.s32.totalorder %s428, %s430
    %p434 = scmp.eq.s32.totalorder %s24, 0
    %p435 = por %p433, %p434
    %p436 = scmp.ne.s32.totalorder %s428, %s430
    %p437 = scmp.eq.s32.totalorder %s29, 1
    %p438 = por %p436, %p437
    %p439 = scmp.ne.s32.totalorder %s430, %s431
    %p440 = scmp.eq.s32.totalorder %s29, 0
    %p441 = por %p439, %p440
    %p442 = scmp.ne.s32.totalorder %s430, %s431
    %p443 = scmp.eq.s32.totalorder %s30, 1
    %p444 = por %p442, %p443
    %p446 = scmp.ne.s32.totalorder %s431, %s445
    %p447 = scmp.eq.s32.totalorder %s30, 0
    %p448 = por %p446, %p447
    %s450 = sadd.s32 %s449, 1
    %p453 = scmp.eq.s32.totalorder %s24, 1
    %p454 = scmp.ne.s32.totalorder %s449, %s451
    %p455 = scmp.eq.s32.totalorder %s24, 0
    %p456 = por %p454, %p455
    %p457 = scmp.ne.s32.totalorder %s449, %s451
    %p458 = scmp.eq.s32.totalorder %s29, 1
    %p459 = por %p457, %p458
    %p460 = scmp.ne.s32.totalorder %s451, %s452
    %p461 = scmp.eq.s32.totalorder %s29, 0
    %p462 = por %p460, %p461
    %p463 = scmp.ne.s32.totalorder %s451, %s452
    %p464 = scmp.eq.s32.totalorder %s30, 1
    %p465 = por %p463, %p464
    %p467 = scmp.ne.s32.totalorder %s452, %s466
    %p468 = scmp.eq.s32.totalorder %s30, 0
    %p469 = por %p467, %p468
    %s471 = sadd.s32 %s470, 1
    %p474 = scmp.eq.s32.totalorder %s24, 1
    %p475 = scmp.ne.s32.totalorder %s470, %s472
    %p476 = scmp.eq.s32.totalorder %s24, 0
    %p477 = por %p475, %p476
    %p478 = scmp.ne.s32.totalorder %s470, %s472
    %p479 = scmp.eq.s32.totalorder %s29, 1
    %p480 = por %p478, %p479
    %p481 = scmp.ne.s32.totalorder %s472, %s473
    %p482 = scmp.eq.s32.totalorder %s29, 0
    %p483 = por %p481, %p482
    %p484 = scmp.ne.s32.totalorder %s472, %s473
    %p485 = scmp.eq.s32.totalorder %s30, 1
    %p486 = por %p484, %p485
    %p488 = scmp.ne.s32.totalorder %s473, %s487
    %p489 = scmp.eq.s32.totalorder %s30, 0
    %p490 = por %p488, %p489
    %p491 = scmp.le.s32.totalorder 1, %s24
    %p492 = scmp.lt.s32.totalorder %s24, 3
    %p493 = pnand %p491, %p492
    %p494 = pneg %p493
    // Predicated region
    $region9: #{transformer_stock_forward.1} parent=5 // pred_check
      _
    $region10: #{transformer_stock_forward.1} parent=5 // pred_check_branch
      %496 = sbr.rel (%p493) target = $region12
    $region11: #{transformer_stock_forward.1} parent=5 // pred_region
      %s497 = ssub.s32 %s24, 1
      // Predicated region
      $region13: #{transformer_stock_forward.1} parent=11 // pred_check
        %p498 = pneg %p45
      $region14: #{transformer_stock_forward.1} parent=11 // pred_check_branch
        %500 = sbr.rel (%p498) target = $region16
      $region15: #{transformer_stock_forward.1} parent=11 // pred_region
        _
      $region16: #{transformer_stock_forward.1} parent=11 // pred_fallthru
        _
      // Predicated region
      $region17: #{transformer_stock_forward.1} parent=11 // pred_check
        %p501 = pneg %p66
      $region18: #{transformer_stock_forward.1} parent=11 // pred_check_branch
        %503 = sbr.rel (%p501) target = $region20
      $region19: #{transformer_stock_forward.1} parent=11 // pred_region
        _
      $region20: #{transformer_stock_forward.1} parent=11 // pred_fallthru
        _
      // Predicated region
      $region21: #{transformer_stock_forward.1} parent=11 // pred_check
        %p504 = pneg %p87
      $region22: #{transformer_stock_forward.1} parent=11 // pred_check_branch
        %506 = sbr.rel (%p504) target = $region24
      $region23: #{transformer_stock_forward.1} parent=11 // pred_region
        _
      $region24: #{transformer_stock_forward.1} parent=11 // pred_fallthru
        _
      // Predicated region
      $region25: #{transformer_stock_forward.1} parent=11 // pred_check
        %p507 = pneg %p108
      $region26: #{transformer_stock_forward.1} parent=11 // pred_check_branch
        %509 = sbr.rel (%p507) target = $region28
      $region27: #{transformer_stock_forward.1} parent=11 // pred_region
        _
      $region28: #{transformer_stock_forward.1} parent=11 // pred_fallthru
        _
      // Predicated region
      $region29: #{transformer_stock_forward.1} parent=11 // pred_check
        %p510 = pneg %p441
      $region30: #{transformer_stock_forward.1} parent=11 // pred_check_branch
        %512 = sbr.rel (%p510) target = $region32
      $region31: #{transformer_stock_forward.1} parent=11 // pred_region
        _
      $region32: #{transformer_stock_forward.1} parent=11 // pred_fallthru
        _
      // Predicated region
      $region33: #{transformer_stock_forward.1} parent=11 // pred_check
        %p513 = pneg %p462
      $region34: #{transformer_stock_forward.1} parent=11 // pred_check_branch
        %515 = sbr.rel (%p513) target = $region36
      $region35: #{transformer_stock_forward.1} parent=11 // pred_region
        _
      $region36: #{transformer_stock_forward.1} parent=11 // pred_fallthru
        _
    $region12: #{transformer_stock_forward.1} parent=5 // pred_fallthru
      _
    %p516 = scmp.lt.s32.totalorder %s24, 2
    // Predicated region
    $region37: #{transformer_stock_forward.1} parent=5 // pred_check
      %p517 = pneg %p516
    $region38: #{transformer_stock_forward.1} parent=5 // pred_check_branch
      %519 = sbr.rel (%p517) target = $region40
    $region39: #{transformer_stock_forward.1} parent=5 // pred_region
      // Predicated region
      $region41: #{transformer_stock_forward.1} parent=39 // pred_check
        %p520 = pneg %p128
      $region42: #{transformer_stock_forward.1} parent=39 // pred_check_branch
        %522 = sbr.rel (%p520) target = $region44
      $region43: #{transformer_stock_forward.1} parent=39 // pred_region
        %p523 = scmp.lt.s32.totalorder %s24, 1
        %s524 = scalar_select %p523, %s24, 1
        %s525 = smul.addr %s524, 4
        %s526 = smul.addr %s525, 4
        %s527 = scalar_lea.vmem %s4, %s526
      $region44: #{transformer_stock_forward.1} parent=39 // pred_fallthru
        _
      // Predicated region
      $region45: #{transformer_stock_forward.1} parent=39 // pred_check
        %p528 = pneg %p154
      $region46: #{transformer_stock_forward.1} parent=39 // pred_check_branch
        %530 = sbr.rel (%p528) target = $region48
      $region47: #{transformer_stock_forward.1} parent=39 // pred_region
        %p531 = scmp.lt.s32.totalorder %s24, 1
        %s532 = scalar_select %p531, %s24, 1
        %s533 = scalar_lea.vmem %s5, %s532
      $region48: #{transformer_stock_forward.1} parent=39 // pred_fallthru
        _
      // Predicated region
      $region49: #{transformer_stock_forward.1} parent=39 // pred_check
        %p534 = pneg %p180
      $region50: #{transformer_stock_forward.1} parent=39 // pred_check_branch
        %536 = sbr.rel (%p534) target = $region52
      $region51: #{transformer_stock_forward.1} parent=39 // pred_region
        %p537 = scmp.lt.s32.totalorder %s24, 1
        %s538 = scalar_select %p537, %s24, 1
        %s539 = smul.addr %s538, 4
        %s540 = smul.addr %s539, 4
        %s541 = scalar_lea.vmem %s6, %s540
      $region52: #{transformer_stock_forward.1} parent=39 // pred_fallthru
        _
      // Predicated region
      $region53: #{transformer_stock_forward.1} parent=39 // pred_check
        %p542 = pneg %p206
      $region54: #{transformer_stock_forward.1} parent=39 // pred_check_branch
        %544 = sbr.rel (%p542) target = $region56
      $region55: #{transformer_stock_forward.1} parent=39 // pred_region
        %p545 = scmp.lt.s32.totalorder %s24, 1
        %s546 = scalar_select %p545, %s24, 1
        %s547 = scalar_lea.vmem %s7, %s546
      $region56: #{transformer_stock_forward.1} parent=39 // pred_fallthru
        _
      // Predicated region
      $region57: #{transformer_stock_forward.1} parent=39 // pred_check
        %p548 = pneg %p232
      $region58: #{transformer_stock_forward.1} parent=39 // pred_check_branch
        %550 = sbr.rel (%p548) target = $region60
      $region59: #{transformer_stock_forward.1} parent=39 // pred_region
        %p551 = scmp.lt.s32.totalorder %s24, 1
        %s552 = scalar_select %p551, %s24, 1
        %s553 = scalar_lea.vmem %s8, %s552
      $region60: #{transformer_stock_forward.1} parent=39 // pred_fallthru
        _
      // Predicated region
      $region61: #{transformer_stock_forward.1} parent=39 // pred_check
        %p554 = pneg %p258
      $region62: #{transformer_stock_forward.1} parent=39 // pred_check_branch
        %556 = sbr.rel (%p554) target = $region64
      $region63: #{transformer_stock_forward.1} parent=39 // pred_region
        %p557 = scmp.lt.s32.totalorder %s24, 1
        %s558 = scalar_select %p557, %s24, 1
        %s559 = scalar_lea.vmem %s9, %s558
      $region64: #{transformer_stock_forward.1} parent=39 // pred_fallthru
        _
      // Predicated region
      $region65: #{transformer_stock_forward.1} parent=39 // pred_check
        %p560 = pneg %p284
      $region66: #{transformer_stock_forward.1} parent=39 // pred_check_branch
        %562 = sbr.rel (%p560) target = $region68
      $region67: #{transformer_stock_forward.1} parent=39 // pred_region
        %p563 = scmp.lt.s32.totalorder %s24, 1
        %s564 = scalar_select %p563, %s24, 1
        %s565 = smul.addr %s564, 64
        %s566 = smul.addr %s565, 4
        %s567 = scalar_lea.vmem %s10, %s566
      $region68: #{transformer_stock_forward.1} parent=39 // pred_fallthru
        _
      // Predicated region
      $region69: #{transformer_stock_forward.1} parent=39 // pred_check
        %p568 = pneg %p310
      $region70: #{transformer_stock_forward.1} parent=39 // pred_check_branch
        %570 = sbr.rel (%p568) target = $region72
      $region71: #{transformer_stock_forward.1} parent=39 // pred_region
        %p571 = scmp.lt.s32.totalorder %s24, 1
        %s572 = scalar_select %p571, %s24, 1
        %s573 = smul.addr %s572, 16
        %s574 = scalar_lea.vmem %s11, %s573
      $region72: #{transformer_stock_forward.1} parent=39 // pred_fallthru
        _
      // Predicated region
      $region73: #{transformer_stock_forward.1} parent=39 // pred_check
        %p575 = pneg %p336
      $region74: #{transformer_stock_forward.1} parent=39 // pred_check_branch
        %577 = sbr.rel (%p575) target = $region76
      $region75: #{transformer_stock_forward.1} parent=39 // pred_region
        %p578 = scmp.lt.s32.totalorder %s24, 1
        %s579 = scalar_select %p578, %s24, 1
        %s580 = smul.addr %s579, 64
        %s581 = smul.addr %s580, 4
        %s582 = scalar_lea.vmem %s12, %s581
      $region76: #{transformer_stock_forward.1} parent=39 // pred_fallthru
        _
      // Predicated region
      $region77: #{transformer_stock_forward.1} parent=39 // pred_check
        %p583 = pneg %p362
      $region78: #{transformer_stock_forward.1} parent=39 // pred_check_branch
        %585 = sbr.rel (%p583) target = $region80
      $region79: #{transformer_stock_forward.1} parent=39 // pred_region
        %p586 = scmp.lt.s32.totalorder %s24, 1
        %s587 = scalar_select %p586, %s24, 1
        %s588 = scalar_lea.vmem %s13, %s587
      $region80: #{transformer_stock_forward.1} parent=39 // pred_fallthru
        _
      // Predicated region
      $region81: #{transformer_stock_forward.1} parent=39 // pred_check
        %p589 = pneg %p388
      $region82: #{transformer_stock_forward.1} parent=39 // pred_check_branch
        %591 = sbr.rel (%p589) target = $region84
      $region83: #{transformer_stock_forward.1} parent=39 // pred_region
        %p592 = scmp.lt.s32.totalorder %s24, 1
        %s593 = scalar_select %p592, %s24, 1
        %s594 = scalar_lea.vmem %s14, %s593
      $region84: #{transformer_stock_forward.1} parent=39 // pred_fallthru
        _
      // Predicated region
      $region85: #{transformer_stock_forward.1} parent=39 // pred_check
        %p595 = pneg %p414
      $region86: #{transformer_stock_forward.1} parent=39 // pred_check_branch
        %597 = sbr.rel (%p595) target = $region88
      $region87: #{transformer_stock_forward.1} parent=39 // pred_region
        %p598 = scmp.lt.s32.totalorder %s24, 1
        %s599 = scalar_select %p598, %s24, 1
        %s600 = scalar_lea.vmem %s15, %s599
      $region88: #{transformer_stock_forward.1} parent=39 // pred_fallthru
        _
    $region40: #{transformer_stock_forward.1} parent=5 // pred_fallthru
      _
    %p601 = scmp.le.s32.totalorder 1, %s24
    %p602 = scmp.lt.s32.totalorder %s24, 3
    %p603 = pnand %p601, %p602
    %p604 = pneg %p603
    // Predicated region
    $region89: #{transformer_stock_forward.1} parent=5 // pred_check
      _
    $region90: #{transformer_stock_forward.1} parent=5 // pred_check_branch
      %606 = sbr.rel (%p603) target = $region92
    $region91: #{transformer_stock_forward.1} parent=5 // pred_region
      %s607 = ssub.s32 %s24, 1
      %p608 = pneg %p45
      %p609 = pneg %p42
      %p610 = pneg %p66
      %p611 = pneg %p63
      %p612 = pneg %p87
      %p613 = pneg %p84
      %p614 = pneg %p108
      %p615 = pneg %p105
      %p616 = scmp.lt.s32.totalorder %s29, 1
      %s617 = scalar_select %p616, %s29, 1
      %s618 = smul.addr %s617, 4
      %s619 = smul.addr %s618, 4
      %s620 = scalar_lea.vmem %s4, %s619
      %p621 = pneg %p134
      %p622 = pneg %p131
      %p623 = scmp.lt.s32.totalorder %s29, 1
      %s624 = scalar_select %p623, %s29, 1
      %s625 = scalar_lea.vmem %s5, %s624
      %p626 = pneg %p160
      %p627 = pneg %p157
      %p628 = scmp.lt.s32.totalorder %s29, 1
      %s629 = scalar_select %p628, %s29, 1
      %s630 = smul.addr %s629, 4
      %s631 = smul.addr %s630, 4
      %s632 = scalar_lea.vmem %s6, %s631
      %p633 = pneg %p186
      %p634 = pneg %p183
      %p635 = scmp.lt.s32.totalorder %s29, 1
      %s636 = scalar_select %p635, %s29, 1
      %s637 = scalar_lea.vmem %s7, %s636
      %p638 = pneg %p212
      %p639 = pneg %p209
      %p640 = scmp.lt.s32.totalorder %s29, 1
      %s641 = scalar_select %p640, %s29, 1
      %s642 = scalar_lea.vmem %s8, %s641
      %p643 = pneg %p238
      %p644 = pneg %p235
      %p645 = scmp.lt.s32.totalorder %s29, 1
      %s646 = scalar_select %p645, %s29, 1
      %s647 = scalar_lea.vmem %s9, %s646
      %p648 = pneg %p264
      %p649 = pneg %p261
      %p650 = scmp.lt.s32.totalorder %s29, 1
      %s651 = scalar_select %p650, %s29, 1
      %s652 = smul.addr %s651, 64
      %s653 = smul.addr %s652, 4
      %s654 = scalar_lea.vmem %s10, %s653
      %p655 = pneg %p290
      %p656 = pneg %p287
      %p657 = scmp.lt.s32.totalorder %s29, 1
      %s658 = scalar_select %p657, %s29, 1
      %s659 = smul.addr %s658, 16
      %s660 = scalar_lea.vmem %s11, %s659
      %p661 = pneg %p316
      %p662 = pneg %p313
      %p663 = scmp.lt.s32.totalorder %s29, 1
      %s664 = scalar_select %p663, %s29, 1
      %s665 = smul.addr %s664, 64
      %s666 = smul.addr %s665, 4
      %s667 = scalar_lea.vmem %s12, %s666
      %p668 = pneg %p342
      %p669 = pneg %p339
      %p670 = scmp.lt.s32.totalorder %s29, 1
      %s671 = scalar_select %p670, %s29, 1
      %s672 = scalar_lea.vmem %s13, %s671
      %p673 = pneg %p368
      %p674 = pneg %p365
      %p675 = scmp.lt.s32.totalorder %s29, 1
      %s676 = scalar_select %p675, %s29, 1
      %s677 = scalar_lea.vmem %s14, %s676
      %p678 = pneg %p394
      %p679 = pneg %p391
      %p680 = scmp.lt.s32.totalorder %s29, 1
      %s681 = scalar_select %p680, %s29, 1
      %s682 = scalar_lea.vmem %s15, %s681
      %p683 = pneg %p420
      %p684 = pneg %p417
      %p685 = pneg %p441
      %p686 = pneg %p438
      %p687 = pneg %p462
      %p688 = pneg %p459
      %p689 = pneg %p483
      %p690 = pneg %p480
      %p691 = scmp.lt.s32.totalorder %s29, 1
      %s692 = scalar_select %p691, %s29, 1
      %s693 = smul.addr %s692, 4
      %s694 = smul.addr %s693, 4
      %s695 = scalar_lea.vmem %s4, %s694
      %p696 = scmp.lt.s32.totalorder %s29, 1
      %s697 = scalar_select %p696, %s29, 1
      %s698 = scalar_lea.vmem %s5, %s697
      %p699 = scmp.lt.s32.totalorder %s29, 1
      %s700 = scalar_select %p699, %s29, 1
      %s701 = smul.addr %s700, 4
      %s702 = smul.addr %s701, 4
      %s703 = scalar_lea.vmem %s6, %s702
      %p704 = scmp.lt.s32.totalorder %s29, 1
      %s705 = scalar_select %p704, %s29, 1
      %s706 = scalar_lea.vmem %s7, %s705
      %p707 = scmp.lt.s32.totalorder %s29, 1
      %s708 = scalar_select %p707, %s29, 1
      %s709 = scalar_lea.vmem %s8, %s708
      %p710 = scmp.lt.s32.totalorder %s29, 1
      %s711 = scalar_select %p710, %s29, 1
      %s712 = scalar_lea.vmem %s9, %s711
      %p713 = scmp.lt.s32.totalorder %s29, 1
      %s714 = scalar_select %p713, %s29, 1
      %s715 = smul.addr %s714, 64
      %s716 = smul.addr %s715, 4
      %s717 = scalar_lea.vmem %s10, %s716
      %p718 = scmp.lt.s32.totalorder %s29, 1
      %s719 = scalar_select %p718, %s29, 1
      %s720 = smul.addr %s719, 16
      %s721 = scalar_lea.vmem %s11, %s720
      %p722 = scmp.lt.s32.totalorder %s29, 1
      %s723 = scalar_select %p722, %s29, 1
      %s724 = smul.addr %s723, 64
      %s725 = smul.addr %s724, 4
      %s726 = scalar_lea.vmem %s12, %s725
      %p727 = scmp.lt.s32.totalorder %s29, 1
      %s728 = scalar_select %p727, %s29, 1
      %s729 = scalar_lea.vmem %s13, %s728
      %p730 = scmp.lt.s32.totalorder %s29, 1
      %s731 = scalar_select %p730, %s29, 1
      %s732 = scalar_lea.vmem %s14, %s731
      %p733 = scmp.lt.s32.totalorder %s29, 1
      %s734 = scalar_select %p733, %s29, 1
      %s735 = scalar_lea.vmem %s15, %s734
      %p737 = scmp.eq.s32.totalorder %s29, 0
      // Predicated region
      $region93: #{transformer_stock_forward.1} parent=91 // pred_check
        %p738 = pneg %p737
      $region94: #{transformer_stock_forward.1} parent=91 // pred_check_branch
        %740 = sbr.rel (%p738) target = $region96
      $region95: #{transformer_stock_forward.1} parent=91 // pred_region
        %v741 = vld [vmem:[%s0] sm:$0xff]
        %v742 = vld [vmem:[%s0 + $0x8] sm:$0xff]
        %v743 = vpack.c.bf16 %v742, %v741
        %v744 = vld [vmem:[%s2] sm:$0xf]
        %v745 = vld [vmem:[%s2 + $0x4] sm:$0x3]
        %v746 = vld [vmem:[%s3] sm:$0x1]
        %v748 = vlaneseq
        %v749 = vshrl.u32 %v748, 7
        %v750 = vsub.s32 0, %v749
        %v751 = vrot.slane %v746, %v750
        %v755 = vunpack.c.l.b16 %v744
        %v756 = vunpack.c.l.b16 %v745
        %v757 = vpack.c.b16 %v756, %v755
        %vm758 = vcmask 97280
        %v760 = vsel %vm758, %v743, 0
        %vm762 = vcmask 1045504
        %v764 = vsel %vm762, %v757, 0
        %766 = vmatprep.subr.bf16.mxu0 0
        %767 = vmatpush1.bf16.msra.mxu0 %v764
        %768 = vmatprep.subr.bf16.mxu0 0
        %769 = vmatpush1.bf16.msra.mxu0 0
        %770 = vmatprep.subr.bf16.mxu0 0
        %771 = vmatpush1.bf16.msra.mxu0 0
        %772 = vmatprep.subr.bf16.mxu0 0
        %773 = vmatpush1.bf16.msra.mxu0 0
        %774 = vmatprep.subr.bf16.mxu0 0
        %775 = vmatpush1.bf16.msra.mxu0 0
        %776 = vmatprep.subr.bf16.mxu0 0
        %777 = vmatpush1.bf16.msra.mxu0 0
        %778 = vmatprep.subr.bf16.mxu0 0
        %779 = vmatpush1.bf16.msra.mxu0 0
        %780 = vmatprep.subr.bf16.mxu0 0
        %781 = vmatpush1.bf16.msra.mxu0 0
        %782 = vmatprep.subr.bf16.mxu0 0
        %783 = vmatpush1.bf16.msra.mxu0 0
        %784 = vmatprep.subr.bf16.mxu0 0
        %785 = vmatpush1.bf16.msra.mxu0 0
        %786 = vmatprep.subr.bf16.mxu0 0
        %787 = vmatpush1.bf16.msra.mxu0 0
        %788 = vmatprep.subr.bf16.mxu0 0
        %789 = vmatpush1.bf16.msra.mxu0 0
        %790 = vmatprep.subr.bf16.mxu0 0
        %791 = vmatpush1.bf16.msra.mxu0 0
        %792 = vmatprep.subr.bf16.mxu0 0
        %793 = vmatpush1.bf16.msra.mxu0 0
        %794 = vmatprep.subr.bf16.mxu0 0
        %795 = vmatpush1.bf16.msra.mxu0 0
        %796 = vmatprep.subr.bf16.mxu0 0
        %797 = vmatpush1.bf16.msra.mxu0 0
        %798 = vmatprep.mubr.bf16.mxu0 0
        %799 = vmatmul.mubr.bf16.gmra.mrb[0].mxu0 %v760
        %v800 = vpop.f32.mrb[0].mxu0
        %v801 = vadd.f32 %v751, %v800
        %v802 = vpop.f32.mrb[0].mxu0
        %v803 = vpop.f32.mrb[0].mxu0
        %v804 = vadd.f32 %v751, %v803
        %v805 = vpop.f32.mrb[0].mxu0
        %806 = vdwg.mxu0
        %v807 = vld [vmem:[%s1] sm:$0xff]
        %v808 = vld [vmem:[%s1 + $0x8] sm:$0xff]
        %v809 = vadd.f32 %v801, %v807
        %v810 = vadd.f32 %v804, %v808
        %vm811 = vcmask 261120
        %812 = vst.msk [vmem:[#allocation2] sm:$0xff] %vm811, %v809
        %813 = vst.msk [vmem:[#allocation2 + $0x8] sm:$0xff] %vm811, %v810
      $region96: #{transformer_stock_forward.1} parent=91 // pred_fallthru
        _
      %v814 = vld [vmem:[#allocation2] sm:$0xff]
      %v815 = vld [vmem:[#allocation2 + $0x8] sm:$0xff]
      %v816 = vlaneseq
      %v817 = vshrl.u32 %v816, 7
      %v818 = vadd.s32 %v817, 8
      %vm819 = vcmp.lt.s32.totalorder %v817, 0
      %v820 = vsub.s32 0, %v817
      %v821 = vsel %vm819, %v820, %v817
      %v822 = vshrl.u32 %v821, 1
      %v823 = vand.u32 %v821, 1
      %v824 = vsub.s32 0, %v823
      %v825 = vsel %vm819, %v824, %v823
      %vm826 = vcmp.lt.s32.totalorder %v818, 0
      %v827 = vsub.s32 0, %v818
      %v828 = vsel %vm826, %v827, %v818
      %v829 = vshrl.u32 %v828, 1
      %v830 = vand.u32 %v828, 1
      %v831 = vsub.s32 0, %v830
      %v832 = vsel %vm826, %v831, %v830
      %vm833 = vcmp.ne.s32.totalorder %v825, 0
      %vm834 = vcmp.ne.s32.totalorder %v832, 0
      %vm835 = vcmp.lt.s32.totalorder %v825, 0
      %vm836 = vcmp.lt.s32.totalorder %v832, 0
      %vm837 = vmand %vm835, %vm833
      %vm838 = vmand %vm836, %vm834
      %v839 = vadd.s32 %v825, 2
      %v840 = vadd.s32 %v832, 2
      %v841 = vsel %vm837, %v839, %v825
      %v842 = vsel %vm838, %v840, %v832
      %v843 = vlaneseq
      %v844 = vand.u32 %v843, 127
      %vm845 = vcmp.lt.s32.totalorder %v844, 0
      %v846 = vsub.s32 0, %v844
      %v847 = vsel %vm845, %v846, %v844
      %v848 = vshrl.u32 %v847, 1
      %v849 = vand.u32 %v847, 1
      %v850 = vsub.s32 0, %v849
      %v851 = vsel %vm845, %v850, %v849
      %vm852 = vcmp.ne.s32.totalorder %v851, 0
      %vm853 = vcmp.lt.s32.totalorder %v851, 0
      %vm854 = vmand %vm853, %vm852
      %v855 = vadd.s32 %v851, 2
      %v856 = vsel %vm854, %v855, %v851
      %vm857 = vcmp.eq.s32.totalorder %v841, %v856
      %vm858 = vcmp.eq.s32.totalorder %v842, %v856
      %v859 = vsel %vm857, 0.0, -1e+30
      %v860 = vsel %vm858, 0.0, -1e+30
      %v861 = vpack.c.bf16 %v815, %v814
      %v862 = vld [vmem:[%s695] sm:$0xf]
      %v863 = vld [vmem:[%s695 + $0x4] sm:$0xf]
      %v864 = vld [vmem:[%s695 + $0x8] sm:$0xf]
      %v865 = vld [vmem:[%s695 + $0xc] sm:$0xf]
      %v866 = vld [vmem:[%s698] sm:$0x1]
      %v868 = vlaneseq
      %v869 = vshrl.u32 %v868, 7
      %v870 = vsub.s32 0, %v869
      %v871 = vrot.slane %v866, %v870
      %v877 = vunpack.c.l.b16 %v862
      %v878 = vunpack.c.l.b16 %v863
      %v879 = vunpack.c.l.b16 %v864
      %v880 = vunpack.c.l.b16 %v865
      %v881 = vpack.c.b16 %v878, %v877
      %v882 = vpack.c.b16 %v880, %v879
      %vm885 = vcmask 261120
      %v887 = vsel %vm885, %v861, 0
      %889 = vmatprep.subr.bf16.mxu0 0
      %890 = vmatpush1.bf16.msra.mxu0 %v881
      %891 = vmatprep.subr.bf16.mxu0 0
      %892 = vmatpush1.bf16.msra.mxu0 %v882
      %893 = vmatprep.subr.bf16.mxu0 0
      %894 = vmatpush1.bf16.msra.mxu0 0
      %895 = vmatprep.subr.bf16.mxu0 0
      %896 = vmatpush1.bf16.msra.mxu0 0
      %897 = vmatprep.subr.bf16.mxu0 0
      %898 = vmatpush1.bf16.msra.mxu0 0
      %899 = vmatprep.subr.bf16.mxu0 0
      %900 = vmatpush1.bf16.msra.mxu0 0
      %901 = vmatprep.subr.bf16.mxu0 0
      %902 = vmatpush1.bf16.msra.mxu0 0
      %903 = vmatprep.subr.bf16.mxu0 0
      %904 = vmatpush1.bf16.msra.mxu0 0
      %905 = vmatprep.subr.bf16.mxu0 0
      %906 = vmatpush1.bf16.msra.mxu0 0
      %907 = vmatprep.subr.bf16.mxu0 0
      %908 = vmatpush1.bf16.msra.mxu0 0
      %909 = vmatprep.subr.bf16.mxu0 0
      %910 = vmatpush1.bf16.msra.mxu0 0
      %911 = vmatprep.subr.bf16.mxu0 0
      %912 = vmatpush1.bf16.msra.mxu0 0
      %913 = vmatprep.subr.bf16.mxu0 0
      %914 = vmatpush1.bf16.msra.mxu0 0
      %915 = vmatprep.subr.bf16.mxu0 0
      %916 = vmatpush1.bf16.msra.mxu0 0
      %917 = vmatprep.subr.bf16.mxu0 0
      %918 = vmatpush1.bf16.msra.mxu0 0
      %919 = vmatprep.subr.bf16.mxu0 0
      %920 = vmatpush1.bf16.msra.mxu0 0
      %921 = vmatprep.mubr.bf16.mxu0 0
      %922 = vmatmul.mubr.bf16.gmra.mrb[0].mxu0 %v887
      %v923 = vpop.f32.mrb[0].mxu0
      %v924 = vadd.f32 %v871, %v923
      %v925 = vpop.f32.mrb[0].mxu0
      %v926 = vpop.f32.mrb[0].mxu0
      %v927 = vadd.f32 %v871, %v926
      %v928 = vpop.f32.mrb[0].mxu0
      %929 = vdwg.mxu0
      %v930 = vpack.c.bf16 %v927, %v924
      %932 = vrot.lane.b32.xlu0 %v930, 96
      %v933 = vpop.permute.xlu0 %932
      %vm934 = vcmask 64512
      %v936 = vsel %vm934, %v930, 0
      %v939 = vsel %vm934, %v933, 0
      %941 = vmatprep.subr.bf16.mxu0 0
      %942 = vmatpush1.bf16.xpose.msra.mxu0 %v939
      %943 = vmatprep.subr.bf16.mxu0 0
      %944 = vmatpush1.bf16.xpose.msra.mxu0 0
      %945 = vmatprep.subr.bf16.mxu0 0
      %946 = vmatpush1.bf16.xpose.msra.mxu0 0
      %947 = vmatprep.subr.bf16.mxu0 0
      %948 = vmatpush1.bf16.xpose.msra.mxu0 0
      %949 = vmatprep.subr.bf16.mxu0 0
      %950 = vmatpush1.bf16.xpose.msra.mxu0 0
      %951 = vmatprep.subr.bf16.mxu0 0
      %952 = vmatpush1.bf16.xpose.msra.mxu0 0
      %953 = vmatprep.subr.bf16.mxu0 0
      %954 = vmatpush1.bf16.xpose.msra.mxu0 0
      %955 = vmatprep.subr.bf16.mxu0 0
      %956 = vmatpush1.bf16.xpose.msra.mxu0 0
      %957 = vmatprep.subr.bf16.mxu0 0
      %958 = vmatpush1.bf16.xpose.msra.mxu0 0
      %959 = vmatprep.subr.bf16.mxu0 0
      %960 = vmatpush1.bf16.xpose.msra.mxu0 0
      %961 = vmatprep.subr.bf16.mxu0 0
      %962 = vmatpush1.bf16.xpose.msra.mxu0 0
      %963 = vmatprep.subr.bf16.mxu0 0
      %964 = vmatpush1.bf16.xpose.msra.mxu0 0
      %965 = vmatprep.subr.bf16.mxu0 0
      %966 = vmatpush1.bf16.xpose.msra.mxu0 0
      %967 = vmatprep.subr.bf16.mxu0 0
      %968 = vmatpush1.bf16.xpose.msra.mxu0 0
      %969 = vmatprep.subr.bf16.mxu0 0
      %970 = vmatpush1.bf16.xpose.msra.mxu0 0
      %971 = vmatprep.subr.bf16.mxu0 0
      %972 = vmatpush1.bf16.xpose.msra.mxu0 0
      %973 = vmatprep.mubr.bf16.mxu0 0
      %974 = vmatmul.mubr.bf16.gmra.mrb[0].mxu0 %v936
      %v975 = vpop.f32.mrb[0].mxu0
      %v976 = vadd.f32 0.0, %v975
      %v977 = vpop.f32.mrb[0].mxu0
      %v978 = vpop.f32.mrb[0].mxu0
      %v979 = vadd.f32 0.0, %v978
      %v980 = vpop.f32.mrb[0].mxu0
      %981 = vdwg.mxu0
      %v982 = vmul.f32 %v976, 0.35355338
      %v983 = vmul.f32 %v979, 0.35355338
      %v984 = vadd.f32 %v982, %v859
      %v985 = vadd.f32 %v983, %v860
      %vm986 = vcmask 130048
      %v987 = vsel %vm986, %v984, -inf
      %988 = vmax.xlane.f32.xlu0 %v987
      %v989 = vpop.xlane.xlu0 %988
      %v990 = vsel %vm986, %v985, -inf
      %991 = vmax.xlane.f32.xlu0 %v990
      %v992 = vpop.xlane.xlu0 %991
      %v993 = vsub.f32 %v984, %v989
      %v994 = vsub.f32 %v985, %v992
      %v995 = vmul.f32 %v993, 1.442695
      %v996 = vpow.pop %v995
      %v997 = vmul.f32 %v994, 1.442695
      %v998 = vpow.pop %v997
      %v999 = vsel %vm986, %v996, 0.0
      %1000 = vadd.xlane.f32.xlu0 %v999
      %v1001 = vpop.xlane.xlu0 %1000
      %v1002 = vsel %vm986, %v998, 0.0
      %1003 = vadd.xlane.f32.xlu0 %v1002
      %v1004 = vpop.xlane.xlu0 %1003
      %v1005 = vrcp.pop %v1001
      %v1006 = vrcp.pop %v1004
      %v1007 = vmul.f32 %v996, %v1005
      %v1008 = vmul.f32 %v998, %v1006
      %v1009 = vpack.c.bf16 %v1008, %v1007
      %1010 = vrot.lane.b32.xlu0 %v930, 64
      %v1011 = vpop.permute.xlu0 %1010
      %v1014 = vsel %vm986, %v1009, 0
      %1016 = vmatprep.subr.bf16.mxu0 0
      %1017 = vmatpush1.bf16.msra.mxu0 %v1011
      %1018 = vmatprep.subr.bf16.mxu0 0
      %1019 = vmatpush1.bf16.msra.mxu0 0
      %1020 = vmatprep.subr.bf16.mxu0 0
      %1021 = vmatpush1.bf16.msra.mxu0 0
      %1022 = vmatprep.subr.bf16.mxu0 0
      %1023 = vmatpush1.bf16.msra.mxu0 0
      %1024 = vmatprep.subr.bf16.mxu0 0
      %1025 = vmatpush1.bf16.msra.mxu0 0
      %1026 = vmatprep.subr.bf16.mxu0 0
      %1027 = vmatpush1.bf16.msra.mxu0 0
      %1028 = vmatprep.subr.bf16.mxu0 0
      %1029 = vmatpush1.bf16.msra.mxu0 0
      %1030 = vmatprep.subr.bf16.mxu0 0
      %1031 = vmatpush1.bf16.msra.mxu0 0
      %1032 = vmatprep.subr.bf16.mxu0 0
      %1033 = vmatpush1.bf16.msra.mxu0 0
      %1034 = vmatprep.subr.bf16.mxu0 0
      %1035 = vmatpush1.bf16.msra.mxu0 0
      %1036 = vmatprep.subr.bf16.mxu0 0
      %1037 = vmatpush1.bf16.msra.mxu0 0
      %1038 = vmatprep.subr.bf16.mxu0 0
      %1039 = vmatpush1.bf16.msra.mxu0 0
      %1040 = vmatprep.subr.bf16.mxu0 0
      %1041 = vmatpush1.bf16.msra.mxu0 0
      %1042 = vmatprep.subr.bf16.mxu0 0
      %1043 = vmatpush1.bf16.msra.mxu0 0
      %1044 = vmatprep.subr.bf16.mxu0 0
      %1045 = vmatpush1.bf16.msra.mxu0 0
      %1046 = vmatprep.subr.bf16.mxu0 0
      %1047 = vmatpush1.bf16.msra.mxu0 0
      %1048 = vmatprep.mubr.bf16.mxu0 0
      %1049 = vmatmul.mubr.bf16.gmra.mrb[0].mxu0 %v1014
      %v1050 = vpop.f32.mrb[0].mxu0
      %v1051 = vadd.f32 0.0, %v1050
      %v1052 = vpop.f32.mrb[0].mxu0
      %v1053 = vpop.f32.mrb[0].mxu0
      %v1054 = vadd.f32 0.0, %v1053
      %v1055 = vpop.f32.mrb[0].mxu0
      %1056 = vdwg.mxu0
      %1057 = vrot.lane.b32.xlu0 %v930, 120
      %v1058 = vpop.permute.xlu0 %1057
      %1059 = vrot.lane.b32.xlu0 %v930, 88
      %v1060 = vpop.permute.xlu0 %1059
      %v1062 = vsel %vm934, %v1058, 0
      %v1065 = vsel %vm934, %v1060, 0
      %1067 = vmatprep.subr.bf16.mxu0 0
      %1068 = vmatpush1.bf16.xpose.msra.mxu0 %v1065
      %1069 = vmatprep.subr.bf16.mxu0 0
      %1070 = vmatpush1.bf16.xpose.msra.mxu0 0
      %1071 = vmatprep.subr.bf16.mxu0 0
      %1072 = vmatpush1.bf16.xpose.msra.mxu0 0
      %1073 = vmatprep.subr.bf16.mxu0 0
      %1074 = vmatpush1.bf16.xpose.msra.mxu0 0
      %1075 = vmatprep.subr.bf16.mxu0 0
      %1076 = vmatpush1.bf16.xpose.msra.mxu0 0
      %1077 = vmatprep.subr.bf16.mxu0 0
      %1078 = vmatpush1.bf16.xpose.msra.mxu0 0
      %1079 = vmatprep.subr.bf16.mxu0 0
      %1080 = vmatpush1.bf16.xpose.msra.mxu0 0
      %1081 = vmatprep.subr.bf16.mxu0 0
      %1082 = vmatpush1.bf16.xpose.msra.mxu0 0
      %1083 = vmatprep.subr.bf16.mxu0 0
      %1084 = vmatpush1.bf16.xpose.msra.mxu0 0
      %1085 = vmatprep.subr.bf16.mxu0 0
      %1086 = vmatpush1.bf16.xpose.msra.mxu0 0
      %1087 = vmatprep.subr.bf16.mxu0 0
      %1088 = vmatpush1.bf16.xpose.msra.mxu0 0
      %1089 = vmatprep.subr.bf16.mxu0 0
      %1090 = vmatpush1.bf16.xpose.msra.mxu0 0
      %1091 = vmatprep.subr.bf16.mxu0 0
      %1092 = vmatpush1.bf16.xpose.msra.mxu0 0
      %1093 = vmatprep.subr.bf16.mxu0 0
      %1094 = vmatpush1.bf16.xpose.msra.mxu0 0
      %1095 = vmatprep.subr.bf16.mxu0 0
      %1096 = vmatpush1.bf16.xpose.msra.mxu0 0
      %1097 = vmatprep.subr.bf16.mxu0 0
      %1098 = vmatpush1.bf16.xpose.msra.mxu0 0
      %1099 = vmatprep.mubr.bf16.mxu0 0
      %1100 = vmatmul.mubr.bf16.gmra.mrb[0].mxu0 %v1062
      %v1101 = vpop.f32.mrb[0].mxu0
      %v1102 = vadd.f32 0.0, %v1101
      %v1103 = vpop.f32.mrb[0].mxu0
      %v1104 = vpop.f32.mrb[0].mxu0
      %v1105 = vadd.f32 0.0, %v1104
      %v1106 = vpop.f32.mrb[0].mxu0
      %1107 = vdwg.mxu0
      %v1108 = vmul.f32 %v1102, 0.35355338
      %v1109 = vmul.f32 %v1105, 0.35355338
      %v1110 = vadd.f32 %v1108, %v859
      %v1111 = vadd.f32 %v1109, %v860
      %v1112 = vsel %vm986, %v1110, -inf
      %1113 = vmax.xlane.f32.xlu0 %v1112
      %v1114 = vpop.xlane.xlu0 %1113
      %v1115 = vsel %vm986, %v1111, -inf
      %1116 = vmax.xlane.f32.xlu0 %v1115
      %v1117 = vpop.xlane.xlu0 %1116
      %v1118 = vsub.f32 %v1110, %v1114
      %v1119 = vsub.f32 %v1111, %v1117
      %v1120 = vmul.f32 %v1118, 1.442695
      %v1121 = vpow.pop %v1120
      %v1122 = vmul.f32 %v1119, 1.442695
      %v1123 = vpow.pop %v1122
      %v1124 = vsel %vm986, %v1121, 0.0
      %1125 = vadd.xlane.f32.xlu0 %v1124
      %v1126 = vpop.xlane.xlu0 %1125
      %v1127 = vsel %vm986, %v1123, 0.0
      %1128 = vadd.xlane.f32.xlu0 %v1127
      %v1129 = vpop.xlane.xlu0 %1128
      %v1130 = vrcp.pop %v1126
      %v1131 = vrcp.pop %v1129
      %v1132 = vmul.f32 %v1121, %v1130
      %v1133 = vmul.f32 %v1123, %v1131
      %v1134 = vpack.c.bf16 %v1133, %v1132
      %1135 = vrot.lane.b32.xlu0 %v930, 56
      %v1136 = vpop.permute.xlu0 %1135
      %v1139 = vsel %vm986, %v1134, 0
      %1141 = vmatprep.subr.bf16.mxu0 0
      %1142 = vmatpush1.bf16.msra.mxu0 %v1136
      %1143 = vmatprep.subr.bf16.mxu0 0
      %1144 = vmatpush1.bf16.msra.mxu0 0
      %1145 = vmatprep.subr.bf16.mxu0 0
      %1146 = vmatpush1.bf16.msra.mxu0 0
      %1147 = vmatprep.subr.bf16.mxu0 0
      %1148 = vmatpush1.bf16.msra.mxu0 0
      %1149 = vmatprep.subr.bf16.mxu0 0
      %1150 = vmatpush1.bf16.msra.mxu0 0
      %1151 = vmatprep.subr.bf16.mxu0 0
      %1152 = vmatpush1.bf16.msra.mxu0 0
      %1153 = vmatprep.subr.bf16.mxu0 0
      %1154 = vmatpush1.bf16.msra.mxu0 0
      %1155 = vmatprep.subr.bf16.mxu0 0
      %1156 = vmatpush1.bf16.msra.mxu0 0
      %1157 = vmatprep.subr.bf16.mxu0 0
      %1158 = vmatpush1.bf16.msra.mxu0 0
      %1159 = vmatprep.subr.bf16.mxu0 0
      %1160 = vmatpush1.bf16.msra.mxu0 0
      %1161 = vmatprep.subr.bf16.mxu0 0
      %1162 = vmatpush1.bf16.msra.mxu0 0
      %1163 = vmatprep.subr.bf16.mxu0 0
      %1164 = vmatpush1.bf16.msra.mxu0 0
      %1165 = vmatprep.subr.bf16.mxu0 0
      %1166 = vmatpush1.bf16.msra.mxu0 0
      %1167 = vmatprep.subr.bf16.mxu0 0
      %1168 = vmatpush1.bf16.msra.mxu0 0
      %1169 = vmatprep.subr.bf16.mxu0 0
      %1170 = vmatpush1.bf16.msra.mxu0 0
      %1171 = vmatprep.subr.bf16.mxu0 0
      %1172 = vmatpush1.bf16.msra.mxu0 0
      %1173 = vmatprep.mubr.bf16.mxu0 0
      %1174 = vmatmul.mubr.bf16.gmra.mrb[0].mxu0 %v1139
      %v1175 = vpop.f32.mrb[0].mxu0
      %v1176 = vadd.f32 0.0, %v1175
      %v1177 = vpop.f32.mrb[0].mxu0
      %v1178 = vpop.f32.mrb[0].mxu0
      %v1179 = vadd.f32 0.0, %v1178
      %v1180 = vpop.f32.mrb[0].mxu0
      %1181 = vdwg.mxu0
      %1182 = vrot.lane.b32.xlu0 %v930, 112
      %v1183 = vpop.permute.xlu0 %1182
      %1184 = vrot.lane.b32.xlu0 %v930, 80
      %v1185 = vpop.permute.xlu0 %1184
      %v1187 = vsel %vm934, %v1183, 0
      %v1190 = vsel %vm934, %v1185, 0
      %1192 = vmatprep.subr.bf16.mxu0 0
      %1193 = vmatpush1.bf16.xpose.msra.mxu0 %v1190
      %1194 = vmatprep.subr.bf16.mxu0 0
      %1195 = vmatpush1.bf16.xpose.msra.mxu0 0
      %1196 = vmatprep.subr.bf16.mxu0 0
      %1197 = vmatpush1.bf16.xpose.msra.mxu0 0
      %1198 = vmatprep.subr.bf16.mxu0 0
      %1199 = vmatpush1.bf16.xpose.msra.mxu0 0
      %1200 = vmatprep.subr.bf16.mxu0 0
      %1201 = vmatpush1.bf16.xpose.msra.mxu0 0
      %1202 = vmatprep.subr.bf16.mxu0 0
      %1203 = vmatpush1.bf16.xpose.msra.mxu0 0
      %1204 = vmatprep.subr.bf16.mxu0 0
      %1205 = vmatpush1.bf16.xpose.msra.mxu0 0
      %1206 = vmatprep.subr.bf16.mxu0 0
      %1207 = vmatpush1.bf16.xpose.msra.mxu0 0
      %1208 = vmatprep.subr.bf16.mxu0 0
      %1209 = vmatpush1.bf16.xpose.msra.mxu0 0
      %1210 = vmatprep.subr.bf16.mxu0 0
      %1211 = vmatpush1.bf16.xpose.msra.mxu0 0
      %1212 = vmatprep.subr.bf16.mxu0 0
      %1213 = vmatpush1.bf16.xpose.msra.mxu0 0
      %1214 = vmatprep.subr.bf16.mxu0 0
      %1215 = vmatpush1.bf16.xpose.msra.mxu0 0
      %1216 = vmatprep.subr.bf16.mxu0 0
      %1217 = vmatpush1.bf16.xpose.msra.mxu0 0
      %1218 = vmatprep.subr.bf16.mxu0 0
      %1219 = vmatpush1.bf16.xpose.msra.mxu0 0
      %1220 = vmatprep.subr.bf16.mxu0 0
      %1221 = vmatpush1.bf16.xpose.msra.mxu0 0
      %1222 = vmatprep.subr.bf16.mxu0 0
      %1223 = vmatpush1.bf16.xpose.msra.mxu0 0
      %1224 = vmatprep.mubr.bf16.mxu0 0
      %1225 = vmatmul.mubr.bf16.gmra.mrb[0].mxu0 %v1187
      %v1226 = vpop.f32.mrb[0].mxu0
      %v1227 = vadd.f32 0.0, %v1226
      %v1228 = vpop.f32.mrb[0].mxu0
      %v1229 = vpop.f32.mrb[0].mxu0
      %v1230 = vadd.f32 0.0, %v1229
      %v1231 = vpop.f32.mrb[0].mxu0
      %1232 = vdwg.mxu0
      %v1233 = vmul.f32 %v1227, 0.35355338
      %v1234 = vmul.f32 %v1230, 0.35355338
      %v1235 = vadd.f32 %v1233, %v859
      %v1236 = vadd.f32 %v1234, %v860
      %v1237 = vsel %vm986, %v1235, -inf
      %1238 = vmax.xlane.f32.xlu0 %v1237
      %v1239 = vpop.xlane.xlu0 %1238
      %v1240 = vsel %vm986, %v1236, -inf
      %1241 = vmax.xlane.f32.xlu0 %v1240
      %v1242 = vpop.xlane.xlu0 %1241
      %v1243 = vsub.f32 %v1235, %v1239
      %v1244 = vsub.f32 %v1236, %v1242
      %v1245 = vmul.f32 %v1243, 1.442695
      %v1246 = vpow.pop %v1245
      %v1247 = vmul.f32 %v1244, 1.442695
      %v1248 = vpow.pop %v1247
      %v1249 = vsel %vm986, %v1246, 0.0
      %1250 = vadd.xlane.f32.xlu0 %v1249
      %v1251 = vpop.xlane.xlu0 %1250
      %v1252 = vsel %vm986, %v1248, 0.0
      %1253 = vadd.xlane.f32.xlu0 %v1252
      %v1254 = vpop.xlane.xlu0 %1253
      %v1255 = vrcp.pop %v1251
      %v1256 = vrcp.pop %v1254
      %v1257 = vmul.f32 %v1246, %v1255
      %v1258 = vmul.f32 %v1248, %v1256
      %v1259 = vpack.c.bf16 %v1258, %v1257
      %1260 = vrot.lane.b32.xlu0 %v930, 48
      %v1261 = vpop.permute.xlu0 %1260
      %v1264 = vsel %vm986, %v1259, 0
      %1266 = vmatprep.subr.bf16.mxu0 0
      %1267 = vmatpush1.bf16.msra.mxu0 %v1261
      %1268 = vmatprep.subr.bf16.mxu0 0
      %1269 = vmatpush1.bf16.msra.mxu0 0
      %1270 = vmatprep.subr.bf16.mxu0 0
      %1271 = vmatpush1.bf16.msra.mxu0 0
      %1272 = vmatprep.subr.bf16.mxu0 0
      %1273 = vmatpush1.bf16.msra.mxu0 0
      %1274 = vmatprep.subr.bf16.mxu0 0
      %1275 = vmatpush1.bf16.msra.mxu0 0
      %1276 = vmatprep.subr.bf16.mxu0 0
      %1277 = vmatpush1.bf16.msra.mxu0 0
      %1278 = vmatprep.subr.bf16.mxu0 0
      %1279 = vmatpush1.bf16.msra.mxu0 0
      %1280 = vmatprep.subr.bf16.mxu0 0
      %1281 = vmatpush1.bf16.msra.mxu0 0
      %1282 = vmatprep.subr.bf16.mxu0 0
      %1283 = vmatpush1.bf16.msra.mxu0 0
      %1284 = vmatprep.subr.bf16.mxu0 0
      %1285 = vmatpush1.bf16.msra.mxu0 0
      %1286 = vmatprep.subr.bf16.mxu0 0
      %1287 = vmatpush1.bf16.msra.mxu0 0
      %1288 = vmatprep.subr.bf16.mxu0 0
      %1289 = vmatpush1.bf16.msra.mxu0 0
      %1290 = vmatprep.subr.bf16.mxu0 0
      %1291 = vmatpush1.bf16.msra.mxu0 0
      %1292 = vmatprep.subr.bf16.mxu0 0
      %1293 = vmatpush1.bf16.msra.mxu0 0
      %1294 = vmatprep.subr.bf16.mxu0 0
      %1295 = vmatpush1.bf16.msra.mxu0 0
      %1296 = vmatprep.subr.bf16.mxu0 0
      %1297 = vmatpush1.bf16.msra.mxu0 0
      %1298 = vmatprep.mubr.bf16.mxu0 0
      %1299 = vmatmul.mubr.bf16.gmra.mrb[0].mxu0 %v1264
      %v1300 = vpop.f32.mrb[0].mxu0
      %v1301 = vadd.f32 0.0, %v1300
      %v1302 = vpop.f32.mrb[0].mxu0
      %v1303 = vpop.f32.mrb[0].mxu0
      %v1304 = vadd.f32 0.0, %v1303
      %v1305 = vpop.f32.mrb[0].mxu0
      %1306 = vdwg.mxu0
      %1307 = vrot.lane.b32.xlu0 %v930, 104
      %v1308 = vpop.permute.xlu0 %1307
      %1309 = vrot.lane.b32.xlu0 %v930, 72
      %v1310 = vpop.permute.xlu0 %1309
      %v1312 = vsel %vm934, %v1308, 0
      %v1315 = vsel %vm934, %v1310, 0
      %1317 = vmatprep.subr.bf16.mxu0 0
      %1318 = vmatpush1.bf16.xpose.msra.mxu0 %v1315
      %1319 = vmatprep.subr.bf16.mxu0 0
      %1320 = vmatpush1.bf16.xpose.msra.mxu0 0
      %1321 = vmatprep.subr.bf16.mxu0 0
      %1322 = vmatpush1.bf16.xpose.msra.mxu0 0
      %1323 = vmatprep.subr.bf16.mxu0 0
      %1324 = vmatpush1.bf16.xpose.msra.mxu0 0
      %1325 = vmatprep.subr.bf16.mxu0 0
      %1326 = vmatpush1.bf16.xpose.msra.mxu0 0
      %1327 = vmatprep.subr.bf16.mxu0 0
      %1328 = vmatpush1.bf16.xpose.msra.mxu0 0
      %1329 = vmatprep.subr.bf16.mxu0 0
      %1330 = vmatpush1.bf16.xpose.msra.mxu0 0
      %1331 = vmatprep.subr.bf16.mxu0 0
      %1332 = vmatpush1.bf16.xpose.msra.mxu0 0
      %1333 = vmatprep.subr.bf16.mxu0 0
      %1334 = vmatpush1.bf16.xpose.msra.mxu0 0
      %1335 = vmatprep.subr.bf16.mxu0 0
      %1336 = vmatpush1.bf16.xpose.msra.mxu0 0
      %1337 = vmatprep.subr.bf16.mxu0 0
      %1338 = vmatpush1.bf16.xpose.msra.mxu0 0
      %1339 = vmatprep.subr.bf16.mxu0 0
      %1340 = vmatpush1.bf16.xpose.msra.mxu0 0
      %1341 = vmatprep.subr.bf16.mxu0 0
      %1342 = vmatpush1.bf16.xpose.msra.mxu0 0
      %1343 = vmatprep.subr.bf16.mxu0 0
      %1344 = vmatpush1.bf16.xpose.msra.mxu0 0
      %1345 = vmatprep.subr.bf16.mxu0 0
      %1346 = vmatpush1.bf16.xpose.msra.mxu0 0
      %1347 = vmatprep.subr.bf16.mxu0 0
      %1348 = vmatpush1.bf16.xpose.msra.mxu0 0
      %1349 = vmatprep.mubr.bf16.mxu0 0
      %1350 = vmatmul.mubr.bf16.gmra.mrb[0].mxu0 %v1312
      %v1351 = vpop.f32.mrb[0].mxu0
      %v1352 = vadd.f32 0.0, %v1351
      %v1353 = vpop.f32.mrb[0].mxu0
      %v1354 = vpop.f32.mrb[0].mxu0
      %v1355 = vadd.f32 0.0, %v1354
      %v1356 = vpop.f32.mrb[0].mxu0
      %1357 = vdwg.mxu0
      %v1358 = vmul.f32 %v1352, 0.35355338
      %v1359 = vmul.f32 %v1355, 0.35355338
      %v1360 = vadd.f32 %v1358, %v859
      %v1361 = vadd.f32 %v1359, %v860
      %v1362 = vsel %vm986, %v1360, -inf
      %1363 = vmax.xlane.f32.xlu0 %v1362
      %v1364 = vpop.xlane.xlu0 %1363
      %v1365 = vsel %vm986, %v1361, -inf
      %1366 = vmax.xlane.f32.xlu0 %v1365
      %v1367 = vpop.xlane.xlu0 %1366
      %v1368 = vsub.f32 %v1360, %v1364
      %v1369 = vsub.f32 %v1361, %v1367
      %v1370 = vmul.f32 %v1368, 1.442695
      %v1371 = vpow.pop %v1370
      %v1372 = vmul.f32 %v1369, 1.442695
      %v1373 = vpow.pop %v1372
      %v1374 = vsel %vm986, %v1371, 0.0
      %1375 = vadd.xlane.f32.xlu0 %v1374
      %v1376 = vpop.xlane.xlu0 %1375
      %v1377 = vsel %vm986, %v1373, 0.0
      %1378 = vadd.xlane.f32.xlu0 %v1377
      %v1379 = vpop.xlane.xlu0 %1378
      %v1380 = vrcp.pop %v1376
      %v1381 = vrcp.pop %v1379
      %v1382 = vmul.f32 %v1371, %v1380
      %v1383 = vmul.f32 %v1373, %v1381
      %v1384 = vpack.c.bf16 %v1383, %v1382
      %1385 = vrot.lane.b32.xlu0 %v930, 40
      %v1386 = vpop.permute.xlu0 %1385
      %v1389 = vsel %vm986, %v1384, 0
      %1391 = vmatprep.subr.bf16.mxu0 0
      %1392 = vmatpush1.bf16.msra.mxu0 %v1386
      %1393 = vmatprep.subr.bf16.mxu0 0
      %1394 = vmatpush1.bf16.msra.mxu0 0
      %1395 = vmatprep.subr.bf16.mxu0 0
      %1396 = vmatpush1.bf16.msra.mxu0 0
      %1397 = vmatprep.subr.bf16.mxu0 0
      %1398 = vmatpush1.bf16.msra.mxu0 0
      %1399 = vmatprep.subr.bf16.mxu0 0
      %1400 = vmatpush1.bf16.msra.mxu0 0
      %1401 = vmatprep.subr.bf16.mxu0 0
      %1402 = vmatpush1.bf16.msra.mxu0 0
      %1403 = vmatprep.subr.bf16.mxu0 0
      %1404 = vmatpush1.bf16.msra.mxu0 0
      %1405 = vmatprep.subr.bf16.mxu0 0
      %1406 = vmatpush1.bf16.msra.mxu0 0
      %1407 = vmatprep.subr.bf16.mxu0 0
      %1408 = vmatpush1.bf16.msra.mxu0 0
      %1409 = vmatprep.subr.bf16.mxu0 0
      %1410 = vmatpush1.bf16.msra.mxu0 0
      %1411 = vmatprep.subr.bf16.mxu0 0
      %1412 = vmatpush1.bf16.msra.mxu0 0
      %1413 = vmatprep.subr.bf16.mxu0 0
      %1414 = vmatpush1.bf16.msra.mxu0 0
      %1415 = vmatprep.subr.bf16.mxu0 0
      %1416 = vmatpush1.bf16.msra.mxu0 0
      %1417 = vmatprep.subr.bf16.mxu0 0
      %1418 = vmatpush1.bf16.msra.mxu0 0
      %1419 = vmatprep.subr.bf16.mxu0 0
      %1420 = vmatpush1.bf16.msra.mxu0 0
      %1421 = vmatprep.subr.bf16.mxu0 0
      %1422 = vmatpush1.bf16.msra.mxu0 0
      %1423 = vmatprep.mubr.bf16.mxu0 0
      %1424 = vmatmul.mubr.bf16.gmra.mrb[0].mxu0 %v1389
      %v1425 = vpop.f32.mrb[0].mxu0
      %v1426 = vadd.f32 0.0, %v1425
      %v1427 = vpop.f32.mrb[0].mxu0
      %v1428 = vpop.f32.mrb[0].mxu0
      %v1429 = vadd.f32 0.0, %v1428
      %v1430 = vpop.f32.mrb[0].mxu0
      %1431 = vdwg.mxu0
      %1434 = vrot.lane.b32.xlu0 %v1176, 8
      %v1435 = vpop.permute.xlu0 %1434
      %1436 = vrot.lane.b32.xlu0 %v1179, 8
      %v1437 = vpop.permute.xlu0 %1436
      %1442 = vrot.lane.b32.xlu0 %v1301, 16
      %v1443 = vpop.permute.xlu0 %1442
      %1444 = vrot.lane.b32.xlu0 %v1304, 16
      %v1445 = vpop.permute.xlu0 %1444
      %1450 = vrot.lane.b32.xlu0 %v1426, 24
      %v1451 = vpop.permute.xlu0 %1450
      %1452 = vrot.lane.b32.xlu0 %v1429, 24
      %v1453 = vpop.permute.xlu0 %1452
      %v1456 = vsel %vm934, %v1051, %v1435
      %v1457 = vsel %vm934, %v1054, %v1437
      %v1458 = vsel %vm986, %v1456, %v1443
      %v1459 = vsel %vm986, %v1457, %v1445
      %vm1460 = vcmask 195584
      %v1461 = vsel %vm1460, %v1458, %v1451
      %v1462 = vsel %vm1460, %v1459, %v1453
      %v1463 = vpack.c.bf16 %v1462, %v1461
      %v1464 = vld [vmem:[%s703] sm:$0xf]
      %v1465 = vld [vmem:[%s703 + $0x4] sm:$0xf]
      %v1466 = vld [vmem:[%s703 + $0x8] sm:$0xf]
      %v1467 = vld [vmem:[%s703 + $0xc] sm:$0xf]
      %v1468 = vld [vmem:[%s706] sm:$0x1]
      %v1470 = vlaneseq
      %v1471 = vshrl.u32 %v1470, 7
      %v1472 = vsub.s32 0, %v1471
      %v1473 = vrot.slane %v1468, %v1472
      %v1479 = vunpack.c.l.b16 %v1464
      %v1480 = vunpack.c.l.b16 %v1465
      %v1481 = vunpack.c.l.b16 %v1466
      %v1482 = vunpack.c.l.b16 %v1467
      %v1483 = vpack.c.b16 %v1480, %v1479
      %v1484 = vpack.c.b16 %v1482, %v1481
      %v1488 = vsel %vm885, %v1463, 0
      %1490 = vmatprep.subr.bf16.mxu0 0
      %1491 = vmatpush1.bf16.msra.mxu0 %v1483
      %1492 = vmatprep.subr.bf16.mxu0 0
      %1493 = vmatpush1.bf16.msra.mxu0 %v1484
      %1494 = vmatprep.subr.bf16.mxu0 0
      %1495 = vmatpush1.bf16.msra.mxu0 0
      %1496 = vmatprep.subr.bf16.mxu0 0
      %1497 = vmatpush1.bf16.msra.mxu0 0
      %1498 = vmatprep.subr.bf16.mxu0 0
      %1499 = vmatpush1.bf16.msra.mxu0 0
      %1500 = vmatprep.subr.bf16.mxu0 0
      %1501 = vmatpush1.bf16.msra.mxu0 0
      %1502 = vmatprep.subr.bf16.mxu0 0
      %1503 = vmatpush1.bf16.msra.mxu0 0
      %1504 = vmatprep.subr.bf16.mxu0 0
      %1505 = vmatpush1.bf16.msra.mxu0 0
      %1506 = vmatprep.subr.bf16.mxu0 0
      %1507 = vmatpush1.bf16.msra.mxu0 0
      %1508 = vmatprep.subr.bf16.mxu0 0
      %1509 = vmatpush1.bf16.msra.mxu0 0
      %1510 = vmatprep.subr.bf16.mxu0 0
      %1511 = vmatpush1.bf16.msra.mxu0 0
      %1512 = vmatprep.subr.bf16.mxu0 0
      %1513 = vmatpush1.bf16.msra.mxu0 0
      %1514 = vmatprep.subr.bf16.mxu0 0
      %1515 = vmatpush1.bf16.msra.mxu0 0
      %1516 = vmatprep.subr.bf16.mxu0 0
      %1517 = vmatpush1.bf16.msra.mxu0 0
      %1518 = vmatprep.subr.bf16.mxu0 0
      %1519 = vmatpush1.bf16.msra.mxu0 0
      %1520 = vmatprep.subr.bf16.mxu0 0
      %1521 = vmatpush1.bf16.msra.mxu0 0
      %1522 = vmatprep.mubr.bf16.mxu0 0
      %1523 = vmatmul.mubr.bf16.gmra.mrb[0].mxu0 %v1488
      %v1524 = vpop.f32.mrb[0].mxu0
      %v1525 = vadd.f32 %v1473, %v1524
      %v1526 = vpop.f32.mrb[0].mxu0
      %v1527 = vpop.f32.mrb[0].mxu0
      %v1528 = vadd.f32 %v1473, %v1527
      %v1529 = vpop.f32.mrb[0].mxu0
      %1530 = vdwg.mxu0
      %v1531 = vld [vmem:[%s709] sm:$0x1]
      %v1532 = vld [vmem:[%s712] sm:$0x1]
      %v1533 = vadd.f32 %v814, %v1525
      %v1534 = vadd.f32 %v815, %v1528
      %v1535 = vsel %vm885, %v1533, 0.0
      %1536 = vadd.xlane.f32.xlu0 %v1535
      %v1537 = vpop.xlane.xlu0 %1536
      %v1538 = vsel %vm885, %v1534, 0.0
      %1539 = vadd.xlane.f32.xlu0 %v1538
      %v1540 = vpop.xlane.xlu0 %1539
      %v1541 = vrcp.pop 32.0
      %v1542 = vmul.f32 %v1537, %v1541
      %v1543 = vmul.f32 %v1540, %v1541
      %v1544 = vsub.f32 %v1533, %v1542
      %v1545 = vsub.f32 %v1534, %v1543
      %v1546 = vmul.f32 %v1544, %v1544
      %v1547 = vmul.f32 %v1545, %v1545
      %v1548 = vsel %vm885, %v1546, 0.0
      %1549 = vadd.xlane.f32.xlu0 %v1548
      %v1550 = vpop.xlane.xlu0 %1549
      %v1551 = vsel %vm885, %v1547, 0.0
      %1552 = vadd.xlane.f32.xlu0 %v1551
      %v1553 = vpop.xlane.xlu0 %1552
      %v1554 = vmul.f32 %v1550, %v1541
      %v1555 = vmul.f32 %v1553, %v1541
      %v1556 = vadd.f32 %v1554, 1e-05
      %v1557 = vadd.f32 %v1555, 1e-05
      %v1558 = vrsqrt.pop %v1556
      %v1559 = vrsqrt.pop %v1557
      %v1560 = vmul.f32 %v1544, %v1558
      %v1561 = vmul.f32 %v1545, %v1559
      %v1563 = vlaneseq
      %v1564 = vshrl.u32 %v1563, 7
      %v1565 = vsub.s32 0, %v1564
      %v1566 = vrot.slane %v1531, %v1565
      %v1568 = vmul.f32 %v1560, %v1566
      %v1569 = vmul.f32 %v1561, %v1566
      %v1571 = vlaneseq
      %v1572 = vshrl.u32 %v1571, 7
      %v1573 = vsub.s32 0, %v1572
      %v1574 = vrot.slane %v1532, %v1573
      %v1576 = vadd.f32 %v1568, %v1574
      %v1577 = vadd.f32 %v1569, %v1574
      %v1578 = vpack.c.bf16 %v1577, %v1576
      %v1579 = vld [vmem:[%s717] sm:$0xff]
      %v1580 = vld [vmem:[%s717 + $0x8] sm:$0xff]
      %v1581 = vld [vmem:[%s717 + $0x10] sm:$0xff]
      %v1582 = vld [vmem:[%s717 + $0x18] sm:$0xff]
      %v1583 = vld [vmem:[%s717 + $0x20] sm:$0xff]
      %v1584 = vld [vmem:[%s717 + $0x28] sm:$0xff]
      %v1585 = vld [vmem:[%s717 + $0x30] sm:$0xff]
      %v1586 = vld [vmem:[%s717 + $0x38] sm:$0xff]
      %v1587 = vld [vmem:[%s717 + $0x40] sm:$0xff]
      %v1588 = vld [vmem:[%s717 + $0x48] sm:$0xff]
      %v1589 = vld [vmem:[%s717 + $0x50] sm:$0xff]
      %v1590 = vld [vmem:[%s717 + $0x58] sm:$0xff]
      %v1591 = vld [vmem:[%s717 + $0x60] sm:$0xff]
      %v1592 = vld [vmem:[%s717 + $0x68] sm:$0xff]
      %v1593 = vld [vmem:[%s717 + $0x70] sm:$0xff]
      %v1594 = vld [vmem:[%s717 + $0x78] sm:$0xff]
      %v1595 = vld [vmem:[%s717 + $0x80] sm:$0xff]
      %v1596 = vld [vmem:[%s717 + $0x88] sm:$0xff]
      %v1597 = vld [vmem:[%s717 + $0x90] sm:$0xff]
      %v1598 = vld [vmem:[%s717 + $0x98] sm:$0xff]
      %v1599 = vld [vmem:[%s717 + $0xa0] sm:$0xff]
      %v1600 = vld [vmem:[%s717 + $0xa8] sm:$0xff]
      %v1601 = vld [vmem:[%s717 + $0xb0] sm:$0xff]
      %v1602 = vld [vmem:[%s717 + $0xb8] sm:$0xff]
      %v1603 = vld [vmem:[%s717 + $0xc0] sm:$0xff]
      %v1604 = vld [vmem:[%s717 + $0xc8] sm:$0xff]
      %v1605 = vld [vmem:[%s717 + $0xd0] sm:$0xff]
      %v1606 = vld [vmem:[%s717 + $0xd8] sm:$0xff]
      %v1607 = vld [vmem:[%s717 + $0xe0] sm:$0xff]
      %v1608 = vld [vmem:[%s717 + $0xe8] sm:$0xff]
      %v1609 = vld [vmem:[%s717 + $0xf0] sm:$0xff]
      %v1610 = vld [vmem:[%s717 + $0xf8] sm:$0xff]
      %v1611 = vld [vmem:[%s721] sm:$0xff]
      %v1612 = vld [vmem:[%s721 + $0x8] sm:$0xff]
      %v1615 = vlaneseq
      %v1616 = vshrl.u32 %v1615, 7
      %v1617 = vsub.s32 0, %v1616
      %v1618 = vrot.slane %v1611, %v1617
      %v1619 = vlaneseq
      %v1620 = vshrl.u32 %v1619, 7
      %v1621 = vsub.s32 1, %v1620
      %v1622 = vrot.slane %v1611, %v1621
      %v1623 = vlaneseq
      %v1624 = vshrl.u32 %v1623, 7
      %v1625 = vsub.s32 2, %v1624
      %v1626 = vrot.slane %v1611, %v1625
      %v1627 = vlaneseq
      %v1628 = vshrl.u32 %v1627, 7
      %v1629 = vsub.s32 3, %v1628
      %v1630 = vrot.slane %v1611, %v1629
      %v1631 = vlaneseq
      %v1632 = vshrl.u32 %v1631, 7
      %v1633 = vsub.s32 4, %v1632
      %v1634 = vrot.slane %v1611, %v1633
      %v1635 = vlaneseq
      %v1636 = vshrl.u32 %v1635, 7
      %v1637 = vsub.s32 5, %v1636
      %v1638 = vrot.slane %v1611, %v1637
      %v1639 = vlaneseq
      %v1640 = vshrl.u32 %v1639, 7
      %v1641 = vsub.s32 6, %v1640
      %v1642 = vrot.slane %v1611, %v1641
      %v1643 = vlaneseq
      %v1644 = vshrl.u32 %v1643, 7
      %v1645 = vsub.s32 7, %v1644
      %v1646 = vrot.slane %v1611, %v1645
      %v1647 = vlaneseq
      %v1648 = vshrl.u32 %v1647, 7
      %v1649 = vsub.s32 0, %v1648
      %v1650 = vrot.slane %v1612, %v1649
      %v1651 = vlaneseq
      %v1652 = vshrl.u32 %v1651, 7
      %v1653 = vsub.s32 1, %v1652
      %v1654 = vrot.slane %v1612, %v1653
      %v1655 = vlaneseq
      %v1656 = vshrl.u32 %v1655, 7
      %v1657 = vsub.s32 2, %v1656
      %v1658 = vrot.slane %v1612, %v1657
      %v1659 = vlaneseq
      %v1660 = vshrl.u32 %v1659, 7
      %v1661 = vsub.s32 3, %v1660
      %v1662 = vrot.slane %v1612, %v1661
      %v1663 = vlaneseq
      %v1664 = vshrl.u32 %v1663, 7
      %v1665 = vsub.s32 4, %v1664
      %v1666 = vrot.slane %v1612, %v1665
      %v1667 = vlaneseq
      %v1668 = vshrl.u32 %v1667, 7
      %v1669 = vsub.s32 5, %v1668
      %v1670 = vrot.slane %v1612, %v1669
      %v1671 = vlaneseq
      %v1672 = vshrl.u32 %v1671, 7
      %v1673 = vsub.s32 6, %v1672
      %v1674 = vrot.slane %v1612, %v1673
      %v1675 = vlaneseq
      %v1676 = vshrl.u32 %v1675, 7
      %v1677 = vsub.s32 7, %v1676
      %v1678 = vrot.slane %v1612, %v1677
      %v1727 = vunpack.c.l.b16 %v1579
      %v1728 = vunpack.c.h.b16 %v1579
      %v1729 = vunpack.c.l.b16 %v1580
      %v1730 = vunpack.c.h.b16 %v1580
      %v1731 = vunpack.c.l.b16 %v1581
      %v1732 = vunpack.c.h.b16 %v1581
      %v1733 = vunpack.c.l.b16 %v1582
      %v1734 = vunpack.c.h.b16 %v1582
      %v1735 = vunpack.c.l.b16 %v1583
      %v1736 = vunpack.c.h.b16 %v1583
      %v1737 = vunpack.c.l.b16 %v1584
      %v1738 = vunpack.c.h.b16 %v1584
      %v1739 = vunpack.c.l.b16 %v1585
      %v1740 = vunpack.c.h.b16 %v1585
      %v1741 = vunpack.c.l.b16 %v1586
      %v1742 = vunpack.c.h.b16 %v1586
      %v1743 = vunpack.c.l.b16 %v1587
      %v1744 = vunpack.c.h.b16 %v1587
      %v1745 = vunpack.c.l.b16 %v1588
      %v1746 = vunpack.c.h.b16 %v1588
      %v1747 = vunpack.c.l.b16 %v1589
      %v1748 = vunpack.c.h.b16 %v1589
      %v1749 = vunpack.c.l.b16 %v1590
      %v1750 = vunpack.c.h.b16 %v1590
      %v1751 = vunpack.c.l.b16 %v1591
      %v1752 = vunpack.c.h.b16 %v1591
      %v1753 = vunpack.c.l.b16 %v1592
      %v1754 = vunpack.c.h.b16 %v1592
      %v1755 = vunpack.c.l.b16 %v1593
      %v1756 = vunpack.c.h.b16 %v1593
      %v1757 = vunpack.c.l.b16 %v1594
      %v1758 = vunpack.c.h.b16 %v1594
      %v1759 = vunpack.c.l.b16 %v1595
      %v1760 = vunpack.c.h.b16 %v1595
      %v1761 = vunpack.c.l.b16 %v1596
      %v1762 = vunpack.c.h.b16 %v1596
      %v1763 = vunpack.c.l.b16 %v1597
      %v1764 = vunpack.c.h.b16 %v1597
      %v1765 = vunpack.c.l.b16 %v1598
      %v1766 = vunpack.c.h.b16 %v1598
      %v1767 = vunpack.c.l.b16 %v1599
      %v1768 = vunpack.c.h.b16 %v1599
      %v1769 = vunpack.c.l.b16 %v1600
      %v1770 = vunpack.c.h.b16 %v1600
      %v1771 = vunpack.c.l.b16 %v1601
      %v1772 = vunpack.c.h.b16 %v1601
      %v1773 = vunpack.c.l.b16 %v1602
      %v1774 = vunpack.c.h.b16 %v1602
      %v1775 = vunpack.c.l.b16 %v1603
      %v1776 = vunpack.c.h.b16 %v1603
      %v1777 = vunpack.c.l.b16 %v1604
      %v1778 = vunpack.c.h.b16 %v1604
      %v1779 = vunpack.c.l.b16 %v1605
      %v1780 = vunpack.c.h.b16 %v1605
      %v1781 = vunpack.c.l.b16 %v1606
      %v1782 = vunpack.c.h.b16 %v1606
      %v1783 = vunpack.c.l.b16 %v1607
      %v1784 = vunpack.c.h.b16 %v1607
      %v1785 = vunpack.c.l.b16 %v1608
      %v1786 = vunpack.c.h.b16 %v1608
      %v1787 = vunpack.c.l.b16 %v1609
      %v1788 = vunpack.c.h.b16 %v1609
      %v1789 = vunpack.c.l.b16 %v1610
      %v1790 = vunpack.c.h.b16 %v1610
      %v1791 = vpack.c.b16 %v1743, %v1727
      %v1792 = vpack.c.b16 %v1744, %v1728
      %v1793 = vpack.c.b16 %v1745, %v1729
      %v1794 = vpack.c.b16 %v1746, %v1730
      %v1795 = vpack.c.b16 %v1747, %v1731
      %v1796 = vpack.c.b16 %v1748, %v1732
      %v1797 = vpack.c.b16 %v1749, %v1733
      %v1798 = vpack.c.b16 %v1750, %v1734
      %v1799 = vpack.c.b16 %v1751, %v1735
      %v1800 = vpack.c.b16 %v1752, %v1736
      %v1801 = vpack.c.b16 %v1753, %v1737
      %v1802 = vpack.c.b16 %v1754, %v1738
      %v1803 = vpack.c.b16 %v1755, %v1739
      %v1804 = vpack.c.b16 %v1756, %v1740
      %v1805 = vpack.c.b16 %v1757, %v1741
      %v1806 = vpack.c.b16 %v1758, %v1742
      %v1807 = vpack.c.b16 %v1775, %v1759
      %v1808 = vpack.c.b16 %v1776, %v1760
      %v1809 = vpack.c.b16 %v1777, %v1761
      %v1810 = vpack.c.b16 %v1778, %v1762
      %v1811 = vpack.c.b16 %v1779, %v1763
      %v1812 = vpack.c.b16 %v1780, %v1764
      %v1813 = vpack.c.b16 %v1781, %v1765
      %v1814 = vpack.c.b16 %v1782, %v1766
      %v1815 = vpack.c.b16 %v1783, %v1767
      %v1816 = vpack.c.b16 %v1784, %v1768
      %v1817 = vpack.c.b16 %v1785, %v1769
      %v1818 = vpack.c.b16 %v1786, %v1770
      %v1819 = vpack.c.b16 %v1787, %v1771
      %v1820 = vpack.c.b16 %v1788, %v1772
      %v1821 = vpack.c.b16 %v1789, %v1773
      %v1822 = vpack.c.b16 %v1790, %v1774
      %v1856 = vsel %vm885, %v1578, 0
      %1858 = vmatprep.subr.bf16.mxu0 %v1792
      %1859 = vmatpush1.bf16.msra.mxu0 %v1791
      %1860 = vmatprep.subr.bf16.mxu0 %v1808
      %1861 = vmatpush1.bf16.msra.mxu0 %v1807
      %1862 = vmatprep.subr.bf16.mxu0 0
      %1863 = vmatpush1.bf16.msra.mxu0 0
      %1864 = vmatprep.subr.bf16.mxu0 0
      %1865 = vmatpush1.bf16.msra.mxu0 0
      %1866 = vmatprep.subr.bf16.mxu0 0
      %1867 = vmatpush1.bf16.msra.mxu0 0
      %1868 = vmatprep.subr.bf16.mxu0 0
      %1869 = vmatpush1.bf16.msra.mxu0 0
      %1870 = vmatprep.subr.bf16.mxu0 0
      %1871 = vmatpush1.bf16.msra.mxu0 0
      %1872 = vmatprep.subr.bf16.mxu0 0
      %1873 = vmatpush1.bf16.msra.mxu0 0
      %1874 = vmatprep.subr.bf16.mxu0 0
      %1875 = vmatpush1.bf16.msra.mxu0 0
      %1876 = vmatprep.subr.bf16.mxu0 0
      %1877 = vmatpush1.bf16.msra.mxu0 0
      %1878 = vmatprep.subr.bf16.mxu0 0
      %1879 = vmatpush1.bf16.msra.mxu0 0
      %1880 = vmatprep.subr.bf16.mxu0 0
      %1881 = vmatpush1.bf16.msra.mxu0 0
      %1882 = vmatprep.subr.bf16.mxu0 0
      %1883 = vmatpush1.bf16.msra.mxu0 0
      %1884 = vmatprep.subr.bf16.mxu0 0
      %1885 = vmatpush1.bf16.msra.mxu0 0
      %1886 = vmatprep.subr.bf16.mxu0 0
      %1887 = vmatpush1.bf16.msra.mxu0 0
      %1888 = vmatprep.subr.bf16.mxu0 0
      %1889 = vmatpush1.bf16.msra.mxu0 0
      %1890 = vmatprep.mubr.bf16.mxu0 0
      %1891 = vmatmul.mubr.bf16.gmra.mrb[0].mxu0 %v1856
      %v1892 = vpop.f32.mrb[0].mxu0
      %v1893 = vadd.f32 %v1618, %v1892
      %v1894 = vpop.f32.mrb[0].mxu0
      %v1895 = vadd.f32 %v1622, %v1894
      %v1896 = vpop.f32.mrb[0].mxu0
      %v1897 = vadd.f32 %v1618, %v1896
      %v1898 = vpop.f32.mrb[0].mxu0
      %v1899 = vadd.f32 %v1622, %v1898
      %1900 = vdwg.mxu0
      %1901 = vmatprep.subr.bf16.mxu0 %v1794
      %1902 = vmatpush1.bf16.msra.mxu0 %v1793
      %1903 = vmatprep.subr.bf16.mxu0 %v1810
      %1904 = vmatpush1.bf16.msra.mxu0 %v1809
      %1905 = vmatprep.subr.bf16.mxu0 0
      %1906 = vmatpush1.bf16.msra.mxu0 0
      %1907 = vmatprep.subr.bf16.mxu0 0
      %1908 = vmatpush1.bf16.msra.mxu0 0
      %1909 = vmatprep.subr.bf16.mxu0 0
      %1910 = vmatpush1.bf16.msra.mxu0 0
      %1911 = vmatprep.subr.bf16.mxu0 0
      %1912 = vmatpush1.bf16.msra.mxu0 0
      %1913 = vmatprep.subr.bf16.mxu0 0
      %1914 = vmatpush1.bf16.msra.mxu0 0
      %1915 = vmatprep.subr.bf16.mxu0 0
      %1916 = vmatpush1.bf16.msra.mxu0 0
      %1917 = vmatprep.subr.bf16.mxu0 0
      %1918 = vmatpush1.bf16.msra.mxu0 0
      %1919 = vmatprep.subr.bf16.mxu0 0
      %1920 = vmatpush1.bf16.msra.mxu0 0
      %1921 = vmatprep.subr.bf16.mxu0 0
      %1922 = vmatpush1.bf16.msra.mxu0 0
      %1923 = vmatprep.subr.bf16.mxu0 0
      %1924 = vmatpush1.bf16.msra.mxu0 0
      %1925 = vmatprep.subr.bf16.mxu0 0
      %1926 = vmatpush1.bf16.msra.mxu0 0
      %1927 = vmatprep.subr.bf16.mxu0 0
      %1928 = vmatpush1.bf16.msra.mxu0 0
      %1929 = vmatprep.subr.bf16.mxu0 0
      %1930 = vmatpush1.bf16.msra.mxu0 0
      %1931 = vmatprep.subr.bf16.mxu0 0
      %1932 = vmatpush1.bf16.msra.mxu0 0
      %1933 = vmatprep.mubr.bf16.mxu0 0
      %1934 = vmatmul.mubr.bf16.gmra.mrb[0].mxu0 %v1856
      %v1935 = vpop.f32.mrb[0].mxu0
      %v1936 = vadd.f32 %v1626, %v1935
      %v1937 = vpop.f32.mrb[0].mxu0
      %v1938 = vadd.f32 %v1630, %v1937
      %v1939 = vpop.f32.mrb[0].mxu0
      %v1940 = vadd.f32 %v1626, %v1939
      %v1941 = vpop.f32.mrb[0].mxu0
      %v1942 = vadd.f32 %v1630, %v1941
      %1943 = vdwg.mxu0
      %1944 = vmatprep.subr.bf16.mxu0 %v1796
      %1945 = vmatpush1.bf16.msra.mxu0 %v1795
      %1946 = vmatprep.subr.bf16.mxu0 %v1812
      %1947 = vmatpush1.bf16.msra.mxu0 %v1811
      %1948 = vmatprep.subr.bf16.mxu0 0
      %1949 = vmatpush1.bf16.msra.mxu0 0
      %1950 = vmatprep.subr.bf16.mxu0 0
      %1951 = vmatpush1.bf16.msra.mxu0 0
      %1952 = vmatprep.subr.bf16.mxu0 0
      %1953 = vmatpush1.bf16.msra.mxu0 0
      %1954 = vmatprep.subr.bf16.mxu0 0
      %1955 = vmatpush1.bf16.msra.mxu0 0
      %1956 = vmatprep.subr.bf16.mxu0 0
      %1957 = vmatpush1.bf16.msra.mxu0 0
      %1958 = vmatprep.subr.bf16.mxu0 0
      %1959 = vmatpush1.bf16.msra.mxu0 0
      %1960 = vmatprep.subr.bf16.mxu0 0
      %1961 = vmatpush1.bf16.msra.mxu0 0
      %1962 = vmatprep.subr.bf16.mxu0 0
      %1963 = vmatpush1.bf16.msra.mxu0 0
      %1964 = vmatprep.subr.bf16.mxu0 0
      %1965 = vmatpush1.bf16.msra.mxu0 0
      %1966 = vmatprep.subr.bf16.mxu0 0
      %1967 = vmatpush1.bf16.msra.mxu0 0
      %1968 = vmatprep.subr.bf16.mxu0 0
      %1969 = vmatpush1.bf16.msra.mxu0 0
      %1970 = vmatprep.subr.bf16.mxu0 0
      %1971 = vmatpush1.bf16.msra.mxu0 0
      %1972 = vmatprep.subr.bf16.mxu0 0
      %1973 = vmatpush1.bf16.msra.mxu0 0
      %1974 = vmatprep.subr.bf16.mxu0 0
      %1975 = vmatpush1.bf16.msra.mxu0 0
      %1976 = vmatprep.mubr.bf16.mxu0 0
      %1977 = vmatmul.mubr.bf16.gmra.mrb[0].mxu0 %v1856
      %v1978 = vpop.f32.mrb[0].mxu0
      %v1979 = vadd.f32 %v1634, %v1978
      %v1980 = vpop.f32.mrb[0].mxu0
      %v1981 = vadd.f32 %v1638, %v1980
      %v1982 = vpop.f32.mrb[0].mxu0
      %v1983 = vadd.f32 %v1634, %v1982
      %v1984 = vpop.f32.mrb[0].mxu0
      %v1985 = vadd.f32 %v1638, %v1984
      %1986 = vdwg.mxu0
      %1987 = vmatprep.subr.bf16.mxu0 %v1798
      %1988 = vmatpush1.bf16.msra.mxu0 %v1797
      %1989 = vmatprep.subr.bf16.mxu0 %v1814
      %1990 = vmatpush1.bf16.msra.mxu0 %v1813
      %1991 = vmatprep.subr.bf16.mxu0 0
      %1992 = vmatpush1.bf16.msra.mxu0 0
      %1993 = vmatprep.subr.bf16.mxu0 0
      %1994 = vmatpush1.bf16.msra.mxu0 0
      %1995 = vmatprep.subr.bf16.mxu0 0
      %1996 = vmatpush1.bf16.msra.mxu0 0
      %1997 = vmatprep.subr.bf16.mxu0 0
      %1998 = vmatpush1.bf16.msra.mxu0 0
      %1999 = vmatprep.subr.bf16.mxu0 0
      %2000 = vmatpush1.bf16.msra.mxu0 0
      %2001 = vmatprep.subr.bf16.mxu0 0
      %2002 = vmatpush1.bf16.msra.mxu0 0
      %2003 = vmatprep.subr.bf16.mxu0 0
      %2004 = vmatpush1.bf16.msra.mxu0 0
      %2005 = vmatprep.subr.bf16.mxu0 0
      %2006 = vmatpush1.bf16.msra.mxu0 0
      %2007 = vmatprep.subr.bf16.mxu0 0
      %2008 = vmatpush1.bf16.msra.mxu0 0
      %2009 = vmatprep.subr.bf16.mxu0 0
      %2010 = vmatpush1.bf16.msra.mxu0 0
      %2011 = vmatprep.subr.bf16.mxu0 0
      %2012 = vmatpush1.bf16.msra.mxu0 0
      %2013 = vmatprep.subr.bf16.mxu0 0
      %2014 = vmatpush1.bf16.msra.mxu0 0
      %2015 = vmatprep.subr.bf16.mxu0 0
      %2016 = vmatpush1.bf16.msra.mxu0 0
      %2017 = vmatprep.subr.bf16.mxu0 0
      %2018 = vmatpush1.bf16.msra.mxu0 0
      %2019 = vmatprep.mubr.bf16.mxu0 0
      %2020 = vmatmul.mubr.bf16.gmra.mrb[0].mxu0 %v1856
      %v2021 = vpop.f32.mrb[0].mxu0
      %v2022 = vadd.f32 %v1642, %v2021
      %v2023 = vpop.f32.mrb[0].mxu0
      %v2024 = vadd.f32 %v1646, %v2023
      %v2025 = vpop.f32.mrb[0].mxu0
      %v2026 = vadd.f32 %v1642, %v2025
      %v2027 = vpop.f32.mrb[0].mxu0
      %v2028 = vadd.f32 %v1646, %v2027
      %2029 = vdwg.mxu0
      %2030 = vmatprep.subr.bf16.mxu0 %v1800
      %2031 = vmatpush1.bf16.msra.mxu0 %v1799
      %2032 = vmatprep.subr.bf16.mxu0 %v1816
      %2033 = vmatpush1.bf16.msra.mxu0 %v1815
      %2034 = vmatprep.subr.bf16.mxu0 0
      %2035 = vmatpush1.bf16.msra.mxu0 0
      %2036 = vmatprep.subr.bf16.mxu0 0
      %2037 = vmatpush1.bf16.msra.mxu0 0
      %2038 = vmatprep.subr.bf16.mxu0 0
      %2039 = vmatpush1.bf16.msra.mxu0 0
      %2040 = vmatprep.subr.bf16.mxu0 0
      %2041 = vmatpush1.bf16.msra.mxu0 0
      %2042 = vmatprep.subr.bf16.mxu0 0
      %2043 = vmatpush1.bf16.msra.mxu0 0
      %2044 = vmatprep.subr.bf16.mxu0 0
      %2045 = vmatpush1.bf16.msra.mxu0 0
      %2046 = vmatprep.subr.bf16.mxu0 0
      %2047 = vmatpush1.bf16.msra.mxu0 0
      %2048 = vmatprep.subr.bf16.mxu0 0
      %2049 = vmatpush1.bf16.msra.mxu0 0
      %2050 = vmatprep.subr.bf16.mxu0 0
      %2051 = vmatpush1.bf16.msra.mxu0 0
      %2052 = vmatprep.subr.bf16.mxu0 0
      %2053 = vmatpush1.bf16.msra.mxu0 0
      %2054 = vmatprep.subr.bf16.mxu0 0
      %2055 = vmatpush1.bf16.msra.mxu0 0
      %2056 = vmatprep.subr.bf16.mxu0 0
      %2057 = vmatpush1.bf16.msra.mxu0 0
      %2058 = vmatprep.subr.bf16.mxu0 0
      %2059 = vmatpush1.bf16.msra.mxu0 0
      %2060 = vmatprep.subr.bf16.mxu0 0
      %2061 = vmatpush1.bf16.msra.mxu0 0
      %2062 = vmatprep.mubr.bf16.mxu0 0
      %2063 = vmatmul.mubr.bf16.gmra.mrb[0].mxu0 %v1856
      %v2064 = vpop.f32.mrb[0].mxu0
      %v2065 = vadd.f32 %v1650, %v2064
      %v2066 = vpop.f32.mrb[0].mxu0
      %v2067 = vadd.f32 %v1654, %v2066
      %v2068 = vpop.f32.mrb[0].mxu0
      %v2069 = vadd.f32 %v1650, %v2068
      %v2070 = vpop.f32.mrb[0].mxu0
      %v2071 = vadd.f32 %v1654, %v2070
      %2072 = vdwg.mxu0
      %2073 = vmatprep.subr.bf16.mxu0 %v1802
      %2074 = vmatpush1.bf16.msra.mxu0 %v1801
      %2075 = vmatprep.subr.bf16.mxu0 %v1818
      %2076 = vmatpush1.bf16.msra.mxu0 %v1817
      %2077 = vmatprep.subr.bf16.mxu0 0
      %2078 = vmatpush1.bf16.msra.mxu0 0
      %2079 = vmatprep.subr.bf16.mxu0 0
      %2080 = vmatpush1.bf16.msra.mxu0 0
      %2081 = vmatprep.subr.bf16.mxu0 0
      %2082 = vmatpush1.bf16.msra.mxu0 0
      %2083 = vmatprep.subr.bf16.mxu0 0
      %2084 = vmatpush1.bf16.msra.mxu0 0
      %2085 = vmatprep.subr.bf16.mxu0 0
      %2086 = vmatpush1.bf16.msra.mxu0 0
      %2087 = vmatprep.subr.bf16.mxu0 0
      %2088 = vmatpush1.bf16.msra.mxu0 0
      %2089 = vmatprep.subr.bf16.mxu0 0
      %2090 = vmatpush1.bf16.msra.mxu0 0
      %2091 = vmatprep.subr.bf16.mxu0 0
      %2092 = vmatpush1.bf16.msra.mxu0 0
      %2093 = vmatprep.subr.bf16.mxu0 0
      %2094 = vmatpush1.bf16.msra.mxu0 0
      %2095 = vmatprep.subr.bf16.mxu0 0
      %2096 = vmatpush1.bf16.msra.mxu0 0
      %2097 = vmatprep.subr.bf16.mxu0 0
      %2098 = vmatpush1.bf16.msra.mxu0 0
      %2099 = vmatprep.subr.bf16.mxu0 0
      %2100 = vmatpush1.bf16.msra.mxu0 0
      %2101 = vmatprep.subr.bf16.mxu0 0
      %2102 = vmatpush1.bf16.msra.mxu0 0
      %2103 = vmatprep.subr.bf16.mxu0 0
      %2104 = vmatpush1.bf16.msra.mxu0 0
      %2105 = vmatprep.mubr.bf16.mxu0 0
      %2106 = vmatmul.mubr.bf16.gmra.mrb[0].mxu0 %v1856
      %v2107 = vpop.f32.mrb[0].mxu0
      %v2108 = vadd.f32 %v1658, %v2107
      %v2109 = vpop.f32.mrb[0].mxu0
      %v2110 = vadd.f32 %v1662, %v2109
      %v2111 = vpop.f32.mrb[0].mxu0
      %v2112 = vadd.f32 %v1658, %v2111
      %v2113 = vpop.f32.mrb[0].mxu0
      %v2114 = vadd.f32 %v1662, %v2113
      %2115 = vdwg.mxu0
      %2116 = vmatprep.subr.bf16.mxu0 %v1804
      %2117 = vmatpush1.bf16.msra.mxu0 %v1803
      %2118 = vmatprep.subr.bf16.mxu0 %v1820
      %2119 = vmatpush1.bf16.msra.mxu0 %v1819
      %2120 = vmatprep.subr.bf16.mxu0 0
      %2121 = vmatpush1.bf16.msra.mxu0 0
      %2122 = vmatprep.subr.bf16.mxu0 0
      %2123 = vmatpush1.bf16.msra.mxu0 0
      %2124 = vmatprep.subr.bf16.mxu0 0
      %2125 = vmatpush1.bf16.msra.mxu0 0
      %2126 = vmatprep.subr.bf16.mxu0 0
      %2127 = vmatpush1.bf16.msra.mxu0 0
      %2128 = vmatprep.subr.bf16.mxu0 0
      %2129 = vmatpush1.bf16.msra.mxu0 0
      %2130 = vmatprep.subr.bf16.mxu0 0
      %2131 = vmatpush1.bf16.msra.mxu0 0
      %2132 = vmatprep.subr.bf16.mxu0 0
      %2133 = vmatpush1.bf16.msra.mxu0 0
      %2134 = vmatprep.subr.bf16.mxu0 0
      %2135 = vmatpush1.bf16.msra.mxu0 0
      %2136 = vmatprep.subr.bf16.mxu0 0
      %2137 = vmatpush1.bf16.msra.mxu0 0
      %2138 = vmatprep.subr.bf16.mxu0 0
      %2139 = vmatpush1.bf16.msra.mxu0 0
      %2140 = vmatprep.subr.bf16.mxu0 0
      %2141 = vmatpush1.bf16.msra.mxu0 0
      %2142 = vmatprep.subr.bf16.mxu0 0
      %2143 = vmatpush1.bf16.msra.mxu0 0
      %2144 = vmatprep.subr.bf16.mxu0 0
      %2145 = vmatpush1.bf16.msra.mxu0 0
      %2146 = vmatprep.subr.bf16.mxu0 0
      %2147 = vmatpush1.bf16.msra.mxu0 0
      %2148 = vmatprep.mubr.bf16.mxu0 0
      %2149 = vmatmul.mubr.bf16.gmra.mrb[0].mxu0 %v1856
      %v2150 = vpop.f32.mrb[0].mxu0
      %v2151 = vadd.f32 %v1666, %v2150
      %v2152 = vpop.f32.mrb[0].mxu0
      %v2153 = vadd.f32 %v1670, %v2152
      %v2154 = vpop.f32.mrb[0].mxu0
      %v2155 = vadd.f32 %v1666, %v2154
      %v2156 = vpop.f32.mrb[0].mxu0
      %v2157 = vadd.f32 %v1670, %v2156
      %2158 = vdwg.mxu0
      %2159 = vmatprep.subr.bf16.mxu0 %v1806
      %2160 = vmatpush1.bf16.msra.mxu0 %v1805
      %2161 = vmatprep.subr.bf16.mxu0 %v1822
      %2162 = vmatpush1.bf16.msra.mxu0 %v1821
      %2163 = vmatprep.subr.bf16.mxu0 0
      %2164 = vmatpush1.bf16.msra.mxu0 0
      %2165 = vmatprep.subr.bf16.mxu0 0
      %2166 = vmatpush1.bf16.msra.mxu0 0
      %2167 = vmatprep.subr.bf16.mxu0 0
      %2168 = vmatpush1.bf16.msra.mxu0 0
      %2169 = vmatprep.subr.bf16.mxu0 0
      %2170 = vmatpush1.bf16.msra.mxu0 0
      %2171 = vmatprep.subr.bf16.mxu0 0
      %2172 = vmatpush1.bf16.msra.mxu0 0
      %2173 = vmatprep.subr.bf16.mxu0 0
      %2174 = vmatpush1.bf16.msra.mxu0 0
      %2175 = vmatprep.subr.bf16.mxu0 0
      %2176 = vmatpush1.bf16.msra.mxu0 0
      %2177 = vmatprep.subr.bf16.mxu0 0
      %2178 = vmatpush1.bf16.msra.mxu0 0
      %2179 = vmatprep.subr.bf16.mxu0 0
      %2180 = vmatpush1.bf16.msra.mxu0 0
      %2181 = vmatprep.subr.bf16.mxu0 0
      %2182 = vmatpush1.bf16.msra.mxu0 0
      %2183 = vmatprep.subr.bf16.mxu0 0
      %2184 = vmatpush1.bf16.msra.mxu0 0
      %2185 = vmatprep.subr.bf16.mxu0 0
      %2186 = vmatpush1.bf16.msra.mxu0 0
      %2187 = vmatprep.subr.bf16.mxu0 0
      %2188 = vmatpush1.bf16.msra.mxu0 0
      %2189 = vmatprep.subr.bf16.mxu0 0
      %2190 = vmatpush1.bf16.msra.mxu0 0
      %2191 = vmatprep.mubr.bf16.mxu0 0
      %2192 = vmatmul.mubr.bf16.gmra.mrb[0].mxu0 %v1856
      %v2193 = vpop.f32.mrb[0].mxu0
      %v2194 = vadd.f32 %v1674, %v2193
      %v2195 = vpop.f32.mrb[0].mxu0
      %v2196 = vadd.f32 %v1678, %v2195
      %v2197 = vpop.f32.mrb[0].mxu0
      %v2198 = vadd.f32 %v1674, %v2197
      %v2199 = vpop.f32.mrb[0].mxu0
      %v2200 = vadd.f32 %v1678, %v2199
      %2201 = vdwg.mxu0
      %v2202 = vmax.f32 %v1893, 0.0
      %v2203 = vmax.f32 %v1895, 0.0
      %v2204 = vmax.f32 %v1936, 0.0
      %v2205 = vmax.f32 %v1938, 0.0
      %v2206 = vmax.f32 %v1979, 0.0
      %v2207 = vmax.f32 %v1981, 0.0
      %v2208 = vmax.f32 %v2022, 0.0
      %v2209 = vmax.f32 %v2024, 0.0
      %v2210 = vmax.f32 %v2065, 0.0
      %v2211 = vmax.f32 %v2067, 0.0
      %v2212 = vmax.f32 %v2108, 0.0
      %v2213 = vmax.f32 %v2110, 0.0
      %v2214 = vmax.f32 %v2151, 0.0
      %v2215 = vmax.f32 %v2153, 0.0
      %v2216 = vmax.f32 %v2194, 0.0
      %v2217 = vmax.f32 %v2196, 0.0
      %v2218 = vmax.f32 %v1897, 0.0
      %v2219 = vmax.f32 %v1899, 0.0
      %v2220 = vmax.f32 %v1940, 0.0
      %v2221 = vmax.f32 %v1942, 0.0
      %v2222 = vmax.f32 %v1983, 0.0
      %v2223 = vmax.f32 %v1985, 0.0
      %v2224 = vmax.f32 %v2026, 0.0
      %v2225 = vmax.f32 %v2028, 0.0
      %v2226 = vmax.f32 %v2069, 0.0
      %v2227 = vmax.f32 %v2071, 0.0
      %v2228 = vmax.f32 %v2112, 0.0
      %v2229 = vmax.f32 %v2114, 0.0
      %v2230 = vmax.f32 %v2155, 0.0
      %v2231 = vmax.f32 %v2157, 0.0
      %v2232 = vmax.f32 %v2198, 0.0
      %v2233 = vmax.f32 %v2200, 0.0
      %v2234 = vpack.c.bf16 %v2218, %v2202
      %v2235 = vpack.c.bf16 %v2219, %v2203
      %v2236 = vpack.c.bf16 %v2220, %v2204
      %v2237 = vpack.c.bf16 %v2221, %v2205
      %v2238 = vpack.c.bf16 %v2222, %v2206
      %v2239 = vpack.c.bf16 %v2223, %v2207
      %v2240 = vpack.c.bf16 %v2224, %v2208
      %v2241 = vpack.c.bf16 %v2225, %v2209
      %v2242 = vpack.c.bf16 %v2226, %v2210
      %v2243 = vpack.c.bf16 %v2227, %v2211
      %v2244 = vpack.c.bf16 %v2228, %v2212
      %v2245 = vpack.c.bf16 %v2229, %v2213
      %v2246 = vpack.c.bf16 %v2230, %v2214
      %v2247 = vpack.c.bf16 %v2231, %v2215
      %v2248 = vpack.c.bf16 %v2232, %v2216
      %v2249 = vpack.c.bf16 %v2233, %v2217
      %v2250 = vld [vmem:[%s726] sm:$0xff]
      %v2251 = vld [vmem:[%s726 + $0x8] sm:$0xff]
      %v2252 = vld [vmem:[%s726 + $0x10] sm:$0xff]
      %v2253 = vld [vmem:[%s726 + $0x18] sm:$0xff]
      %v2254 = vld [vmem:[%s726 + $0x20] sm:$0xff]
      %v2255 = vld [vmem:[%s726 + $0x28] sm:$0xff]
      %v2256 = vld [vmem:[%s726 + $0x30] sm:$0xff]
      %v2257 = vld [vmem:[%s726 + $0x38] sm:$0xff]
      %v2258 = vld [vmem:[%s726 + $0x40] sm:$0xff]
      %v2259 = vld [vmem:[%s726 + $0x48] sm:$0xff]
      %v2260 = vld [vmem:[%s726 + $0x50] sm:$0xff]
      %v2261 = vld [vmem:[%s726 + $0x58] sm:$0xff]
      %v2262 = vld [vmem:[%s726 + $0x60] sm:$0xff]
      %v2263 = vld [vmem:[%s726 + $0x68] sm:$0xff]
      %v2264 = vld [vmem:[%s726 + $0x70] sm:$0xff]
      %v2265 = vld [vmem:[%s726 + $0x78] sm:$0xff]
      %v2266 = vld [vmem:[%s726 + $0x80] sm:$0xff]
      %v2267 = vld [vmem:[%s726 + $0x88] sm:$0xff]
      %v2268 = vld [vmem:[%s726 + $0x90] sm:$0xff]
      %v2269 = vld [vmem:[%s726 + $0x98] sm:$0xff]
      %v2270 = vld [vmem:[%s726 + $0xa0] sm:$0xff]
      %v2271 = vld [vmem:[%s726 + $0xa8] sm:$0xff]
      %v2272 = vld [vmem:[%s726 + $0xb0] sm:$0xff]
      %v2273 = vld [vmem:[%s726 + $0xb8] sm:$0xff]
      %v2274 = vld [vmem:[%s726 + $0xc0] sm:$0xff]
      %v2275 = vld [vmem:[%s726 + $0xc8] sm:$0xff]
      %v2276 = vld [vmem:[%s726 + $0xd0] sm:$0xff]
      %v2277 = vld [vmem:[%s726 + $0xd8] sm:$0xff]
      %v2278 = vld [vmem:[%s726 + $0xe0] sm:$0xff]
      %v2279 = vld [vmem:[%s726 + $0xe8] sm:$0xff]
      %v2280 = vld [vmem:[%s726 + $0xf0] sm:$0xff]
      %v2281 = vld [vmem:[%s726 + $0xf8] sm:$0xff]
      %v2282 = vld [vmem:[%s729] sm:$0x1]
      %v2284 = vlaneseq
      %v2285 = vshrl.u32 %v2284, 7
      %v2286 = vsub.s32 0, %v2285
      %v2287 = vrot.slane %v2282, %v2286
      %v2321 = vunpack.c.l.b16 %v2250
      %v2322 = vunpack.c.h.b16 %v2250
      %v2323 = vunpack.c.l.b16 %v2251
      %v2324 = vunpack.c.h.b16 %v2251
      %v2325 = vunpack.c.l.b16 %v2252
      %v2326 = vunpack.c.h.b16 %v2252
      %v2327 = vunpack.c.l.b16 %v2253
      %v2328 = vunpack.c.h.b16 %v2253
      %v2329 = vunpack.c.l.b16 %v2254
      %v2330 = vunpack.c.h.b16 %v2254
      %v2331 = vunpack.c.l.b16 %v2255
      %v2332 = vunpack.c.h.b16 %v2255
      %v2333 = vunpack.c.l.b16 %v2256
      %v2334 = vunpack.c.h.b16 %v2256
      %v2335 = vunpack.c.l.b16 %v2257
      %v2336 = vunpack.c.h.b16 %v2257
      %v2337 = vunpack.c.l.b16 %v2258
      %v2338 = vunpack.c.h.b16 %v2258
      %v2339 = vunpack.c.l.b16 %v2259
      %v2340 = vunpack.c.h.b16 %v2259
      %v2341 = vunpack.c.l.b16 %v2260
      %v2342 = vunpack.c.h.b16 %v2260
      %v2343 = vunpack.c.l.b16 %v2261
      %v2344 = vunpack.c.h.b16 %v2261
      %v2345 = vunpack.c.l.b16 %v2262
      %v2346 = vunpack.c.h.b16 %v2262
      %v2347 = vunpack.c.l.b16 %v2263
      %v2348 = vunpack.c.h.b16 %v2263
      %v2349 = vunpack.c.l.b16 %v2264
      %v2350 = vunpack.c.h.b16 %v2264
      %v2351 = vunpack.c.l.b16 %v2265
      %v2352 = vunpack.c.h.b16 %v2265
      %v2353 = vunpack.c.l.b16 %v2266
      %v2354 = vunpack.c.h.b16 %v2266
      %v2355 = vunpack.c.l.b16 %v2267
      %v2356 = vunpack.c.h.b16 %v2267
      %v2357 = vunpack.c.l.b16 %v2268
      %v2358 = vunpack.c.h.b16 %v2268
      %v2359 = vunpack.c.l.b16 %v2269
      %v2360 = vunpack.c.h.b16 %v2269
      %v2361 = vunpack.c.l.b16 %v2270
      %v2362 = vunpack.c.h.b16 %v2270
      %v2363 = vunpack.c.l.b16 %v2271
      %v2364 = vunpack.c.h.b16 %v2271
      %v2365 = vunpack.c.l.b16 %v2272
      %v2366 = vunpack.c.h.b16 %v2272
      %v2367 = vunpack.c.l.b16 %v2273
      %v2368 = vunpack.c.h.b16 %v2273
      %v2369 = vunpack.c.l.b16 %v2274
      %v2370 = vunpack.c.h.b16 %v2274
      %v2371 = vunpack.c.l.b16 %v2275
      %v2372 = vunpack.c.h.b16 %v2275
      %v2373 = vunpack.c.l.b16 %v2276
      %v2374 = vunpack.c.h.b16 %v2276
      %v2375 = vunpack.c.l.b16 %v2277
      %v2376 = vunpack.c.h.b16 %v2277
      %v2377 = vunpack.c.l.b16 %v2278
      %v2378 = vunpack.c.h.b16 %v2278
      %v2379 = vunpack.c.l.b16 %v2279
      %v2380 = vunpack.c.h.b16 %v2279
      %v2381 = vunpack.c.l.b16 %v2280
      %v2382 = vunpack.c.h.b16 %v2280
      %v2383 = vunpack.c.l.b16 %v2281
      %v2384 = vunpack.c.h.b16 %v2281
      %v2385 = vpack.c.b16 %v2337, %v2321
      %v2386 = vpack.c.b16 %v2338, %v2322
      %v2387 = vpack.c.b16 %v2339, %v2323
      %v2388 = vpack.c.b16 %v2340, %v2324
      %v2389 = vpack.c.b16 %v2341, %v2325
      %v2390 = vpack.c.b16 %v2342, %v2326
      %v2391 = vpack.c.b16 %v2343, %v2327
      %v2392 = vpack.c.b16 %v2344, %v2328
      %v2393 = vpack.c.b16 %v2345, %v2329
      %v2394 = vpack.c.b16 %v2346, %v2330
      %v2395 = vpack.c.b16 %v2347, %v2331
      %v2396 = vpack.c.b16 %v2348, %v2332
      %v2397 = vpack.c.b16 %v2349, %v2333
      %v2398 = vpack.c.b16 %v2350, %v2334
      %v2399 = vpack.c.b16 %v2351, %v2335
      %v2400 = vpack.c.b16 %v2352, %v2336
      %v2401 = vpack.c.b16 %v2369, %v2353
      %v2402 = vpack.c.b16 %v2370, %v2354
      %v2403 = vpack.c.b16 %v2371, %v2355
      %v2404 = vpack.c.b16 %v2372, %v2356
      %v2405 = vpack.c.b16 %v2373, %v2357
      %v2406 = vpack.c.b16 %v2374, %v2358
      %v2407 = vpack.c.b16 %v2375, %v2359
      %v2408 = vpack.c.b16 %v2376, %v2360
      %v2409 = vpack.c.b16 %v2377, %v2361
      %v2410 = vpack.c.b16 %v2378, %v2362
      %v2411 = vpack.c.b16 %v2379, %v2363
      %v2412 = vpack.c.b16 %v2380, %v2364
      %v2413 = vpack.c.b16 %v2381, %v2365
      %v2414 = vpack.c.b16 %v2382, %v2366
      %v2415 = vpack.c.b16 %v2383, %v2367
      %v2416 = vpack.c.b16 %v2384, %v2368
      %2449 = vmatprep.subr.bf16.mxu0 %v2386
      %2450 = vmatpush1.bf16.xpose.msra.mxu0 %v2385
      %2451 = vmatprep.subr.bf16.mxu0 %v2402
      %2452 = vmatpush1.bf16.xpose.msra.mxu0 %v2401
      %2453 = vmatprep.subr.bf16.mxu0 0
      %2454 = vmatpush1.bf16.xpose.msra.mxu0 0
      %2455 = vmatprep.subr.bf16.mxu0 0
      %2456 = vmatpush1.bf16.xpose.msra.mxu0 0
      %2457 = vmatprep.subr.bf16.mxu0 0
      %2458 = vmatpush1.bf16.xpose.msra.mxu0 0
      %2459 = vmatprep.subr.bf16.mxu0 0
      %2460 = vmatpush1.bf16.xpose.msra.mxu0 0
      %2461 = vmatprep.subr.bf16.mxu0 0
      %2462 = vmatpush1.bf16.xpose.msra.mxu0 0
      %2463 = vmatprep.subr.bf16.mxu0 0
      %2464 = vmatpush1.bf16.xpose.msra.mxu0 0
      %2465 = vmatprep.subr.bf16.mxu0 0
      %2466 = vmatpush1.bf16.xpose.msra.mxu0 0
      %2467 = vmatprep.subr.bf16.mxu0 0
      %2468 = vmatpush1.bf16.xpose.msra.mxu0 0
      %2469 = vmatprep.subr.bf16.mxu0 0
      %2470 = vmatpush1.bf16.xpose.msra.mxu0 0
      %2471 = vmatprep.subr.bf16.mxu0 0
      %2472 = vmatpush1.bf16.xpose.msra.mxu0 0
      %2473 = vmatprep.subr.bf16.mxu0 0
      %2474 = vmatpush1.bf16.xpose.msra.mxu0 0
      %2475 = vmatprep.subr.bf16.mxu0 0
      %2476 = vmatpush1.bf16.xpose.msra.mxu0 0
      %2477 = vmatprep.subr.bf16.mxu0 0
      %2478 = vmatpush1.bf16.xpose.msra.mxu0 0
      %2479 = vmatprep.subr.bf16.mxu0 0
      %2480 = vmatpush1.bf16.xpose.msra.mxu0 0
      %2481 = vmatprep.mubr.bf16.mxu0 %v2235
      %2482 = vmatmul.mubr.bf16.gmra.mrb[0].mxu0 %v2234
      %v2483 = vpop.f32.mrb[0].mxu0
      %v2484 = vadd.f32 %v2287, %v2483
      %v2485 = vpop.f32.mrb[0].mxu0
      %v2486 = vpop.f32.mrb[0].mxu0
      %v2487 = vadd.f32 %v2287, %v2486
      %v2488 = vpop.f32.mrb[0].mxu0
      %2489 = vdwg.mxu0
      %2490 = vmatprep.subr.bf16.mxu0 %v2388
      %2491 = vmatpush1.bf16.xpose.msra.mxu0 %v2387
      %2492 = vmatprep.subr.bf16.mxu0 %v2404
      %2493 = vmatpush1.bf16.xpose.msra.mxu0 %v2403
      %2494 = vmatprep.subr.bf16.mxu0 0
      %2495 = vmatpush1.bf16.xpose.msra.mxu0 0
      %2496 = vmatprep.subr.bf16.mxu0 0
      %2497 = vmatpush1.bf16.xpose.msra.mxu0 0
      %2498 = vmatprep.subr.bf16.mxu0 0
      %2499 = vmatpush1.bf16.xpose.msra.mxu0 0
      %2500 = vmatprep.subr.bf16.mxu0 0
      %2501 = vmatpush1.bf16.xpose.msra.mxu0 0
      %2502 = vmatprep.subr.bf16.mxu0 0
      %2503 = vmatpush1.bf16.xpose.msra.mxu0 0
      %2504 = vmatprep.subr.bf16.mxu0 0
      %2505 = vmatpush1.bf16.xpose.msra.mxu0 0
      %2506 = vmatprep.subr.bf16.mxu0 0
      %2507 = vmatpush1.bf16.xpose.msra.mxu0 0
      %2508 = vmatprep.subr.bf16.mxu0 0
      %2509 = vmatpush1.bf16.xpose.msra.mxu0 0
      %2510 = vmatprep.subr.bf16.mxu0 0
      %2511 = vmatpush1.bf16.xpose.msra.mxu0 0
      %2512 = vmatprep.subr.bf16.mxu0 0
      %2513 = vmatpush1.bf16.xpose.msra.mxu0 0
      %2514 = vmatprep.subr.bf16.mxu0 0
      %2515 = vmatpush1.bf16.xpose.msra.mxu0 0
      %2516 = vmatprep.subr.bf16.mxu0 0
      %2517 = vmatpush1.bf16.xpose.msra.mxu0 0
      %2518 = vmatprep.subr.bf16.mxu0 0
      %2519 = vmatpush1.bf16.xpose.msra.mxu0 0
      %2520 = vmatprep.subr.bf16.mxu0 0
      %2521 = vmatpush1.bf16.xpose.msra.mxu0 0
      %2522 = vmatprep.mubr.bf16.mxu0 %v2237
      %2523 = vmatmul.mubr.bf16.gmra.mrb[0].mxu0 %v2236
      %v2524 = vpop.f32.mrb[0].mxu0
      %v2525 = vadd.f32 %v2484, %v2524
      %v2526 = vpop.f32.mrb[0].mxu0
      %v2527 = vpop.f32.mrb[0].mxu0
      %v2528 = vadd.f32 %v2487, %v2527
      %v2529 = vpop.f32.mrb[0].mxu0
      %2530 = vdwg.mxu0
      %2531 = vmatprep.subr.bf16.mxu0 %v2390
      %2532 = vmatpush1.bf16.xpose.msra.mxu0 %v2389
      %2533 = vmatprep.subr.bf16.mxu0 %v2406
      %2534 = vmatpush1.bf16.xpose.msra.mxu0 %v2405
      %2535 = vmatprep.subr.bf16.mxu0 0
      %2536 = vmatpush1.bf16.xpose.msra.mxu0 0
      %2537 = vmatprep.subr.bf16.mxu0 0
      %2538 = vmatpush1.bf16.xpose.msra.mxu0 0
      %2539 = vmatprep.subr.bf16.mxu0 0
      %2540 = vmatpush1.bf16.xpose.msra.mxu0 0
      %2541 = vmatprep.subr.bf16.mxu0 0
      %2542 = vmatpush1.bf16.xpose.msra.mxu0 0
      %2543 = vmatprep.subr.bf16.mxu0 0
      %2544 = vmatpush1.bf16.xpose.msra.mxu0 0
      %2545 = vmatprep.subr.bf16.mxu0 0
      %2546 = vmatpush1.bf16.xpose.msra.mxu0 0
      %2547 = vmatprep.subr.bf16.mxu0 0
      %2548 = vmatpush1.bf16.xpose.msra.mxu0 0
      %2549 = vmatprep.subr.bf16.mxu0 0
      %2550 = vmatpush1.bf16.xpose.msra.mxu0 0
      %2551 = vmatprep.subr.bf16.mxu0 0
      %2552 = vmatpush1.bf16.xpose.msra.mxu0 0
      %2553 = vmatprep.subr.bf16.mxu0 0
      %2554 = vmatpush1.bf16.xpose.msra.mxu0 0
      %2555 = vmatprep.subr.bf16.mxu0 0
      %2556 = vmatpush1.bf16.xpose.msra.mxu0 0
      %2557 = vmatprep.subr.bf16.mxu0 0
      %2558 = vmatpush1.bf16.xpose.msra.mxu0 0
      %2559 = vmatprep.subr.bf16.mxu0 0
      %2560 = vmatpush1.bf16.xpose.msra.mxu0 0
      %2561 = vmatprep.subr.bf16.mxu0 0
      %2562 = vmatpush1.bf16.xpose.msra.mxu0 0
      %2563 = vmatprep.mubr.bf16.mxu0 %v2239
      %2564 = vmatmul.mubr.bf16.gmra.mrb[0].mxu0 %v2238
      %v2565 = vpop.f32.mrb[0].mxu0
      %v2566 = vadd.f32 %v2525, %v2565
      %v2567 = vpop.f32.mrb[0].mxu0
      %v2568 = vpop.f32.mrb[0].mxu0
      %v2569 = vadd.f32 %v2528, %v2568
      %v2570 = vpop.f32.mrb[0].mxu0
      %2571 = vdwg.mxu0
      %2572 = vmatprep.subr.bf16.mxu0 %v2392
      %2573 = vmatpush1.bf16.xpose.msra.mxu0 %v2391
      %2574 = vmatprep.subr.bf16.mxu0 %v2408
      %2575 = vmatpush1.bf16.xpose.msra.mxu0 %v2407
      %2576 = vmatprep.subr.bf16.mxu0 0
      %2577 = vmatpush1.bf16.xpose.msra.mxu0 0
      %2578 = vmatprep.subr.bf16.mxu0 0
      %2579 = vmatpush1.bf16.xpose.msra.mxu0 0
      %2580 = vmatprep.subr.bf16.mxu0 0
      %2581 = vmatpush1.bf16.xpose.msra.mxu0 0
      %2582 = vmatprep.subr.bf16.mxu0 0
      %2583 = vmatpush1.bf16.xpose.msra.mxu0 0
      %2584 = vmatprep.subr.bf16.mxu0 0
      %2585 = vmatpush1.bf16.xpose.msra.mxu0 0
      %2586 = vmatprep.subr.bf16.mxu0 0
      %2587 = vmatpush1.bf16.xpose.msra.mxu0 0
      %2588 = vmatprep.subr.bf16.mxu0 0
      %2589 = vmatpush1.bf16.xpose.msra.mxu0 0
      %2590 = vmatprep.subr.bf16.mxu0 0
      %2591 = vmatpush1.bf16.xpose.msra.mxu0 0
      %2592 = vmatprep.subr.bf16.mxu0 0
      %2593 = vmatpush1.bf16.xpose.msra.mxu0 0
      %2594 = vmatprep.subr.bf16.mxu0 0
      %2595 = vmatpush1.bf16.xpose.msra.mxu0 0
      %2596 = vmatprep.subr.bf16.mxu0 0
      %2597 = vmatpush1.bf16.xpose.msra.mxu0 0
      %2598 = vmatprep.subr.bf16.mxu0 0
      %2599 = vmatpush1.bf16.xpose.msra.mxu0 0
      %2600 = vmatprep.subr.bf16.mxu0 0
      %2601 = vmatpush1.bf16.xpose.msra.mxu0 0
      %2602 = vmatprep.subr.bf16.mxu0 0
      %2603 = vmatpush1.bf16.xpose.msra.mxu0 0
      %2604 = vmatprep.mubr.bf16.mxu0 %v2241
      %2605 = vmatmul.mubr.bf16.gmra.mrb[0].mxu0 %v2240
      %v2606 = vpop.f32.mrb[0].mxu0
      %v2607 = vadd.f32 %v2566, %v2606
      %v2608 = vpop.f32.mrb[0].mxu0
      %v2609 = vpop.f32.mrb[0].mxu0
      %v2610 = vadd.f32 %v2569, %v2609
      %v2611 = vpop.f32.mrb[0].mxu0
      %2612 = vdwg.mxu0
      %2613 = vmatprep.subr.bf16.mxu0 %v2394
      %2614 = vmatpush1.bf16.xpose.msra.mxu0 %v2393
      %2615 = vmatprep.subr.bf16.mxu0 %v2410
      %2616 = vmatpush1.bf16.xpose.msra.mxu0 %v2409
      %2617 = vmatprep.subr.bf16.mxu0 0
      %2618 = vmatpush1.bf16.xpose.msra.mxu0 0
      %2619 = vmatprep.subr.bf16.mxu0 0
      %2620 = vmatpush1.bf16.xpose.msra.mxu0 0
      %2621 = vmatprep.subr.bf16.mxu0 0
      %2622 = vmatpush1.bf16.xpose.msra.mxu0 0
      %2623 = vmatprep.subr.bf16.mxu0 0
      %2624 = vmatpush1.bf16.xpose.msra.mxu0 0
      %2625 = vmatprep.subr.bf16.mxu0 0
      %2626 = vmatpush1.bf16.xpose.msra.mxu0 0
      %2627 = vmatprep.subr.bf16.mxu0 0
      %2628 = vmatpush1.bf16.xpose.msra.mxu0 0
      %2629 = vmatprep.subr.bf16.mxu0 0
      %2630 = vmatpush1.bf16.xpose.msra.mxu0 0
      %2631 = vmatprep.subr.bf16.mxu0 0
      %2632 = vmatpush1.bf16.xpose.msra.mxu0 0
      %2633 = vmatprep.subr.bf16.mxu0 0
      %2634 = vmatpush1.bf16.xpose.msra.mxu0 0
      %2635 = vmatprep.subr.bf16.mxu0 0
      %2636 = vmatpush1.bf16.xpose.msra.mxu0 0
      %2637 = vmatprep.subr.bf16.mxu0 0
      %2638 = vmatpush1.bf16.xpose.msra.mxu0 0
      %2639 = vmatprep.subr.bf16.mxu0 0
      %2640 = vmatpush1.bf16.xpose.msra.mxu0 0
      %2641 = vmatprep.subr.bf16.mxu0 0
      %2642 = vmatpush1.bf16.xpose.msra.mxu0 0
      %2643 = vmatprep.subr.bf16.mxu0 0
      %2644 = vmatpush1.bf16.xpose.msra.mxu0 0
      %2645 = vmatprep.mubr.bf16.mxu0 %v2243
      %2646 = vmatmul.mubr.bf16.gmra.mrb[0].mxu0 %v2242
      %v2647 = vpop.f32.mrb[0].mxu0
      %v2648 = vadd.f32 %v2607, %v2647
      %v2649 = vpop.f32.mrb[0].mxu0
      %v2650 = vpop.f32.mrb[0].mxu0
      %v2651 = vadd.f32 %v2610, %v2650
      %v2652 = vpop.f32.mrb[0].mxu0
      %2653 = vdwg.mxu0
      %2654 = vmatprep.subr.bf16.mxu0 %v2396
      %2655 = vmatpush1.bf16.xpose.msra.mxu0 %v2395
      %2656 = vmatprep.subr.bf16.mxu0 %v2412
      %2657 = vmatpush1.bf16.xpose.msra.mxu0 %v2411
      %2658 = vmatprep.subr.bf16.mxu0 0
      %2659 = vmatpush1.bf16.xpose.msra.mxu0 0
      %2660 = vmatprep.subr.bf16.mxu0 0
      %2661 = vmatpush1.bf16.xpose.msra.mxu0 0
      %2662 = vmatprep.subr.bf16.mxu0 0
      %2663 = vmatpush1.bf16.xpose.msra.mxu0 0
      %2664 = vmatprep.subr.bf16.mxu0 0
      %2665 = vmatpush1.bf16.xpose.msra.mxu0 0
      %2666 = vmatprep.subr.bf16.mxu0 0
      %2667 = vmatpush1.bf16.xpose.msra.mxu0 0
      %2668 = vmatprep.subr.bf16.mxu0 0
      %2669 = vmatpush1.bf16.xpose.msra.mxu0 0
      %2670 = vmatprep.subr.bf16.mxu0 0
      %2671 = vmatpush1.bf16.xpose.msra.mxu0 0
      %2672 = vmatprep.subr.bf16.mxu0 0
      %2673 = vmatpush1.bf16.xpose.msra.mxu0 0
      %2674 = vmatprep.subr.bf16.mxu0 0
      %2675 = vmatpush1.bf16.xpose.msra.mxu0 0
      %2676 = vmatprep.subr.bf16.mxu0 0
      %2677 = vmatpush1.bf16.xpose.msra.mxu0 0
      %2678 = vmatprep.subr.bf16.mxu0 0
      %2679 = vmatpush1.bf16.xpose.msra.mxu0 0
      %2680 = vmatprep.subr.bf16.mxu0 0
      %2681 = vmatpush1.bf16.xpose.msra.mxu0 0
      %2682 = vmatprep.subr.bf16.mxu0 0
      %2683 = vmatpush1.bf16.xpose.msra.mxu0 0
      %2684 = vmatprep.subr.bf16.mxu0 0
      %2685 = vmatpush1.bf16.xpose.msra.mxu0 0
      %2686 = vmatprep.mubr.bf16.mxu0 %v2245
      %2687 = vmatmul.mubr.bf16.gmra.mrb[0].mxu0 %v2244
      %v2688 = vpop.f32.mrb[0].mxu0
      %v2689 = vadd.f32 %v2648, %v2688
      %v2690 = vpop.f32.mrb[0].mxu0
      %v2691 = vpop.f32.mrb[0].mxu0
      %v2692 = vadd.f32 %v2651, %v2691
      %v2693 = vpop.f32.mrb[0].mxu0
      %2694 = vdwg.mxu0
      %2695 = vmatprep.subr.bf16.mxu0 %v2398
      %2696 = vmatpush1.bf16.xpose.msra.mxu0 %v2397
      %2697 = vmatprep.subr.bf16.mxu0 %v2414
      %2698 = vmatpush1.bf16.xpose.msra.mxu0 %v2413
      %2699 = vmatprep.subr.bf16.mxu0 0
      %2700 = vmatpush1.bf16.xpose.msra.mxu0 0
      %2701 = vmatprep.subr.bf16.mxu0 0
      %2702 = vmatpush1.bf16.xpose.msra.mxu0 0
      %2703 = vmatprep.subr.bf16.mxu0 0
      %2704 = vmatpush1.bf16.xpose.msra.mxu0 0
      %2705 = vmatprep.subr.bf16.mxu0 0
      %2706 = vmatpush1.bf16.xpose.msra.mxu0 0
      %2707 = vmatprep.subr.bf16.mxu0 0
      %2708 = vmatpush1.bf16.xpose.msra.mxu0 0
      %2709 = vmatprep.subr.bf16.mxu0 0
      %2710 = vmatpush1.bf16.xpose.msra.mxu0 0
      %2711 = vmatprep.subr.bf16.mxu0 0
      %2712 = vmatpush1.bf16.xpose.msra.mxu0 0
      %2713 = vmatprep.subr.bf16.mxu0 0
      %2714 = vmatpush1.bf16.xpose.msra.mxu0 0
      %2715 = vmatprep.subr.bf16.mxu0 0
      %2716 = vmatpush1.bf16.xpose.msra.mxu0 0
      %2717 = vmatprep.subr.bf16.mxu0 0
      %2718 = vmatpush1.bf16.xpose.msra.mxu0 0
      %2719 = vmatprep.subr.bf16.mxu0 0
      %2720 = vmatpush1.bf16.xpose.msra.mxu0 0
      %2721 = vmatprep.subr.bf16.mxu0 0
      %2722 = vmatpush1.bf16.xpose.msra.mxu0 0
      %2723 = vmatprep.subr.bf16.mxu0 0
      %2724 = vmatpush1.bf16.xpose.msra.mxu0 0
      %2725 = vmatprep.subr.bf16.mxu0 0
      %2726 = vmatpush1.bf16.xpose.msra.mxu0 0
      %2727 = vmatprep.mubr.bf16.mxu0 %v2247
      %2728 = vmatmul.mubr.bf16.gmra.mrb[0].mxu0 %v2246
      %v2729 = vpop.f32.mrb[0].mxu0
      %v2730 = vadd.f32 %v2689, %v2729
      %v2731 = vpop.f32.mrb[0].mxu0
      %v2732 = vpop.f32.mrb[0].mxu0
      %v2733 = vadd.f32 %v2692, %v2732
      %v2734 = vpop.f32.mrb[0].mxu0
      %2735 = vdwg.mxu0
      %2736 = vmatprep.subr.bf16.mxu0 %v2400
      %2737 = vmatpush1.bf16.xpose.msra.mxu0 %v2399
      %2738 = vmatprep.subr.bf16.mxu0 %v2416
      %2739 = vmatpush1.bf16.xpose.msra.mxu0 %v2415
      %2740 = vmatprep.subr.bf16.mxu0 0
      %2741 = vmatpush1.bf16.xpose.msra.mxu0 0
      %2742 = vmatprep.subr.bf16.mxu0 0
      %2743 = vmatpush1.bf16.xpose.msra.mxu0 0
      %2744 = vmatprep.subr.bf16.mxu0 0
      %2745 = vmatpush1.bf16.xpose.msra.mxu0 0
      %2746 = vmatprep.subr.bf16.mxu0 0
      %2747 = vmatpush1.bf16.xpose.msra.mxu0 0
      %2748 = vmatprep.subr.bf16.mxu0 0
      %2749 = vmatpush1.bf16.xpose.msra.mxu0 0
      %2750 = vmatprep.subr.bf16.mxu0 0
      %2751 = vmatpush1.bf16.xpose.msra.mxu0 0
      %2752 = vmatprep.subr.bf16.mxu0 0
      %2753 = vmatpush1.bf16.xpose.msra.mxu0 0
      %2754 = vmatprep.subr.bf16.mxu0 0
      %2755 = vmatpush1.bf16.xpose.msra.mxu0 0
      %2756 = vmatprep.subr.bf16.mxu0 0
      %2757 = vmatpush1.bf16.xpose.msra.mxu0 0
      %2758 = vmatprep.subr.bf16.mxu0 0
      %2759 = vmatpush1.bf16.xpose.msra.mxu0 0
      %2760 = vmatprep.subr.bf16.mxu0 0
      %2761 = vmatpush1.bf16.xpose.msra.mxu0 0
      %2762 = vmatprep.subr.bf16.mxu0 0
      %2763 = vmatpush1.bf16.xpose.msra.mxu0 0
      %2764 = vmatprep.subr.bf16.mxu0 0
      %2765 = vmatpush1.bf16.xpose.msra.mxu0 0
      %2766 = vmatprep.subr.bf16.mxu0 0
      %2767 = vmatpush1.bf16.xpose.msra.mxu0 0
      %2768 = vmatprep.mubr.bf16.mxu0 %v2249
      %2769 = vmatmul.mubr.bf16.gmra.mrb[0].mxu0 %v2248
      %v2770 = vpop.f32.mrb[0].mxu0
      %v2771 = vadd.f32 %v2730, %v2770
      %v2772 = vpop.f32.mrb[0].mxu0
      %v2773 = vpop.f32.mrb[0].mxu0
      %v2774 = vadd.f32 %v2733, %v2773
      %v2775 = vpop.f32.mrb[0].mxu0
      %2776 = vdwg.mxu0
      %v2777 = vld [vmem:[%s732] sm:$0x1]
      %v2778 = vld [vmem:[%s735] sm:$0x1]
      %v2779 = vadd.f32 %v1576, %v2771
      %v2780 = vadd.f32 %v1577, %v2774
      %v2781 = vsel %vm885, %v2779, 0.0
      %2782 = vadd.xlane.f32.xlu0 %v2781
      %v2783 = vpop.xlane.xlu0 %2782
      %v2784 = vsel %vm885, %v2780, 0.0
      %2785 = vadd.xlane.f32.xlu0 %v2784
      %v2786 = vpop.xlane.xlu0 %2785
      %v2787 = vmul.f32 %v2783, %v1541
      %v2788 = vmul.f32 %v2786, %v1541
      %v2789 = vsub.f32 %v2779, %v2787
      %v2790 = vsub.f32 %v2780, %v2788
      %v2791 = vmul.f32 %v2789, %v2789
      %v2792 = vmul.f32 %v2790, %v2790
      %v2793 = vsel %vm885, %v2791, 0.0
      %2794 = vadd.xlane.f32.xlu0 %v2793
      %v2795 = vpop.xlane.xlu0 %2794
      %v2796 = vsel %vm885, %v2792, 0.0
      %2797 = vadd.xlane.f32.xlu0 %v2796
      %v2798 = vpop.xlane.xlu0 %2797
      %v2799 = vmul.f32 %v2795, %v1541
      %v2800 = vmul.f32 %v2798, %v1541
      %v2801 = vadd.f32 %v2799, 1e-05
      %v2802 = vadd.f32 %v2800, 1e-05
      %v2803 = vrsqrt.pop %v2801
      %v2804 = vrsqrt.pop %v2802
      %v2805 = vmul.f32 %v2789, %v2803
      %v2806 = vmul.f32 %v2790, %v2804
      %v2808 = vlaneseq
      %v2809 = vshrl.u32 %v2808, 7
      %v2810 = vsub.s32 0, %v2809
      %v2811 = vrot.slane %v2777, %v2810
      %v2813 = vmul.f32 %v2805, %v2811
      %v2814 = vmul.f32 %v2806, %v2811
      %v2816 = vlaneseq
      %v2817 = vshrl.u32 %v2816, 7
      %v2818 = vsub.s32 0, %v2817
      %v2819 = vrot.slane %v2778, %v2818
      %v2821 = vadd.f32 %v2813, %v2819
      %v2822 = vadd.f32 %v2814, %v2819
      %2823 = vst.msk [vmem:[#allocation2] sm:$0xff] %vm885, %v2821
      %2824 = vst.msk [vmem:[#allocation2 + $0x8] sm:$0xff] %vm885, %v2822
      %p2825 = scmp.eq.s32.totalorder %s29, 1
      // Predicated region
      $region97: #{transformer_stock_forward.1} parent=91 // pred_check
        %p2826 = pneg %p2825
      $region98: #{transformer_stock_forward.1} parent=91 // pred_check_branch
        %2828 = sbr.rel (%p2826) target = $region100
      $region99: #{transformer_stock_forward.1} parent=91 // pred_region
        %s2829 = scalar_lea.vmem [#allocation2], 1
        %v2830 = vld [vmem:[%s2829] ss:$2 sm:$0xff]
        %v2831 = vpack.c.bf16 %v2830, %v2830
        %v2832 = vld [vmem:[%s16] sm:$0xf]
        %v2833 = vld [vmem:[%s16 + $0x4] sm:$0xf]
        %v2834 = vld [vmem:[%s16 + $0x8] sm:$0xf]
        %v2835 = vld [vmem:[%s16 + $0xc] sm:$0xf]
        %v2836 = vld [vmem:[%s17] sm:$0x1]
        %v2838 = vlaneseq
        %v2839 = vshrl.u32 %v2838, 7
        %v2840 = vsub.s32 0, %v2839
        %v2841 = vrot.slane %v2836, %v2840
        %v2847 = vunpack.c.l.b16 %v2832
        %v2848 = vunpack.c.l.b16 %v2833
        %v2849 = vunpack.c.l.b16 %v2834
        %v2850 = vunpack.c.l.b16 %v2835
        %v2851 = vpack.c.b16 %v2848, %v2847
        %v2852 = vpack.c.b16 %v2850, %v2849
        %v2856 = vsel %vm885, %v2831, 0
        %2858 = vmatprep.subr.bf16.mxu0 0
        %2859 = vmatpush1.bf16.msra.mxu0 %v2851
        %2860 = vmatprep.subr.bf16.mxu0 0
        %2861 = vmatpush1.bf16.msra.mxu0 %v2852
        %2862 = vmatprep.subr.bf16.mxu0 0
        %2863 = vmatpush1.bf16.msra.mxu0 0
        %2864 = vmatprep.subr.bf16.mxu0 0
        %2865 = vmatpush1.bf16.msra.mxu0 0
        %2866 = vmatprep.subr.bf16.mxu0 0
        %2867 = vmatpush1.bf16.msra.mxu0 0
        %2868 = vmatprep.subr.bf16.mxu0 0
        %2869 = vmatpush1.bf16.msra.mxu0 0
        %2870 = vmatprep.subr.bf16.mxu0 0
        %2871 = vmatpush1.bf16.msra.mxu0 0
        %2872 = vmatprep.subr.bf16.mxu0 0
        %2873 = vmatpush1.bf16.msra.mxu0 0
        %2874 = vmatprep.subr.bf16.mxu0 0
        %2875 = vmatpush1.bf16.msra.mxu0 0
        %2876 = vmatprep.subr.bf16.mxu0 0
        %2877 = vmatpush1.bf16.msra.mxu0 0
        %2878 = vmatprep.subr.bf16.mxu0 0
        %2879 = vmatpush1.bf16.msra.mxu0 0
        %2880 = vmatprep.subr.bf16.mxu0 0
        %2881 = vmatpush1.bf16.msra.mxu0 0
        %2882 = vmatprep.subr.bf16.mxu0 0
        %2883 = vmatpush1.bf16.msra.mxu0 0
        %2884 = vmatprep.subr.bf16.mxu0 0
        %2885 = vmatpush1.bf16.msra.mxu0 0
        %2886 = vmatprep.subr.bf16.mxu0 0
        %2887 = vmatpush1.bf16.msra.mxu0 0
        %2888 = vmatprep.subr.bf16.mxu0 0
        %2889 = vmatpush1.bf16.msra.mxu0 0
        %2890 = vmatprep.mubr.bf16.mxu0 0
        %2891 = vmatmul.mubr.bf16.gmra.mrb[0].mxu0 %v2856
        %v2892 = vpop.f32.mrb[0].mxu0
        %v2893 = vadd.f32 %v2841, %v2892
        %v2894 = vpop.f32.mrb[0].mxu0
        %v2895 = vpop.f32.mrb[0].mxu0
        %v2896 = vpop.f32.mrb[0].mxu0
        %2897 = vdwg.mxu0
        %vm2898 = vcmask 15360
        %2899 = vst.msk [vmem:[%s18] sm:$0xff] %vm2898, %v2893
      $region100: #{transformer_stock_forward.1} parent=91 // pred_fallthru
        _
      // Predicated region
      $region101: #{transformer_stock_forward.1} parent=91 // pred_check
        %p2900 = pneg %p480
      $region102: #{transformer_stock_forward.1} parent=91 // pred_check_branch
        %2902 = sbr.rel (%p2900) target = $region104
      $region103: #{transformer_stock_forward.1} parent=91 // pred_region
        _
      $region104: #{transformer_stock_forward.1} parent=91 // pred_fallthru
        _
      // Predicated region
      $region105: #{transformer_stock_forward.1} parent=91 // pred_check
        %p2903 = pneg %p480
      $region106: #{transformer_stock_forward.1} parent=91 // pred_check_branch
        %2905 = sbr.rel (%p2903) target = $region108
      $region107: #{transformer_stock_forward.1} parent=91 // pred_region
        _
      $region108: #{transformer_stock_forward.1} parent=91 // pred_fallthru
        _
    $region92: #{transformer_stock_forward.1} parent=5 // pred_fallthru
      _
    %p2906 = scmp.le.s32.totalorder 2, %s24
    // Predicated region
    $region109: #{transformer_stock_forward.1} parent=5 // pred_check
      %p2907 = pneg %p2906
    $region110: #{transformer_stock_forward.1} parent=5 // pred_check_branch
      %2909 = sbr.rel (%p2907) target = $region112
    $region111: #{transformer_stock_forward.1} parent=5 // pred_region
      %s2910 = ssub.s32 %s24, 2
    $region112: #{transformer_stock_forward.1} parent=5 // pred_fallthru
      _
  $region6: #{transformer_stock_forward.1} parent=0 // loop_footer
    %s28 = sadd.s32 1, %s24
  $region7: #{transformer_stock_forward.1} parent=0 // loop_footer_branch
    %23 = sbr.rel target = $region3
  $region8: #{transformer_stock_forward.1} parent=0 // loop_exit
    _

</llo_original>
